<compile_context>
chip_gen: v7x
topology: tpu7x:2x2x1
jax: 0.10.0
libtpu: 0.0.40
codegen_flags: <defaults>
</compile_context>

<pallas_src>
import functools

import jax
import jax.numpy as jnp
from jax.experimental import pallas as pl
from jax.experimental.pallas import tpu as pltpu

# ---------------- static network dimensions ----------------
K = 5                     # conv kernel size
H_IN = 28                 # input spatial size (implied by fc1 in_features=320)
C1_OUT = 10
C2_OUT = 20
H1 = H_IN - K + 1         # 24  conv1 output
P1 = H1 // 2              # 12  pool1 output
H2 = P1 - K + 1           # 8   conv2 output
P2 = H2 // 2              # 4   pool2 output
FC1_OUT = 120
FC2_OUT = 50
NCLS = 10
N_PAD = 128               # class dim padded to a full lane tile (dense store)

L1 = C1_OUT * H1          # 240  conv1 lane width  (c*24 + j)
L1P = L1 - 1              # 239  after width pair-max (valid data on even lanes)
L2 = C2_OUT * H2          # 160  conv2 lane width  (c*8 + j)
L2P = L2 - 1              # 159  after width pair-max


# ---------------- in-kernel helpers ----------------

def _pool_rows(y, n_out, bt):
    """Max over adjacent row-blocks. Rows are laid out i*bt + b (bt mult of 8)."""
    parts = [jnp.maximum(y[(2 * q) * bt:(2 * q + 1) * bt, :],
                         y[(2 * q + 1) * bt:(2 * q + 2) * bt, :])
             for q in range(n_out)]
    return jnp.concatenate(parts, axis=0)


def _pool_lanes(y):
    """Pairwise max along lanes (width L-1); valid results sit on even lanes."""
    return jnp.maximum(y[:, :-1], y[:, 1:])


# ---------------- fused kernel (BT images per grid step) ----------------

def _surrogate_kernel(x_ref, w1b_ref, b1_ref, w2b_ref, b2_ref,
                      w1f_ref, b1f_ref, w2f_ref, b2f_ref, w3f_ref, b3f_ref,
                      out_ref, *, bt):
    f32 = jnp.float32
    x = x_ref[0]                                          # (28*bt, 28), rows = i*bt + b

    # ---- conv1: 5 accumulated GEMMs against width-band weights -> (24*bt, 240)
    y1 = jnp.dot(x[:H1 * bt, :], w1b_ref[0], preferred_element_type=f32)
    for kh in range(1, K):
        y1 = y1 + jnp.dot(x[kh * bt:(kh + H1) * bt, :], w1b_ref[kh],
                          preferred_element_type=f32)
    y1 = y1 + b1_ref[...]

    # ---- max_pool2d(2) + relu
    y1 = _pool_rows(y1, P1, bt)                           # (12*bt, 240)
    p1 = jnp.maximum(_pool_lanes(y1), 0.0)                # (12*bt, 239) valid @ even lanes

    # ---- conv2: 5 accumulated GEMMs; junk (odd) lanes are zero rows in w2b
    # TODO(synk): nn.Dropout2d is identity in eval mode; train-mode channel dropout not implemented.
    y2 = jnp.dot(p1[:H2 * bt, :], w2b_ref[0], preferred_element_type=f32)
    for kh in range(1, K):
        y2 = y2 + jnp.dot(p1[kh * bt:(kh + H2) * bt, :], w2b_ref[kh],
                          preferred_element_type=f32)
    y2 = y2 + b2_ref[...]                                 # (8*bt, 160)

    # ---- max_pool2d(2) + relu
    y2 = _pool_rows(y2, P2, bt)                           # (4*bt, 160)
    p2 = jnp.maximum(_pool_lanes(y2), 0.0)                # (4*bt, 159) valid @ even lanes

    # ---- fc1 + relu (flatten permutation + junk-lane masking folded into w1f)
    h1 = jnp.dot(p2[:bt, :], w1f_ref[0], preferred_element_type=f32)
    for ip in range(1, P2):
        h1 = h1 + jnp.dot(p2[ip * bt:(ip + 1) * bt, :], w1f_ref[ip],
                          preferred_element_type=f32)
    h1 = jnp.maximum(h1 + b1f_ref[...], 0.0)              # (bt, 120)

    # ---- fc2 + relu
    h2 = jnp.maximum(jnp.dot(h1, w2f_ref[...], preferred_element_type=f32)
                     + b2f_ref[...], 0.0)                 # (bt, 50)
    # TODO(synk): F.dropout is identity in eval mode; train-mode dropout not implemented.

    # ---- fc3 (classes zero-padded to 128 lanes, pad bias = -1e30) + log_softmax
    logits = (jnp.dot(h2, w3f_ref[...], preferred_element_type=f32)
              + b3f_ref[...])                             # (bt, 128)
    m = jnp.max(logits, axis=-1, keepdims=True)
    s = logits - m
    lse = jnp.log(jnp.sum(jnp.exp(s), axis=-1, keepdims=True))
    out_ref[...] = s - lse                                # dense (bt, 128) store


# ---------------- host-side weight repacking (band matrices etc.) ----------------

def _prep_operands(params):
    f32 = jnp.float32

    # conv1 band weights: W1b[kh, p, c*24+jo] = w1[c,0,kh,p-jo] if 0<=p-jo<5 else 0
    w1r = jnp.transpose(params["conv1_w"][:, 0].astype(f32), (1, 0, 2))   # (kh, c, kw)
    p = jnp.arange(H_IN)[:, None]
    jo = jnp.arange(H1)[None, :]
    kw = p - jo
    w1g = w1r[:, :, jnp.clip(kw, 0, K - 1)]                                # (K, C1, 28, 24)
    w1g = jnp.where(((kw >= 0) & (kw < K))[None, None], w1g, 0.0)
    w1b = jnp.transpose(w1g, (0, 2, 1, 3)).reshape(K, H_IN, L1)
    b1 = jnp.repeat(params["conv1_b"].astype(f32), H1).reshape(1, L1)

    # conv2 band weights over the un-compacted pool1 layout (rows c*24+l, even l valid)
    w2r = jnp.transpose(params["conv2_w"].astype(f32), (2, 1, 0, 3))       # (kh, c, co, kw)
    l = jnp.arange(2 * P1)[:, None]
    jo2 = jnp.arange(H2)[None, :]
    kw2 = l // 2 - jo2
    valid2 = ((l % 2) == 0) & (kw2 >= 0) & (kw2 < K)
    w2g = w2r[:, :, :, jnp.clip(kw2, 0, K - 1)]                            # (K, C1, C2, 24, 8)
    w2g = jnp.where(valid2[None, None, None], w2g, 0.0)
    w2b = jnp.transpose(w2g, (0, 1, 3, 2, 4)).reshape(
        K, C1_OUT * 2 * P1, L2)[:, :L1P, :]                                # (5, 239, 160)
    b2 = jnp.repeat(params["conv2_b"].astype(f32), H2).reshape(1, L2)

    # fc1: fold PyTorch channel-major flatten + un-compacted pool2 layout into the weight
    f1 = params["fc1_w"].astype(f32).reshape(FC1_OUT, C2_OUT, P2, P2)      # [f, c, ip, jp]
    lp = jnp.arange(2 * P2)
    w1fg = f1[:, :, :, lp // 2]                                            # (120, 20, 4, 8)
    w1fg = jnp.where(((lp % 2) == 0)[None, None, None], w1fg, 0.0)
    w1f = jnp.transpose(w1fg, (2, 1, 3, 0)).reshape(
        P2, C2_OUT * 2 * P2, FC1_OUT)[:, :L2P, :]                          # (4, 159, 120)
    b1f = params["fc1_b"].astype(f32).reshape(1, FC1_OUT)

    w2f = params["fc2_w"].astype(f32).T                                    # (120, 50)
    b2f = params["fc2_b"].astype(f32).reshape(1, FC2_OUT)

    w3f = jnp.zeros((FC2_OUT, N_PAD), f32).at[:, :NCLS].set(
        params["fc3_w"].astype(f32).T)                                     # (50, 128)
    b3f = jnp.full((1, N_PAD), -1e30, f32).at[0, :NCLS].set(
        params["fc3_b"].astype(f32))
    return w1b, b1, w2b, b2, w1f, b1f, w2f, b2f, w3f, b3f


# ---------------- forward pass ----------------

@functools.partial(jax.jit, static_argnames=("bt",))
def surrogate_forward(params, x, bt=8):
    """x: (B,1,28,28) or (B,28,28) float32 -> (B,10) log-probs (eval-mode)."""
    if bt % 8 != 0:
        raise ValueError("bt must be a multiple of 8")
    B = x.shape[0]
    x = x.reshape(B, H_IN, H_IN).astype(jnp.float32)       # drop singleton channel
    bp = ((B + bt - 1) // bt) * bt                         # pad batch to BT multiple
    if bp != B:
        x = jnp.pad(x, ((0, bp - B), (0, 0), (0, 0)))
    g = bp // bt
    # layout plumbing: rows inside each grid block become (image_row * bt + batch)
    xg = x.reshape(g, bt, H_IN, H_IN).transpose(0, 2, 1, 3).reshape(g, H_IN * bt, H_IN)

    ops = _prep_operands(params)

    def const_spec(a):
        nd = a.ndim
        return pl.BlockSpec(a.shape, lambda i, _nd=nd: (0,) * _nd)

    out = pl.pallas_call(
        functools.partial(_surrogate_kernel, bt=bt),
        out_shape=jax.ShapeDtypeStruct((bp, N_PAD), jnp.float32),
        grid=(g,),
        in_specs=[pl.BlockSpec((1, H_IN * bt, H_IN), lambda i: (i, 0, 0))]
                + [const_spec(a) for a in ops],
        out_specs=pl.BlockSpec((bt, N_PAD), lambda i: (i, 0)),
        compiler_params=pltpu.CompilerParams(
            dimension_semantics=("parallel",)),            # megacore sharding on v7x
    )(xg, *ops)
    return out[:B, :NCLS]


# ---------------- pure-JAX reference (for the self-check) ----------------

def _maxpool2(y):
    b, c, h, w = y.shape
    return y.reshape(b, c, h // 2, 2, w // 2, 2).max(axis=(3, 5))


@jax.jit
def reference_forward(params, x):
    x = x.reshape(x.shape[0], 1, H_IN, H_IN).astype(jnp.float32)
    dn = ("NCHW", "OIHW", "NCHW")
    y = jax.lax.conv_general_dilated(x, params["conv1_w"], (1, 1), "VALID",
                                     dimension_numbers=dn)
    y = y + params["conv1_b"][None, :, None, None]
    y = jnp.maximum(_maxpool2(y), 0.0)
    y = jax.lax.conv_general_dilated(y, params["conv2_w"], (1, 1), "VALID",
                                     dimension_numbers=dn)
    y = y + params["conv2_b"][None, :, None, None]
    y = jnp.maximum(_maxpool2(y), 0.0)
    y = y.reshape(y.shape[0], -1)
    y = jnp.maximum(y @ params["fc1_w"].T + params["fc1_b"], 0.0)
    y = jnp.maximum(y @ params["fc2_w"].T + params["fc2_b"], 0.0)
    y = y @ params["fc3_w"].T + params["fc3_b"]
    return jax.nn.log_softmax(y, axis=-1)


# ---------------- parameters ----------------

def init_params(key):
    """Deterministic init mimicking PyTorch default U(-1/sqrt(fan_in), +)."""
    def uniform(k, shape, fan_in):
        bound = 1.0 / float(fan_in) ** 0.5
        return jax.random.uniform(k, shape, jnp.float32, -bound, bound)
    ks = jax.random.split(key, 10)
    return {
        "conv1_w": uniform(ks[0], (10, 1, 5, 5), 1 * 5 * 5),
        "conv1_b": uniform(ks[1], (10,), 1 * 5 * 5),
        "conv2_w": uniform(ks[2], (20, 10, 5, 5), 10 * 5 * 5),
        "conv2_b": uniform(ks[3], (20,), 10 * 5 * 5),
        "fc1_w":  uniform(ks[4], (120, 320), 320),
        "fc1_b":  uniform(ks[5], (120,), 320),
        "fc2_w":  uniform(ks[6], (50, 120), 120),
        "fc2_b":  uniform(ks[7], (50,), 120),
        "fc3_w":  uniform(ks[8], (10, 50), 50),
        "fc3_b":  uniform(ks[9], (10,), 50),
    }


if __name__ == "__main__":
    key = jax.random.PRNGKey(0)
    pkey, xkey = jax.random.split(key)
    params = init_params(pkey)
    # MNIST-sized input implied by fc1 in_features=320 (= 20*4*4 from 28x28).
    x = jax.random.normal(xkey, (16, 1, 28, 28), jnp.float32)   # NCHW
    out = surrogate_forward(params, x)                          # bt=8 -> grid=(2,)
    jax.block_until_ready(out)
    assert out.shape == (16, NCLS)
    assert bool(jnp.all(jnp.isfinite(out)))
    # log_softmax rows must normalize
    assert bool(jnp.all(jnp.abs(jnp.sum(jnp.exp(out), axis=-1) - 1.0) < 1e-3))
    # compare against a pure-JAX reference (tolerance covers MXU default precision)
    ref = reference_forward(params, x)
    err = float(jnp.max(jnp.abs(out - ref)))
    assert err < 5e-2, f"mismatch vs pure-JAX reference: {err}"
    print("KERNEL_OK")
</pallas_src>

<mosaic_0001>
module attributes {stable_mosaic.version = 11 : i64} {
  func.func @_surrogate_kernel(%arg0: i32, %arg1: memref<1x224x28xf32, #tpu.memory_space<vmem>>, %arg2: memref<5x28x240xf32, #tpu.memory_space<vmem>>, %arg3: memref<1x240xf32, #tpu.memory_space<vmem>>, %arg4: memref<5x239x160xf32, #tpu.memory_space<vmem>>, %arg5: memref<1x160xf32, #tpu.memory_space<vmem>>, %arg6: memref<4x159x120xf32, #tpu.memory_space<vmem>>, %arg7: memref<1x120xf32, #tpu.memory_space<vmem>>, %arg8: memref<120x50xf32, #tpu.memory_space<vmem>>, %arg9: memref<1x50xf32, #tpu.memory_space<vmem>>, %arg10: memref<50x128xf32, #tpu.memory_space<vmem>>, %arg11: memref<1x128xf32, #tpu.memory_space<vmem>>, %arg12: memref<8x128xf32, #tpu.memory_space<vmem>>) attributes {dimension_semantics = [#tpu.dimension_semantics<parallel>], iteration_bounds = array<i64: 2>, scalar_prefetch = 0 : i64, scratch_operands = 0 : i64, tpu.core_type = #tpu.core_type<tc>, window_params = [{transform_indices = @transform_0, window_bounds = array<i64: 1, 224, 28>}, {pipeline_mode = #tpu.pipeline_mode<synchronous>, transform_indices = @transform_1, window_bounds = array<i64: 5, 28, 240>}, {pipeline_mode = #tpu.pipeline_mode<synchronous>, transform_indices = @transform_2, window_bounds = array<i64: 1, 240>}, {pipeline_mode = #tpu.pipeline_mode<synchronous>, transform_indices = @transform_3, window_bounds = array<i64: 5, 239, 160>}, {pipeline_mode = #tpu.pipeline_mode<synchronous>, transform_indices = @transform_4, window_bounds = array<i64: 1, 160>}, {pipeline_mode = #tpu.pipeline_mode<synchronous>, transform_indices = @transform_5, window_bounds = array<i64: 4, 159, 120>}, {pipeline_mode = #tpu.pipeline_mode<synchronous>, transform_indices = @transform_6, window_bounds = array<i64: 1, 120>}, {pipeline_mode = #tpu.pipeline_mode<synchronous>, transform_indices = @transform_7, window_bounds = array<i64: 120, 50>}, {pipeline_mode = #tpu.pipeline_mode<synchronous>, transform_indices = @transform_8, window_bounds = array<i64: 1, 50>}, {pipeline_mode = #tpu.pipeline_mode<synchronous>, transform_indices = @transform_9, window_bounds = array<i64: 50, 128>}, {pipeline_mode = #tpu.pipeline_mode<synchronous>, transform_indices = @transform_10, window_bounds = array<i64: 1, 128>}, {transform_indices = @transform_11, window_bounds = array<i64: 8, 128>}]} {
    %c0 = arith.constant 0 : index
    %c0_0 = arith.constant 0 : index
    %c0_1 = arith.constant 0 : index
    %0 = vector.load %arg1[%c0, %c0_0, %c0_1] : memref<1x224x28xf32, #tpu.memory_space<vmem>>, vector<1x224x28xf32>
    %1 = vector.shape_cast %0 : vector<1x224x28xf32> to vector<224x28xf32>
    %2 = vector.extract_strided_slice %1 {offsets = [0, 0], sizes = [192, 28], strides = [1, 1]} : vector<224x28xf32> to vector<192x28xf32>
    %c0_2 = arith.constant 0 : index
    %c0_3 = arith.constant 0 : index
    %c0_4 = arith.constant 0 : index
    %3 = vector.load %arg2[%c0_2, %c0_3, %c0_4] : memref<5x28x240xf32, #tpu.memory_space<vmem>>, vector<1x28x240xf32>
    %4 = vector.shape_cast %3 : vector<1x28x240xf32> to vector<28x240xf32>
    %cst = arith.constant dense<0.000000e+00> : vector<192x240xf32>
    %5 = tpu.matmul %2, %4, %cst {dimension_numbers = #tpu.dot_dimension_numbers<[1], [0], [0], [1], [0, 0, 1, 1], [], []>} : vector<192x28xf32>, vector<28x240xf32>, vector<192x240xf32> -> vector<192x240xf32>
    %6 = vector.extract_strided_slice %1 {offsets = [8, 0], sizes = [192, 28], strides = [1, 1]} : vector<224x28xf32> to vector<192x28xf32>
    %c1 = arith.constant 1 : index
    %c0_5 = arith.constant 0 : index
    %c0_6 = arith.constant 0 : index
    %7 = vector.load %arg2[%c1, %c0_5, %c0_6] : memref<5x28x240xf32, #tpu.memory_space<vmem>>, vector<1x28x240xf32>
    %8 = vector.shape_cast %7 : vector<1x28x240xf32> to vector<28x240xf32>
    %cst_7 = arith.constant dense<0.000000e+00> : vector<192x240xf32>
    %9 = tpu.matmul %6, %8, %cst_7 {dimension_numbers = #tpu.dot_dimension_numbers<[1], [0], [0], [1], [0, 0, 1, 1], [], []>} : vector<192x28xf32>, vector<28x240xf32>, vector<192x240xf32> -> vector<192x240xf32>
    %10 = arith.addf %5, %9 : vector<192x240xf32>
    %11 = vector.extract_strided_slice %1 {offsets = [16, 0], sizes = [192, 28], strides = [1, 1]} : vector<224x28xf32> to vector<192x28xf32>
    %c2 = arith.constant 2 : index
    %c0_8 = arith.constant 0 : index
    %c0_9 = arith.constant 0 : index
    %12 = vector.load %arg2[%c2, %c0_8, %c0_9] : memref<5x28x240xf32, #tpu.memory_space<vmem>>, vector<1x28x240xf32>
    %13 = vector.shape_cast %12 : vector<1x28x240xf32> to vector<28x240xf32>
    %cst_10 = arith.constant dense<0.000000e+00> : vector<192x240xf32>
    %14 = tpu.matmul %11, %13, %cst_10 {dimension_numbers = #tpu.dot_dimension_numbers<[1], [0], [0], [1], [0, 0, 1, 1], [], []>} : vector<192x28xf32>, vector<28x240xf32>, vector<192x240xf32> -> vector<192x240xf32>
    %15 = arith.addf %10, %14 : vector<192x240xf32>
    %16 = vector.extract_strided_slice %1 {offsets = [24, 0], sizes = [192, 28], strides = [1, 1]} : vector<224x28xf32> to vector<192x28xf32>
    %c3 = arith.constant 3 : index
    %c0_11 = arith.constant 0 : index
    %c0_12 = arith.constant 0 : index
    %17 = vector.load %arg2[%c3, %c0_11, %c0_12] : memref<5x28x240xf32, #tpu.memory_space<vmem>>, vector<1x28x240xf32>
    %18 = vector.shape_cast %17 : vector<1x28x240xf32> to vector<28x240xf32>
    %cst_13 = arith.constant dense<0.000000e+00> : vector<192x240xf32>
    %19 = tpu.matmul %16, %18, %cst_13 {dimension_numbers = #tpu.dot_dimension_numbers<[1], [0], [0], [1], [0, 0, 1, 1], [], []>} : vector<192x28xf32>, vector<28x240xf32>, vector<192x240xf32> -> vector<192x240xf32>
    %20 = arith.addf %15, %19 : vector<192x240xf32>
    %21 = vector.extract_strided_slice %1 {offsets = [32, 0], sizes = [192, 28], strides = [1, 1]} : vector<224x28xf32> to vector<192x28xf32>
    %c4 = arith.constant 4 : index
    %c0_14 = arith.constant 0 : index
    %c0_15 = arith.constant 0 : index
    %22 = vector.load %arg2[%c4, %c0_14, %c0_15] : memref<5x28x240xf32, #tpu.memory_space<vmem>>, vector<1x28x240xf32>
    %23 = vector.shape_cast %22 : vector<1x28x240xf32> to vector<28x240xf32>
    %cst_16 = arith.constant dense<0.000000e+00> : vector<192x240xf32>
    %24 = tpu.matmul %21, %23, %cst_16 {dimension_numbers = #tpu.dot_dimension_numbers<[1], [0], [0], [1], [0, 0, 1, 1], [], []>} : vector<192x28xf32>, vector<28x240xf32>, vector<192x240xf32> -> vector<192x240xf32>
    %25 = arith.addf %20, %24 : vector<192x240xf32>
    %c0_17 = arith.constant 0 : index
    %c0_18 = arith.constant 0 : index
    %26 = vector.load %arg3[%c0_17, %c0_18] : memref<1x240xf32, #tpu.memory_space<vmem>>, vector<1x240xf32>
    %27 = vector.broadcast %26 : vector<1x240xf32> to vector<192x240xf32>
    %28 = arith.addf %25, %27 : vector<192x240xf32>
    %29 = vector.extract_strided_slice %28 {offsets = [0, 0], sizes = [8, 240], strides = [1, 1]} : vector<192x240xf32> to vector<8x240xf32>
    %30 = vector.extract_strided_slice %28 {offsets = [8, 0], sizes = [8, 240], strides = [1, 1]} : vector<192x240xf32> to vector<8x240xf32>
    %31 = arith.maximumf %29, %30 : vector<8x240xf32>
    %32 = vector.extract_strided_slice %28 {offsets = [16, 0], sizes = [8, 240], strides = [1, 1]} : vector<192x240xf32> to vector<8x240xf32>
    %33 = vector.extract_strided_slice %28 {offsets = [24, 0], sizes = [8, 240], strides = [1, 1]} : vector<192x240xf32> to vector<8x240xf32>
    %34 = arith.maximumf %32, %33 : vector<8x240xf32>
    %35 = vector.extract_strided_slice %28 {offsets = [32, 0], sizes = [8, 240], strides = [1, 1]} : vector<192x240xf32> to vector<8x240xf32>
    %36 = vector.extract_strided_slice %28 {offsets = [40, 0], sizes = [8, 240], strides = [1, 1]} : vector<192x240xf32> to vector<8x240xf32>
    %37 = arith.maximumf %35, %36 : vector<8x240xf32>
    %38 = vector.extract_strided_slice %28 {offsets = [48, 0], sizes = [8, 240], strides = [1, 1]} : vector<192x240xf32> to vector<8x240xf32>
    %39 = vector.extract_strided_slice %28 {offsets = [56, 0], sizes = [8, 240], strides = [1, 1]} : vector<192x240xf32> to vector<8x240xf32>
    %40 = arith.maximumf %38, %39 : vector<8x240xf32>
    %41 = vector.extract_strided_slice %28 {offsets = [64, 0], sizes = [8, 240], strides = [1, 1]} : vector<192x240xf32> to vector<8x240xf32>
    %42 = vector.extract_strided_slice %28 {offsets = [72, 0], sizes = [8, 240], strides = [1, 1]} : vector<192x240xf32> to vector<8x240xf32>
    %43 = arith.maximumf %41, %42 : vector<8x240xf32>
    %44 = vector.extract_strided_slice %28 {offsets = [80, 0], sizes = [8, 240], strides = [1, 1]} : vector<192x240xf32> to vector<8x240xf32>
    %45 = vector.extract_strided_slice %28 {offsets = [88, 0], sizes = [8, 240], strides = [1, 1]} : vector<192x240xf32> to vector<8x240xf32>
    %46 = arith.maximumf %44, %45 : vector<8x240xf32>
    %47 = vector.extract_strided_slice %28 {offsets = [96, 0], sizes = [8, 240], strides = [1, 1]} : vector<192x240xf32> to vector<8x240xf32>
    %48 = vector.extract_strided_slice %28 {offsets = [104, 0], sizes = [8, 240], strides = [1, 1]} : vector<192x240xf32> to vector<8x240xf32>
    %49 = arith.maximumf %47, %48 : vector<8x240xf32>
    %50 = vector.extract_strided_slice %28 {offsets = [112, 0], sizes = [8, 240], strides = [1, 1]} : vector<192x240xf32> to vector<8x240xf32>
    %51 = vector.extract_strided_slice %28 {offsets = [120, 0], sizes = [8, 240], strides = [1, 1]} : vector<192x240xf32> to vector<8x240xf32>
    %52 = arith.maximumf %50, %51 : vector<8x240xf32>
    %53 = vector.extract_strided_slice %28 {offsets = [128, 0], sizes = [8, 240], strides = [1, 1]} : vector<192x240xf32> to vector<8x240xf32>
    %54 = vector.extract_strided_slice %28 {offsets = [136, 0], sizes = [8, 240], strides = [1, 1]} : vector<192x240xf32> to vector<8x240xf32>
    %55 = arith.maximumf %53, %54 : vector<8x240xf32>
    %56 = vector.extract_strided_slice %28 {offsets = [144, 0], sizes = [8, 240], strides = [1, 1]} : vector<192x240xf32> to vector<8x240xf32>
    %57 = vector.extract_strided_slice %28 {offsets = [152, 0], sizes = [8, 240], strides = [1, 1]} : vector<192x240xf32> to vector<8x240xf32>
    %58 = arith.maximumf %56, %57 : vector<8x240xf32>
    %59 = vector.extract_strided_slice %28 {offsets = [160, 0], sizes = [8, 240], strides = [1, 1]} : vector<192x240xf32> to vector<8x240xf32>
    %60 = vector.extract_strided_slice %28 {offsets = [168, 0], sizes = [8, 240], strides = [1, 1]} : vector<192x240xf32> to vector<8x240xf32>
    %61 = arith.maximumf %59, %60 : vector<8x240xf32>
    %62 = vector.extract_strided_slice %28 {offsets = [176, 0], sizes = [8, 240], strides = [1, 1]} : vector<192x240xf32> to vector<8x240xf32>
    %63 = vector.extract_strided_slice %28 {offsets = [184, 0], sizes = [8, 240], strides = [1, 1]} : vector<192x240xf32> to vector<8x240xf32>
    %64 = arith.maximumf %62, %63 : vector<8x240xf32>
    %65 = tpu.concatenate %31, %34, %37, %40, %43, %46, %49, %52, %55, %58, %61, %64 in 0 : vector<8x240xf32>, vector<8x240xf32>, vector<8x240xf32>, vector<8x240xf32>, vector<8x240xf32>, vector<8x240xf32>, vector<8x240xf32>, vector<8x240xf32>, vector<8x240xf32>, vector<8x240xf32>, vector<8x240xf32>, vector<8x240xf32> -> vector<96x240xf32>
    %66 = vector.extract_strided_slice %65 {offsets = [0, 0], sizes = [96, 239], strides = [1, 1]} : vector<96x240xf32> to vector<96x239xf32>
    %67 = vector.extract_strided_slice %65 {offsets = [0, 1], sizes = [96, 239], strides = [1, 1]} : vector<96x240xf32> to vector<96x239xf32>
    %68 = arith.maximumf %66, %67 : vector<96x239xf32>
    %cst_19 = arith.constant 0.000000e+00 : f32
    %69 = vector.broadcast %cst_19 : f32 to vector<96x239xf32>
    %70 = arith.maximumf %68, %69 : vector<96x239xf32>
    %71 = vector.extract_strided_slice %70 {offsets = [0, 0], sizes = [64, 239], strides = [1, 1]} : vector<96x239xf32> to vector<64x239xf32>
    %c0_20 = arith.constant 0 : index
    %c0_21 = arith.constant 0 : index
    %c0_22 = arith.constant 0 : index
    %72 = vector.load %arg4[%c0_20, %c0_21, %c0_22] : memref<5x239x160xf32, #tpu.memory_space<vmem>>, vector<1x239x160xf32>
    %73 = vector.shape_cast %72 : vector<1x239x160xf32> to vector<239x160xf32>
    %cst_23 = arith.constant dense<0.000000e+00> : vector<64x160xf32>
    %74 = tpu.matmul %71, %73, %cst_23 {dimension_numbers = #tpu.dot_dimension_numbers<[1], [0], [0], [1], [0, 0, 1, 1], [], []>} : vector<64x239xf32>, vector<239x160xf32>, vector<64x160xf32> -> vector<64x160xf32>
    %75 = vector.extract_strided_slice %70 {offsets = [8, 0], sizes = [64, 239], strides = [1, 1]} : vector<96x239xf32> to vector<64x239xf32>
    %c1_24 = arith.constant 1 : index
    %c0_25 = arith.constant 0 : index
    %c0_26 = arith.constant 0 : index
    %76 = vector.load %arg4[%c1_24, %c0_25, %c0_26] : memref<5x239x160xf32, #tpu.memory_space<vmem>>, vector<1x239x160xf32>
    %77 = vector.shape_cast %76 : vector<1x239x160xf32> to vector<239x160xf32>
    %cst_27 = arith.constant dense<0.000000e+00> : vector<64x160xf32>
    %78 = tpu.matmul %75, %77, %cst_27 {dimension_numbers = #tpu.dot_dimension_numbers<[1], [0], [0], [1], [0, 0, 1, 1], [], []>} : vector<64x239xf32>, vector<239x160xf32>, vector<64x160xf32> -> vector<64x160xf32>
    %79 = arith.addf %74, %78 : vector<64x160xf32>
    %80 = vector.extract_strided_slice %70 {offsets = [16, 0], sizes = [64, 239], strides = [1, 1]} : vector<96x239xf32> to vector<64x239xf32>
    %c2_28 = arith.constant 2 : index
    %c0_29 = arith.constant 0 : index
    %c0_30 = arith.constant 0 : index
    %81 = vector.load %arg4[%c2_28, %c0_29, %c0_30] : memref<5x239x160xf32, #tpu.memory_space<vmem>>, vector<1x239x160xf32>
    %82 = vector.shape_cast %81 : vector<1x239x160xf32> to vector<239x160xf32>
    %cst_31 = arith.constant dense<0.000000e+00> : vector<64x160xf32>
    %83 = tpu.matmul %80, %82, %cst_31 {dimension_numbers = #tpu.dot_dimension_numbers<[1], [0], [0], [1], [0, 0, 1, 1], [], []>} : vector<64x239xf32>, vector<239x160xf32>, vector<64x160xf32> -> vector<64x160xf32>
    %84 = arith.addf %79, %83 : vector<64x160xf32>
    %85 = vector.extract_strided_slice %70 {offsets = [24, 0], sizes = [64, 239], strides = [1, 1]} : vector<96x239xf32> to vector<64x239xf32>
    %c3_32 = arith.constant 3 : index
    %c0_33 = arith.constant 0 : index
    %c0_34 = arith.constant 0 : index
    %86 = vector.load %arg4[%c3_32, %c0_33, %c0_34] : memref<5x239x160xf32, #tpu.memory_space<vmem>>, vector<1x239x160xf32>
    %87 = vector.shape_cast %86 : vector<1x239x160xf32> to vector<239x160xf32>
    %cst_35 = arith.constant dense<0.000000e+00> : vector<64x160xf32>
    %88 = tpu.matmul %85, %87, %cst_35 {dimension_numbers = #tpu.dot_dimension_numbers<[1], [0], [0], [1], [0, 0, 1, 1], [], []>} : vector<64x239xf32>, vector<239x160xf32>, vector<64x160xf32> -> vector<64x160xf32>
    %89 = arith.addf %84, %88 : vector<64x160xf32>
    %90 = vector.extract_strided_slice %70 {offsets = [32, 0], sizes = [64, 239], strides = [1, 1]} : vector<96x239xf32> to vector<64x239xf32>
    %c4_36 = arith.constant 4 : index
    %c0_37 = arith.constant 0 : index
    %c0_38 = arith.constant 0 : index
    %91 = vector.load %arg4[%c4_36, %c0_37, %c0_38] : memref<5x239x160xf32, #tpu.memory_space<vmem>>, vector<1x239x160xf32>
    %92 = vector.shape_cast %91 : vector<1x239x160xf32> to vector<239x160xf32>
    %cst_39 = arith.constant dense<0.000000e+00> : vector<64x160xf32>
    %93 = tpu.matmul %90, %92, %cst_39 {dimension_numbers = #tpu.dot_dimension_numbers<[1], [0], [0], [1], [0, 0, 1, 1], [], []>} : vector<64x239xf32>, vector<239x160xf32>, vector<64x160xf32> -> vector<64x160xf32>
    %94 = arith.addf %89, %93 : vector<64x160xf32>
    %c0_40 = arith.constant 0 : index
    %c0_41 = arith.constant 0 : index
    %95 = vector.load %arg5[%c0_40, %c0_41] : memref<1x160xf32, #tpu.memory_space<vmem>>, vector<1x160xf32>
    %96 = vector.broadcast %95 : vector<1x160xf32> to vector<64x160xf32>
    %97 = arith.addf %94, %96 : vector<64x160xf32>
    %98 = vector.extract_strided_slice %97 {offsets = [0, 0], sizes = [8, 160], strides = [1, 1]} : vector<64x160xf32> to vector<8x160xf32>
    %99 = vector.extract_strided_slice %97 {offsets = [8, 0], sizes = [8, 160], strides = [1, 1]} : vector<64x160xf32> to vector<8x160xf32>
    %100 = arith.maximumf %98, %99 : vector<8x160xf32>
    %101 = vector.extract_strided_slice %97 {offsets = [16, 0], sizes = [8, 160], strides = [1, 1]} : vector<64x160xf32> to vector<8x160xf32>
    %102 = vector.extract_strided_slice %97 {offsets = [24, 0], sizes = [8, 160], strides = [1, 1]} : vector<64x160xf32> to vector<8x160xf32>
    %103 = arith.maximumf %101, %102 : vector<8x160xf32>
    %104 = vector.extract_strided_slice %97 {offsets = [32, 0], sizes = [8, 160], strides = [1, 1]} : vector<64x160xf32> to vector<8x160xf32>
    %105 = vector.extract_strided_slice %97 {offsets = [40, 0], sizes = [8, 160], strides = [1, 1]} : vector<64x160xf32> to vector<8x160xf32>
    %106 = arith.maximumf %104, %105 : vector<8x160xf32>
    %107 = vector.extract_strided_slice %97 {offsets = [48, 0], sizes = [8, 160], strides = [1, 1]} : vector<64x160xf32> to vector<8x160xf32>
    %108 = vector.extract_strided_slice %97 {offsets = [56, 0], sizes = [8, 160], strides = [1, 1]} : vector<64x160xf32> to vector<8x160xf32>
    %109 = arith.maximumf %107, %108 : vector<8x160xf32>
    %110 = tpu.concatenate %100, %103, %106, %109 in 0 : vector<8x160xf32>, vector<8x160xf32>, vector<8x160xf32>, vector<8x160xf32> -> vector<32x160xf32>
    %111 = vector.extract_strided_slice %110 {offsets = [0, 0], sizes = [32, 159], strides = [1, 1]} : vector<32x160xf32> to vector<32x159xf32>
    %112 = vector.extract_strided_slice %110 {offsets = [0, 1], sizes = [32, 159], strides = [1, 1]} : vector<32x160xf32> to vector<32x159xf32>
    %113 = arith.maximumf %111, %112 : vector<32x159xf32>
    %cst_42 = arith.constant 0.000000e+00 : f32
    %114 = vector.broadcast %cst_42 : f32 to vector<32x159xf32>
    %115 = arith.maximumf %113, %114 : vector<32x159xf32>
    %116 = vector.extract_strided_slice %115 {offsets = [0, 0], sizes = [8, 159], strides = [1, 1]} : vector<32x159xf32> to vector<8x159xf32>
    %c0_43 = arith.constant 0 : index
    %c0_44 = arith.constant 0 : index
    %c0_45 = arith.constant 0 : index
    %117 = vector.load %arg6[%c0_43, %c0_44, %c0_45] : memref<4x159x120xf32, #tpu.memory_space<vmem>>, vector<1x159x120xf32>
    %118 = vector.shape_cast %117 : vector<1x159x120xf32> to vector<159x120xf32>
    %cst_46 = arith.constant dense<0.000000e+00> : vector<8x120xf32>
    %119 = tpu.matmul %116, %118, %cst_46 {dimension_numbers = #tpu.dot_dimension_numbers<[1], [0], [0], [1], [0, 0, 1, 1], [], []>} : vector<8x159xf32>, vector<159x120xf32>, vector<8x120xf32> -> vector<8x120xf32>
    %120 = vector.extract_strided_slice %115 {offsets = [8, 0], sizes = [8, 159], strides = [1, 1]} : vector<32x159xf32> to vector<8x159xf32>
    %c1_47 = arith.constant 1 : index
    %c0_48 = arith.constant 0 : index
    %c0_49 = arith.constant 0 : index
    %121 = vector.load %arg6[%c1_47, %c0_48, %c0_49] : memref<4x159x120xf32, #tpu.memory_space<vmem>>, vector<1x159x120xf32>
    %122 = vector.shape_cast %121 : vector<1x159x120xf32> to vector<159x120xf32>
    %cst_50 = arith.constant dense<0.000000e+00> : vector<8x120xf32>
    %123 = tpu.matmul %120, %122, %cst_50 {dimension_numbers = #tpu.dot_dimension_numbers<[1], [0], [0], [1], [0, 0, 1, 1], [], []>} : vector<8x159xf32>, vector<159x120xf32>, vector<8x120xf32> -> vector<8x120xf32>
    %124 = arith.addf %119, %123 : vector<8x120xf32>
    %125 = vector.extract_strided_slice %115 {offsets = [16, 0], sizes = [8, 159], strides = [1, 1]} : vector<32x159xf32> to vector<8x159xf32>
    %c2_51 = arith.constant 2 : index
    %c0_52 = arith.constant 0 : index
    %c0_53 = arith.constant 0 : index
    %126 = vector.load %arg6[%c2_51, %c0_52, %c0_53] : memref<4x159x120xf32, #tpu.memory_space<vmem>>, vector<1x159x120xf32>
    %127 = vector.shape_cast %126 : vector<1x159x120xf32> to vector<159x120xf32>
    %cst_54 = arith.constant dense<0.000000e+00> : vector<8x120xf32>
    %128 = tpu.matmul %125, %127, %cst_54 {dimension_numbers = #tpu.dot_dimension_numbers<[1], [0], [0], [1], [0, 0, 1, 1], [], []>} : vector<8x159xf32>, vector<159x120xf32>, vector<8x120xf32> -> vector<8x120xf32>
    %129 = arith.addf %124, %128 : vector<8x120xf32>
    %130 = vector.extract_strided_slice %115 {offsets = [24, 0], sizes = [8, 159], strides = [1, 1]} : vector<32x159xf32> to vector<8x159xf32>
    %c3_55 = arith.constant 3 : index
    %c0_56 = arith.constant 0 : index
    %c0_57 = arith.constant 0 : index
    %131 = vector.load %arg6[%c3_55, %c0_56, %c0_57] : memref<4x159x120xf32, #tpu.memory_space<vmem>>, vector<1x159x120xf32>
    %132 = vector.shape_cast %131 : vector<1x159x120xf32> to vector<159x120xf32>
    %cst_58 = arith.constant dense<0.000000e+00> : vector<8x120xf32>
    %133 = tpu.matmul %130, %132, %cst_58 {dimension_numbers = #tpu.dot_dimension_numbers<[1], [0], [0], [1], [0, 0, 1, 1], [], []>} : vector<8x159xf32>, vector<159x120xf32>, vector<8x120xf32> -> vector<8x120xf32>
    %134 = arith.addf %129, %133 : vector<8x120xf32>
    %c0_59 = arith.constant 0 : index
    %c0_60 = arith.constant 0 : index
    %135 = vector.load %arg7[%c0_59, %c0_60] : memref<1x120xf32, #tpu.memory_space<vmem>>, vector<1x120xf32>
    %136 = vector.broadcast %135 : vector<1x120xf32> to vector<8x120xf32>
    %137 = arith.addf %134, %136 : vector<8x120xf32>
    %cst_61 = arith.constant 0.000000e+00 : f32
    %138 = vector.broadcast %cst_61 : f32 to vector<8x120xf32>
    %139 = arith.maximumf %137, %138 : vector<8x120xf32>
    %c0_62 = arith.constant 0 : index
    %c0_63 = arith.constant 0 : index
    %140 = vector.load %arg8[%c0_62, %c0_63] : memref<120x50xf32, #tpu.memory_space<vmem>>, vector<120x50xf32>
    %cst_64 = arith.constant dense<0.000000e+00> : vector<8x50xf32>
    %141 = tpu.matmul %139, %140, %cst_64 {dimension_numbers = #tpu.dot_dimension_numbers<[1], [0], [0], [1], [0, 0, 1, 1], [], []>} : vector<8x120xf32>, vector<120x50xf32>, vector<8x50xf32> -> vector<8x50xf32>
    %c0_65 = arith.constant 0 : index
    %c0_66 = arith.constant 0 : index
    %142 = vector.load %arg9[%c0_65, %c0_66] : memref<1x50xf32, #tpu.memory_space<vmem>>, vector<1x50xf32>
    %143 = vector.broadcast %142 : vector<1x50xf32> to vector<8x50xf32>
    %144 = arith.addf %141, %143 : vector<8x50xf32>
    %cst_67 = arith.constant 0.000000e+00 : f32
    %145 = vector.broadcast %cst_67 : f32 to vector<8x50xf32>
    %146 = arith.maximumf %144, %145 : vector<8x50xf32>
    %c0_68 = arith.constant 0 : index
    %c0_69 = arith.constant 0 : index
    %147 = vector.load %arg10[%c0_68, %c0_69] : memref<50x128xf32, #tpu.memory_space<vmem>>, vector<50x128xf32>
    %cst_70 = arith.constant dense<0.000000e+00> : vector<8x128xf32>
    %148 = tpu.matmul %146, %147, %cst_70 {dimension_numbers = #tpu.dot_dimension_numbers<[1], [0], [0], [1], [0, 0, 1, 1], [], []>} : vector<8x50xf32>, vector<50x128xf32>, vector<8x128xf32> -> vector<8x128xf32>
    %c0_71 = arith.constant 0 : index
    %c0_72 = arith.constant 0 : index
    %149 = vector.load %arg11[%c0_71, %c0_72] : memref<1x128xf32, #tpu.memory_space<vmem>>, vector<1x128xf32>
    %150 = vector.broadcast %149 : vector<1x128xf32> to vector<8x128xf32>
    %151 = arith.addf %148, %150 : vector<8x128xf32>
    %cst_73 = arith.constant dense<0xFF800000> : vector<8xf32>
    %152 = vector.multi_reduction <maximumf>, %151, %cst_73 [1] : vector<8x128xf32> to vector<8xf32>
    %153 = vector.shape_cast %152 : vector<8xf32> to vector<8x1xf32>
    %154 = vector.broadcast %153 : vector<8x1xf32> to vector<8x128xf32>
    %155 = arith.subf %151, %154 : vector<8x128xf32>
    %156 = math.exp %155 : vector<8x128xf32>
    %cst_74 = arith.constant dense<0.000000e+00> : vector<8xf32>
    %157 = vector.multi_reduction <add>, %156, %cst_74 [1] : vector<8x128xf32> to vector<8xf32>
    %158 = vector.shape_cast %157 : vector<8xf32> to vector<8x1xf32>
    %159 = math.log %158 : vector<8x1xf32>
    %160 = vector.broadcast %159 : vector<8x1xf32> to vector<8x128xf32>
    %161 = arith.subf %155, %160 : vector<8x128xf32>
    %c0_75 = arith.constant 0 : index
    %c0_76 = arith.constant 0 : index
    %162 = vector.load %arg12[%c0_75, %c0_76] : memref<8x128xf32, #tpu.memory_space<vmem>>, vector<8x128xf32>
    tpu.vector_store %arg12[%c0_75, %c0_76], %161 {strides = array<i32>} : memref<8x128xf32, #tpu.memory_space<vmem>>, vector<8x128xf32>,
    return
  }
  func.func @transform_0(%arg0: i32) -> (i32, i32, i32) {
    %c0_i32 = arith.constant 0 : i32
    %c0_i32_0 = arith.constant 0 : i32
    %c0_i32_1 = arith.constant 0 : i32
    return %arg0, %c0_i32, %c0_i32_0 : i32, i32, i32
  }
  func.func @transform_1(%arg0: i32) -> (i32, i32, i32) {
    %c0_i32 = arith.constant 0 : i32
    %c0_i32_0 = arith.constant 0 : i32
    %c0_i32_1 = arith.constant 0 : i32
    %c0_i32_2 = arith.constant 0 : i32
    return %c0_i32, %c0_i32_0, %c0_i32_1 : i32, i32, i32
  }
  func.func @transform_2(%arg0: i32) -> (i32, i32) {
    %c0_i32 = arith.constant 0 : i32
    %c0_i32_0 = arith.constant 0 : i32
    %c0_i32_1 = arith.constant 0 : i32
    return %c0_i32, %c0_i32_0 : i32, i32
  }
  func.func @transform_3(%arg0: i32) -> (i32, i32, i32) {
    %c0_i32 = arith.constant 0 : i32
    %c0_i32_0 = arith.constant 0 : i32
    %c0_i32_1 = arith.constant 0 : i32
    %c0_i32_2 = arith.constant 0 : i32
    return %c0_i32, %c0_i32_0, %c0_i32_1 : i32, i32, i32
  }
  func.func @transform_4(%arg0: i32) -> (i32, i32) {
    %c0_i32 = arith.constant 0 : i32
    %c0_i32_0 = arith.constant 0 : i32
    %c0_i32_1 = arith.constant 0 : i32
    return %c0_i32, %c0_i32_0 : i32, i32
  }
  func.func @transform_5(%arg0: i32) -> (i32, i32, i32) {
    %c0_i32 = arith.constant 0 : i32
    %c0_i32_0 = arith.constant 0 : i32
    %c0_i32_1 = arith.constant 0 : i32
    %c0_i32_2 = arith.constant 0 : i32
    return %c0_i32, %c0_i32_0, %c0_i32_1 : i32, i32, i32
  }
  func.func @transform_6(%arg0: i32) -> (i32, i32) {
    %c0_i32 = arith.constant 0 : i32
    %c0_i32_0 = arith.constant 0 : i32
    %c0_i32_1 = arith.constant 0 : i32
    return %c0_i32, %c0_i32_0 : i32, i32
  }
  func.func @transform_7(%arg0: i32) -> (i32, i32) {
    %c0_i32 = arith.constant 0 : i32
    %c0_i32_0 = arith.constant 0 : i32
    %c0_i32_1 = arith.constant 0 : i32
    return %c0_i32, %c0_i32_0 : i32, i32
  }
  func.func @transform_8(%arg0: i32) -> (i32, i32) {
    %c0_i32 = arith.constant 0 : i32
    %c0_i32_0 = arith.constant 0 : i32
    %c0_i32_1 = arith.constant 0 : i32
    return %c0_i32, %c0_i32_0 : i32, i32
  }
  func.func @transform_9(%arg0: i32) -> (i32, i32) {
    %c0_i32 = arith.constant 0 : i32
    %c0_i32_0 = arith.constant 0 : i32
    %c0_i32_1 = arith.constant 0 : i32
    return %c0_i32, %c0_i32_0 : i32, i32
  }
  func.func @transform_10(%arg0: i32) -> (i32, i32) {
    %c0_i32 = arith.constant 0 : i32
    %c0_i32_0 = arith.constant 0 : i32
    %c0_i32_1 = arith.constant 0 : i32
    return %c0_i32, %c0_i32_0 : i32, i32
  }
  func.func @transform_11(%arg0: i32) -> (i32, i32) {
    %c0_i32 = arith.constant 0 : i32
    %c0_i32_0 = arith.constant 0 : i32
    return %arg0, %c0_i32 : i32, i32
  }
}

</mosaic_0001>

<llo_original>
// kernel: surrogate_forward.1
$region0: #{surrogate_forward.1}
  #allocation0 [shape = 'u32[]', space=smem, size = 0x4, offset = 0x4, fixed_abs, tag = 'smem constant byte address 0x4 - core index']
  #allocation1 [shape = 'u32[144,128]{1,0:T(1,128)}', space=vmem, size = 0x12000, scoped, tag = 'internal scratch']
  %s0 = inlined_call_operand.vmem [shape: f32[2,224,28], index: 0, kind: input, shape index: {}]
  %s1 = inlined_call_operand.vmem [shape: f32[5,28,240], index: 1, kind: input, shape index: {}]
  %s2 = inlined_call_operand.vmem [shape: f32[1,240], index: 2, kind: input, shape index: {}]
  %s3 = inlined_call_operand.vmem [shape: f32[5,239,160], index: 3, kind: input, shape index: {}]
  %s4 = inlined_call_operand.vmem [shape: f32[1,160], index: 4, kind: input, shape index: {}]
  %s5 = inlined_call_operand.vmem [shape: f32[4,159,120], index: 5, kind: input, shape index: {}]
  %s6 = inlined_call_operand.vmem [shape: f32[1,120], index: 6, kind: input, shape index: {}]
  %s7 = inlined_call_operand.vmem [shape: f32[120,50], index: 7, kind: input, shape index: {}]
  %s8 = inlined_call_operand.vmem [shape: f32[1,50], index: 8, kind: input, shape index: {}]
  %s9 = inlined_call_operand.vmem [shape: f32[50,128], index: 9, kind: input, shape index: {}]
  %s10 = inlined_call_operand.vmem [shape: f32[1,128], index: 10, kind: input, shape index: {}]
  %s11 = inlined_call_operand.hbm [shape: f32[16,128], index: 11, kind: output, shape index: {}]
  %s12 = sld [smem:[#allocation0]]
  $region77: #{surrogate_forward.1} parent=0
    _
  %s14 = ssub.s32 1, %s12
  %s15 = scalar_select 0, %s14, %s12
  $region1: #{surrogate_forward.1} parent=0
    #allocation2 [shape = 'u8[8192]{0}', space=vmem, size = 0x2000, scoped, tag = 'output window, operand 0']
    #allocation3 [shape = 's32[2]{0}', space=sflag, size = 0x8, scoped, tag = 'scoped memory for surrogate_forward.1']
    %16 = vsyncpa [#allocation3], 0
    %s17 = scalar_lea.sflag [#allocation3], 1
    %18 = vsyncpa %s17, 0
    loop: start=0, step=1, limit=4
    $region2: #{surrogate_forward.1} parent=1 // loop_pre_header
      _
    $region3: #{surrogate_forward.1} parent=1 // loop_header
      %s20 = sphi 0, %s24
      %p21 = scmp.ge.s32.totalorder %s20, 4
      %s30 = sphi 0, %s32
      %s33 = sphi 0, %s30
      %s34 = sphi 0, %s33
      %s50 = sphi 0, %s34
      %s54 = sphi 0, %s54
      %s56 = sphi 0, %s54
      %s57 = sphi 0, %s56
      %s71 = sphi 0, %s57
      %s75 = sphi 0, %s75
      %s77 = sphi 0, %s75
      %s78 = sphi 0, %s77
      %s92 = sphi 0, %s78
      %s96 = sphi 0, %s96
      %s98 = sphi 0, %s96
      %s99 = sphi 0, %s98
      %s113 = sphi 0, %s99
      %s117 = sphi 0, %s117
      %s119 = sphi 0, %s117
      %s120 = sphi 0, %s119
      %s134 = sphi 0, %s120
      %s138 = sphi 0, %s138
      %s140 = sphi 0, %s138
      %s141 = sphi 0, %s140
      %s155 = sphi 0, %s141
      %s159 = sphi 0, %s159
      %s161 = sphi 0, %s159
      %s162 = sphi 0, %s161
      %s176 = sphi 0, %s162
      %s180 = sphi 0, %s180
      %s182 = sphi 0, %s180
      %s183 = sphi 0, %s182
      %s197 = sphi 0, %s183
      %s201 = sphi 0, %s201
      %s203 = sphi 0, %s201
      %s204 = sphi 0, %s203
      %s218 = sphi 0, %s204
      %s222 = sphi 0, %s222
      %s224 = sphi 0, %s222
      %s225 = sphi 0, %s224
      %s239 = sphi 0, %s225
      %s243 = sphi 0, %s243
      %s245 = sphi 0, %s243
      %s246 = sphi 0, %s245
      %s260 = sphi 0, %s246
      %s266 = sphi 0, %s268
      %s269 = sphi 0, %s266
      %s270 = sphi 0, %s269
      %s286 = sphi 0, %s270
    $region4: #{surrogate_forward.1} parent=1 // loop_header_branch
      %23 = sbr.rel (%p21) target = $region8
    $region5: #{surrogate_forward.1} parent=1 // loop_body
      %s25 = ssub.s32 %s20, 1
      %s26 = ssub.s32 %s20, 2
      %s27 = sadd.s32 %s20, 1
      %s28 = ssub.s32 %s20, %s27
      %p29 = scmp.eq.s32.totalorder %s28, 0
      %s31 = sadd.s32 %s30, 1
      %s32 = scalar_select %p29, %s30, %s31
      %p35 = pneg %p29
      %p36 = scmp.eq.s32.totalorder %s20, 1
      %p37 = por %p35, %p36
      %p38 = scmp.ne.s32.totalorder %s30, %s33
      %p39 = scmp.eq.s32.totalorder %s20, 0
      %p40 = por %p38, %p39
      %p41 = scmp.ne.s32.totalorder %s30, %s33
      %p42 = scmp.eq.s32.totalorder %s25, 1
      %p43 = por %p41, %p42
      %p44 = scmp.ne.s32.totalorder %s33, %s34
      %p45 = scmp.eq.s32.totalorder %s25, 0
      %p46 = por %p44, %p45
      %p47 = scmp.ne.s32.totalorder %s33, %s34
      %p48 = scmp.eq.s32.totalorder %s26, 1
      %p49 = por %p47, %p48
      %p51 = scmp.ne.s32.totalorder %s34, %s50
      %p52 = scmp.eq.s32.totalorder %s26, 0
      %p53 = por %p51, %p52
      %s55 = sadd.s32 %s54, 1
      %p58 = scmp.eq.s32.totalorder %s20, 1
      %p59 = scmp.ne.s32.totalorder %s54, %s56
      %p60 = scmp.eq.s32.totalorder %s20, 0
      %p61 = por %p59, %p60
      %p62 = scmp.ne.s32.totalorder %s54, %s56
      %p63 = scmp.eq.s32.totalorder %s25, 1
      %p64 = por %p62, %p63
      %p65 = scmp.ne.s32.totalorder %s56, %s57
      %p66 = scmp.eq.s32.totalorder %s25, 0
      %p67 = por %p65, %p66
      %p68 = scmp.ne.s32.totalorder %s56, %s57
      %p69 = scmp.eq.s32.totalorder %s26, 1
      %p70 = por %p68, %p69
      %p72 = scmp.ne.s32.totalorder %s57, %s71
      %p73 = scmp.eq.s32.totalorder %s26, 0
      %p74 = por %p72, %p73
      %s76 = sadd.s32 %s75, 1
      %p79 = scmp.eq.s32.totalorder %s20, 1
      %p80 = scmp.ne.s32.totalorder %s75, %s77
      %p81 = scmp.eq.s32.totalorder %s20, 0
      %p82 = por %p80, %p81
      %p83 = scmp.ne.s32.totalorder %s75, %s77
      %p84 = scmp.eq.s32.totalorder %s25, 1
      %p85 = por %p83, %p84
      %p86 = scmp.ne.s32.totalorder %s77, %s78
      %p87 = scmp.eq.s32.totalorder %s25, 0
      %p88 = por %p86, %p87
      %p89 = scmp.ne.s32.totalorder %s77, %s78
      %p90 = scmp.eq.s32.totalorder %s26, 1
      %p91 = por %p89, %p90
      %p93 = scmp.ne.s32.totalorder %s78, %s92
      %p94 = scmp.eq.s32.totalorder %s26, 0
      %p95 = por %p93, %p94
      %s97 = sadd.s32 %s96, 1
      %p100 = scmp.eq.s32.totalorder %s20, 1
      %p101 = scmp.ne.s32.totalorder %s96, %s98
      %p102 = scmp.eq.s32.totalorder %s20, 0
      %p103 = por %p101, %p102
      %p104 = scmp.ne.s32.totalorder %s96, %s98
      %p105 = scmp.eq.s32.totalorder %s25, 1
      %p106 = por %p104, %p105
      %p107 = scmp.ne.s32.totalorder %s98, %s99
      %p108 = scmp.eq.s32.totalorder %s25, 0
      %p109 = por %p107, %p108
      %p110 = scmp.ne.s32.totalorder %s98, %s99
      %p111 = scmp.eq.s32.totalorder %s26, 1
      %p112 = por %p110, %p111
      %p114 = scmp.ne.s32.totalorder %s99, %s113
      %p115 = scmp.eq.s32.totalorder %s26, 0
      %p116 = por %p114, %p115
      %s118 = sadd.s32 %s117, 1
      %p121 = scmp.eq.s32.totalorder %s20, 1
      %p122 = scmp.ne.s32.totalorder %s117, %s119
      %p123 = scmp.eq.s32.totalorder %s20, 0
      %p124 = por %p122, %p123
      %p125 = scmp.ne.s32.totalorder %s117, %s119
      %p126 = scmp.eq.s32.totalorder %s25, 1
      %p127 = por %p125, %p126
      %p128 = scmp.ne.s32.totalorder %s119, %s120
      %p129 = scmp.eq.s32.totalorder %s25, 0
      %p130 = por %p128, %p129
      %p131 = scmp.ne.s32.totalorder %s119, %s120
      %p132 = scmp.eq.s32.totalorder %s26, 1
      %p133 = por %p131, %p132
      %p135 = scmp.ne.s32.totalorder %s120, %s134
      %p136 = scmp.eq.s32.totalorder %s26, 0
      %p137 = por %p135, %p136
      %s139 = sadd.s32 %s138, 1
      %p142 = scmp.eq.s32.totalorder %s20, 1
      %p143 = scmp.ne.s32.totalorder %s138, %s140
      %p144 = scmp.eq.s32.totalorder %s20, 0
      %p145 = por %p143, %p144
      %p146 = scmp.ne.s32.totalorder %s138, %s140
      %p147 = scmp.eq.s32.totalorder %s25, 1
      %p148 = por %p146, %p147
      %p149 = scmp.ne.s32.totalorder %s140, %s141
      %p150 = scmp.eq.s32.totalorder %s25, 0
      %p151 = por %p149, %p150
      %p152 = scmp.ne.s32.totalorder %s140, %s141
      %p153 = scmp.eq.s32.totalorder %s26, 1
      %p154 = por %p152, %p153
      %p156 = scmp.ne.s32.totalorder %s141, %s155
      %p157 = scmp.eq.s32.totalorder %s26, 0
      %p158 = por %p156, %p157
      %s160 = sadd.s32 %s159, 1
      %p163 = scmp.eq.s32.totalorder %s20, 1
      %p164 = scmp.ne.s32.totalorder %s159, %s161
      %p165 = scmp.eq.s32.totalorder %s20, 0
      %p166 = por %p164, %p165
      %p167 = scmp.ne.s32.totalorder %s159, %s161
      %p168 = scmp.eq.s32.totalorder %s25, 1
      %p169 = por %p167, %p168
      %p170 = scmp.ne.s32.totalorder %s161, %s162
      %p171 = scmp.eq.s32.totalorder %s25, 0
      %p172 = por %p170, %p171
      %p173 = scmp.ne.s32.totalorder %s161, %s162
      %p174 = scmp.eq.s32.totalorder %s26, 1
      %p175 = por %p173, %p174
      %p177 = scmp.ne.s32.totalorder %s162, %s176
      %p178 = scmp.eq.s32.totalorder %s26, 0
      %p179 = por %p177, %p178
      %s181 = sadd.s32 %s180, 1
      %p184 = scmp.eq.s32.totalorder %s20, 1
      %p185 = scmp.ne.s32.totalorder %s180, %s182
      %p186 = scmp.eq.s32.totalorder %s20, 0
      %p187 = por %p185, %p186
      %p188 = scmp.ne.s32.totalorder %s180, %s182
      %p189 = scmp.eq.s32.totalorder %s25, 1
      %p190 = por %p188, %p189
      %p191 = scmp.ne.s32.totalorder %s182, %s183
      %p192 = scmp.eq.s32.totalorder %s25, 0
      %p193 = por %p191, %p192
      %p194 = scmp.ne.s32.totalorder %s182, %s183
      %p195 = scmp.eq.s32.totalorder %s26, 1
      %p196 = por %p194, %p195
      %p198 = scmp.ne.s32.totalorder %s183, %s197
      %p199 = scmp.eq.s32.totalorder %s26, 0
      %p200 = por %p198, %p199
      %s202 = sadd.s32 %s201, 1
      %p205 = scmp.eq.s32.totalorder %s20, 1
      %p206 = scmp.ne.s32.totalorder %s201, %s203
      %p207 = scmp.eq.s32.totalorder %s20, 0
      %p208 = por %p206, %p207
      %p209 = scmp.ne.s32.totalorder %s201, %s203
      %p210 = scmp.eq.s32.totalorder %s25, 1
      %p211 = por %p209, %p210
      %p212 = scmp.ne.s32.totalorder %s203, %s204
      %p213 = scmp.eq.s32.totalorder %s25, 0
      %p214 = por %p212, %p213
      %p215 = scmp.ne.s32.totalorder %s203, %s204
      %p216 = scmp.eq.s32.totalorder %s26, 1
      %p217 = por %p215, %p216
      %p219 = scmp.ne.s32.totalorder %s204, %s218
      %p220 = scmp.eq.s32.totalorder %s26, 0
      %p221 = por %p219, %p220
      %s223 = sadd.s32 %s222, 1
      %p226 = scmp.eq.s32.totalorder %s20, 1
      %p227 = scmp.ne.s32.totalorder %s222, %s224
      %p228 = scmp.eq.s32.totalorder %s20, 0
      %p229 = por %p227, %p228
      %p230 = scmp.ne.s32.totalorder %s222, %s224
      %p231 = scmp.eq.s32.totalorder %s25, 1
      %p232 = por %p230, %p231
      %p233 = scmp.ne.s32.totalorder %s224, %s225
      %p234 = scmp.eq.s32.totalorder %s25, 0
      %p235 = por %p233, %p234
      %p236 = scmp.ne.s32.totalorder %s224, %s225
      %p237 = scmp.eq.s32.totalorder %s26, 1
      %p238 = por %p236, %p237
      %p240 = scmp.ne.s32.totalorder %s225, %s239
      %p241 = scmp.eq.s32.totalorder %s26, 0
      %p242 = por %p240, %p241
      %s244 = sadd.s32 %s243, 1
      %p247 = scmp.eq.s32.totalorder %s20, 1
      %p248 = scmp.ne.s32.totalorder %s243, %s245
      %p249 = scmp.eq.s32.totalorder %s20, 0
      %p250 = por %p248, %p249
      %p251 = scmp.ne.s32.totalorder %s243, %s245
      %p252 = scmp.eq.s32.totalorder %s25, 1
      %p253 = por %p251, %p252
      %p254 = scmp.ne.s32.totalorder %s245, %s246
      %p255 = scmp.eq.s32.totalorder %s25, 0
      %p256 = por %p254, %p255
      %p257 = scmp.ne.s32.totalorder %s245, %s246
      %p258 = scmp.eq.s32.totalorder %s26, 1
      %p259 = por %p257, %p258
      %p261 = scmp.ne.s32.totalorder %s246, %s260
      %p262 = scmp.eq.s32.totalorder %s26, 0
      %p263 = por %p261, %p262
      %s264 = ssub.s32 %s20, %s27
      %p265 = scmp.eq.s32.totalorder %s264, 0
      %s267 = sadd.s32 %s266, 1
      %s268 = scalar_select %p265, %s266, %s267
      %p271 = pneg %p265
      %p272 = scmp.eq.s32.totalorder %s20, 1
      %p273 = por %p271, %p272
      %p274 = scmp.ne.s32.totalorder %s266, %s269
      %p275 = scmp.eq.s32.totalorder %s20, 0
      %p276 = por %p274, %p275
      %p277 = scmp.ne.s32.totalorder %s266, %s269
      %p278 = scmp.eq.s32.totalorder %s25, 1
      %p279 = por %p277, %p278
      %p280 = scmp.ne.s32.totalorder %s269, %s270
      %p281 = scmp.eq.s32.totalorder %s25, 0
      %p282 = por %p280, %p281
      %p283 = scmp.ne.s32.totalorder %s269, %s270
      %p284 = scmp.eq.s32.totalorder %s26, 1
      %p285 = por %p283, %p284
      %p287 = scmp.ne.s32.totalorder %s270, %s286
      %p288 = scmp.eq.s32.totalorder %s26, 0
      %p289 = por %p287, %p288
      %p290 = scmp.le.s32.totalorder 1, %s20
      %p291 = scmp.lt.s32.totalorder %s20, 3
      %p292 = pnand %p290, %p291
      %p293 = pneg %p292
      // Predicated region
      $region9: #{surrogate_forward.1} parent=5 // pred_check
        _
      $region10: #{surrogate_forward.1} parent=5 // pred_check_branch
        %295 = sbr.rel (%p292) target = $region12
      $region11: #{surrogate_forward.1} parent=5 // pred_region
        %s296 = ssub.s32 %s20, 1
        // Predicated region
        $region13: #{surrogate_forward.1} parent=11 // pred_check
          %p297 = pneg %p67
        $region14: #{surrogate_forward.1} parent=11 // pred_check_branch
          %299 = sbr.rel (%p297) target = $region16
        $region15: #{surrogate_forward.1} parent=11 // pred_region
          _
        $region16: #{surrogate_forward.1} parent=11 // pred_fallthru
          _
        // Predicated region
        $region17: #{surrogate_forward.1} parent=11 // pred_check
          %p300 = pneg %p88
        $region18: #{surrogate_forward.1} parent=11 // pred_check_branch
          %302 = sbr.rel (%p300) target = $region20
        $region19: #{surrogate_forward.1} parent=11 // pred_region
          _
        $region20: #{surrogate_forward.1} parent=11 // pred_fallthru
          _
        // Predicated region
        $region21: #{surrogate_forward.1} parent=11 // pred_check
          %p303 = pneg %p109
        $region22: #{surrogate_forward.1} parent=11 // pred_check_branch
          %305 = sbr.rel (%p303) target = $region24
        $region23: #{surrogate_forward.1} parent=11 // pred_region
          _
        $region24: #{surrogate_forward.1} parent=11 // pred_fallthru
          _
        // Predicated region
        $region25: #{surrogate_forward.1} parent=11 // pred_check
          %p306 = pneg %p130
        $region26: #{surrogate_forward.1} parent=11 // pred_check_branch
          %308 = sbr.rel (%p306) target = $region28
        $region27: #{surrogate_forward.1} parent=11 // pred_region
          _
        $region28: #{surrogate_forward.1} parent=11 // pred_fallthru
          _
        // Predicated region
        $region29: #{surrogate_forward.1} parent=11 // pred_check
          %p309 = pneg %p151
        $region30: #{surrogate_forward.1} parent=11 // pred_check_branch
          %311 = sbr.rel (%p309) target = $region32
        $region31: #{surrogate_forward.1} parent=11 // pred_region
          _
        $region32: #{surrogate_forward.1} parent=11 // pred_fallthru
          _
        // Predicated region
        $region33: #{surrogate_forward.1} parent=11 // pred_check
          %p312 = pneg %p172
        $region34: #{surrogate_forward.1} parent=11 // pred_check_branch
          %314 = sbr.rel (%p312) target = $region36
        $region35: #{surrogate_forward.1} parent=11 // pred_region
          _
        $region36: #{surrogate_forward.1} parent=11 // pred_fallthru
          _
        // Predicated region
        $region37: #{surrogate_forward.1} parent=11 // pred_check
          %p315 = pneg %p193
        $region38: #{surrogate_forward.1} parent=11 // pred_check_branch
          %317 = sbr.rel (%p315) target = $region40
        $region39: #{surrogate_forward.1} parent=11 // pred_region
          _
        $region40: #{surrogate_forward.1} parent=11 // pred_fallthru
          _
        // Predicated region
        $region41: #{surrogate_forward.1} parent=11 // pred_check
          %p318 = pneg %p214
        $region42: #{surrogate_forward.1} parent=11 // pred_check_branch
          %320 = sbr.rel (%p318) target = $region44
        $region43: #{surrogate_forward.1} parent=11 // pred_region
          _
        $region44: #{surrogate_forward.1} parent=11 // pred_fallthru
          _
        // Predicated region
        $region45: #{surrogate_forward.1} parent=11 // pred_check
          %p321 = pneg %p235
        $region46: #{surrogate_forward.1} parent=11 // pred_check_branch
          %323 = sbr.rel (%p321) target = $region48
        $region47: #{surrogate_forward.1} parent=11 // pred_region
          _
        $region48: #{surrogate_forward.1} parent=11 // pred_fallthru
          _
        // Predicated region
        $region49: #{surrogate_forward.1} parent=11 // pred_check
          %p324 = pneg %p256
        $region50: #{surrogate_forward.1} parent=11 // pred_check_branch
          %326 = sbr.rel (%p324) target = $region52
        $region51: #{surrogate_forward.1} parent=11 // pred_region
          _
        $region52: #{surrogate_forward.1} parent=11 // pred_fallthru
          _
      $region12: #{surrogate_forward.1} parent=5 // pred_fallthru
        _
      %p327 = scmp.lt.s32.totalorder %s20, 2
      // Predicated region
      $region53: #{surrogate_forward.1} parent=5 // pred_check
        %p328 = pneg %p327
      $region54: #{surrogate_forward.1} parent=5 // pred_check_branch
        %330 = sbr.rel (%p328) target = $region56
      $region55: #{surrogate_forward.1} parent=5 // pred_region
        // Predicated region
        $region57: #{surrogate_forward.1} parent=55 // pred_check
          %p331 = pneg %p40
        $region58: #{surrogate_forward.1} parent=55 // pred_check_branch
          %333 = sbr.rel (%p331) target = $region60
        $region59: #{surrogate_forward.1} parent=55 // pred_region
          %p334 = scmp.lt.s32.totalorder %s20, 1
          %s335 = scalar_select %p334, %s20, 1
          %s336 = smul.addr %s335, 28
          %s337 = smul.addr %s336, 8
          %s338 = scalar_lea.vmem %s0, %s337
        $region60: #{surrogate_forward.1} parent=55 // pred_fallthru
          _
      $region56: #{surrogate_forward.1} parent=5 // pred_fallthru
        _
      %p339 = scmp.le.s32.totalorder 1, %s20
      %p340 = scmp.lt.s32.totalorder %s20, 3
      %p341 = pnand %p339, %p340
      %p342 = pneg %p341
      // Predicated region
      $region61: #{surrogate_forward.1} parent=5 // pred_check
        _
      $region62: #{surrogate_forward.1} parent=5 // pred_check_branch
        %344 = sbr.rel (%p341) target = $region64
      $region63: #{surrogate_forward.1} parent=5 // pred_region
        %s345 = ssub.s32 %s20, 1
        %p346 = scmp.lt.s32.totalorder %s25, 1
        %s347 = scalar_select %p346, %s25, 1
        %s348 = smul.addr %s347, 28
        %s349 = smul.addr %s348, 8
        %s350 = scalar_lea.vmem %s0, %s349
        %p351 = pneg %p46
        %p352 = pneg %p43
        %p353 = pneg %p67
        %p354 = pneg %p64
        %p355 = pneg %p88
        %p356 = pneg %p85
        %p357 = pneg %p109
        %p358 = pneg %p106
        %p359 = pneg %p130
        %p360 = pneg %p127
        %p361 = pneg %p151
        %p362 = pneg %p148
        %p363 = pneg %p172
        %p364 = pneg %p169
        %p365 = pneg %p193
        %p366 = pneg %p190
        %p367 = pneg %p214
        %p368 = pneg %p211
        %p369 = pneg %p235
        %p370 = pneg %p232
        %p371 = pneg %p256
        %p372 = pneg %p253
        %p373 = pneg %p282
        %p374 = pneg %p279
        %s375 = sand.u32 %s269, 1
        %s376 = scalar_lea.sflag [#allocation3], %s375
        %s377 = sand.u32 %s269, 1
        %s378 = smul.addr %s377, 8
        %s379 = scalar_lea.vmem [#allocation2], %s378
        %p380 = scmp.lt.s32.totalorder %s25, 1
        %s381 = scalar_select %p380, %s25, 1
        %s382 = smul.addr %s381, 28
        %s383 = smul.addr %s382, 8
        %s384 = scalar_lea.vmem %s0, %s383
        %v385 = vld [vmem:[%s384] sm:$0xff]
        %v386 = vld [vmem:[%s384 + $0x8] sm:$0xff]
        %v387 = vld [vmem:[%s384 + $0x10] sm:$0xff]
        %v388 = vld [vmem:[%s384 + $0x18] sm:$0xff]
        %v389 = vld [vmem:[%s384 + $0x20] sm:$0xff]
        %v390 = vld [vmem:[%s384 + $0x28] sm:$0xff]
        %v391 = vld [vmem:[%s384 + $0x30] sm:$0xff]
        %v392 = vld [vmem:[%s384 + $0x38] sm:$0xff]
        %v393 = vld [vmem:[%s384 + $0x40] sm:$0xff]
        %v394 = vld [vmem:[%s384 + $0x48] sm:$0xff]
        %v395 = vld [vmem:[%s384 + $0x50] sm:$0xff]
        %v396 = vld [vmem:[%s384 + $0x58] sm:$0xff]
        %v397 = vld [vmem:[%s384 + $0x60] sm:$0xff]
        %v398 = vld [vmem:[%s384 + $0x68] sm:$0xff]
        %v399 = vld [vmem:[%s384 + $0x70] sm:$0xff]
        %v400 = vld [vmem:[%s384 + $0x78] sm:$0xff]
        %v401 = vld [vmem:[%s384 + $0x80] sm:$0xff]
        %v402 = vld [vmem:[%s384 + $0x88] sm:$0xff]
        %v403 = vld [vmem:[%s384 + $0x90] sm:$0xff]
        %v404 = vld [vmem:[%s384 + $0x98] sm:$0xff]
        %v405 = vld [vmem:[%s384 + $0xa0] sm:$0xff]
        %v406 = vld [vmem:[%s384 + $0xa8] sm:$0xff]
        %v407 = vld [vmem:[%s384 + $0xb0] sm:$0xff]
        %v408 = vld [vmem:[%s384 + $0xb8] sm:$0xff]
        %v409 = vld [vmem:[%s384 + $0xc0] sm:$0xff]
        %v410 = vld [vmem:[%s384 + $0xc8] sm:$0xff]
        %v411 = vld [vmem:[%s384 + $0xd0] sm:$0xff]
        %v412 = vld [vmem:[%s384 + $0xd8] sm:$0xff]
        %v413 = vld [vmem:[%s1] sm:$0xff]
        %v414 = vld [vmem:[%s1 + $0x8] sm:$0xff]
        %v415 = vld [vmem:[%s1 + $0x10] sm:$0xff]
        %v416 = vld [vmem:[%s1 + $0x18] sm:$0xff]
        %v417 = vld [vmem:[%s1 + $0x20] sm:$0xff]
        %v418 = vld [vmem:[%s1 + $0x28] sm:$0xff]
        %v419 = vld [vmem:[%s1 + $0x30] sm:$0xf]
        %v420 = vld [vmem:[%s1 + $0x38] sm:$0xf]
        %s421 = scalar_lea.vmem %s1, 64
        %v422 = vld [vmem:[%s421] sm:$0xff]
        %v423 = vld [vmem:[%s421 + $0x8] sm:$0xff]
        %v424 = vld [vmem:[%s421 + $0x10] sm:$0xff]
        %v425 = vld [vmem:[%s421 + $0x18] sm:$0xff]
        %v426 = vld [vmem:[%s421 + $0x20] sm:$0xff]
        %v427 = vld [vmem:[%s421 + $0x28] sm:$0xff]
        %v428 = vld [vmem:[%s421 + $0x30] sm:$0xf]
        %v429 = vld [vmem:[%s421 + $0x38] sm:$0xf]
        %vm430 = vcmask 228352
        %v432 = vsel %vm430, %v386, 0
        %v435 = vsel %vm430, %v387, 0
        %v438 = vsel %vm430, %v388, 0
        %v441 = vsel %vm430, %v389, 0
        %v444 = vsel %vm430, %v390, 0
        %v447 = vsel %vm430, %v391, 0
        %v450 = vsel %vm430, %v392, 0
        %v453 = vsel %vm430, %v393, 0
        %v456 = vsel %vm430, %v394, 0
        %v459 = vsel %vm430, %v395, 0
        %v462 = vsel %vm430, %v396, 0
        %v465 = vsel %vm430, %v397, 0
        %v468 = vsel %vm430, %v398, 0
        %v471 = vsel %vm430, %v399, 0
        %v474 = vsel %vm430, %v400, 0
        %v477 = vsel %vm430, %v401, 0
        %v480 = vsel %vm430, %v402, 0
        %v483 = vsel %vm430, %v403, 0
        %v486 = vsel %vm430, %v404, 0
        %v489 = vsel %vm430, %v405, 0
        %v492 = vsel %vm430, %v406, 0
        %v495 = vsel %vm430, %v407, 0
        %v498 = vsel %vm430, %v408, 0
        %v501 = vsel %vm430, %v409, 0
        %vm503 = vcmask 1043456
        %v505 = vsel %vm503, %v428, 0
        %v508 = vsel %vm503, %v429, 0
        %510 = vmatprep.subr.mxu0 %v423
        %511 = vmatpush1.msra.mxu0 %v422
        %512 = vmatprep.subr.mxu0 %v425
        %513 = vmatpush1.msra.mxu0 %v424
        %514 = vmatprep.subr.mxu0 %v427
        %515 = vmatpush1.msra.mxu0 %v426
        %516 = vmatprep.subr.mxu0 %v508
        %517 = vmatpush1.msra.mxu0 %v505
        %518 = vmatprep.subr.mxu0 0.0
        %519 = vmatpush1.msra.mxu0 0.0
        %520 = vmatprep.subr.mxu0 0.0
        %521 = vmatpush1.msra.mxu0 0.0
        %522 = vmatprep.subr.mxu0 0.0
        %523 = vmatpush1.msra.mxu0 0.0
        %524 = vmatprep.subr.mxu0 0.0
        %525 = vmatpush1.msra.mxu0 0.0
        %526 = vmatprep.subr.mxu0 0.0
        %527 = vmatpush1.msra.mxu0 0.0
        %528 = vmatprep.subr.mxu0 0.0
        %529 = vmatpush1.msra.mxu0 0.0
        %530 = vmatprep.subr.mxu0 0.0
        %531 = vmatpush1.msra.mxu0 0.0
        %532 = vmatprep.subr.mxu0 0.0
        %533 = vmatpush1.msra.mxu0 0.0
        %534 = vmatprep.subr.mxu0 0.0
        %535 = vmatpush1.msra.mxu0 0.0
        %536 = vmatprep.subr.mxu0 0.0
        %537 = vmatpush1.msra.mxu0 0.0
        %538 = vmatprep.subr.mxu0 0.0
        %539 = vmatpush1.msra.mxu0 0.0
        %540 = vmatprep.subr.mxu0 0.0
        %541 = vmatpush1.msra.mxu0 0.0
        %542 = vmatprep.subr.mxu0 0.0
        %543 = vmatpush1.msra.mxu0 0.0
        %544 = vmatprep.subr.mxu0 0.0
        %545 = vmatpush1.msra.mxu0 0.0
        %546 = vmatprep.subr.mxu0 0.0
        %547 = vmatpush1.msra.mxu0 0.0
        %548 = vmatprep.subr.mxu0 0.0
        %549 = vmatpush1.msra.mxu0 0.0
        %550 = vmatprep.subr.mxu0 0.0
        %551 = vmatpush1.msra.mxu0 0.0
        %552 = vmatprep.subr.mxu0 0.0
        %553 = vmatpush1.msra.mxu0 0.0
        %554 = vmatprep.subr.mxu0 0.0
        %555 = vmatpush1.msra.mxu0 0.0
        %556 = vmatprep.subr.mxu0 0.0
        %557 = vmatpush1.msra.mxu0 0.0
        %558 = vmatprep.subr.mxu0 0.0
        %559 = vmatpush1.msra.mxu0 0.0
        %560 = vmatprep.subr.mxu0 0.0
        %561 = vmatpush1.msra.mxu0 0.0
        %562 = vmatprep.subr.mxu0 0.0
        %563 = vmatpush1.msra.mxu0 0.0
        %564 = vmatprep.subr.mxu0 0.0
        %565 = vmatpush1.msra.mxu0 0.0
        %566 = vmatprep.subr.mxu0 0.0
        %567 = vmatpush1.msra.mxu0 0.0
        %568 = vmatprep.subr.mxu0 0.0
        %569 = vmatpush1.msra.mxu0 0.0
        %570 = vmatprep.subr.mxu0 0.0
        %571 = vmatpush1.msra.mxu0 0.0
        %572 = vmatprep.subr.mxu0 0.0
        %573 = vmatpush1.msra.mxu0 0.0
        %574 = vmatprep.mubr.f32.mxu0 0.0
        %575 = vmatmul.mubr.f32.gmra.mrb[0].mxu0 %v432
        %v576 = vpop.f32.mrb[0].mxu0
        %v577 = vadd.f32 0.0, %v576
        %v578 = vpop.f32.mrb[0].mxu0
        %v579 = vadd.f32 0.0, %v578
        %580 = vmatprep.mubr.f32.mxu0 0.0
        %581 = vmatmul.mubr.f32.gmra.mrb[0].mxu0 %v435
        %v582 = vpop.f32.mrb[0].mxu0
        %v583 = vadd.f32 0.0, %v582
        %v584 = vpop.f32.mrb[0].mxu0
        %v585 = vadd.f32 0.0, %v584
        %586 = vmatprep.mubr.f32.mxu0 0.0
        %587 = vmatmul.mubr.f32.gmra.mrb[0].mxu0 %v438
        %v588 = vpop.f32.mrb[0].mxu0
        %v589 = vadd.f32 0.0, %v588
        %v590 = vpop.f32.mrb[0].mxu0
        %v591 = vadd.f32 0.0, %v590
        %592 = vmatprep.mubr.f32.mxu0 0.0
        %593 = vmatmul.mubr.f32.gmra.mrb[0].mxu0 %v441
        %v594 = vpop.f32.mrb[0].mxu0
        %v595 = vadd.f32 0.0, %v594
        %v596 = vpop.f32.mrb[0].mxu0
        %v597 = vadd.f32 0.0, %v596
        %598 = vmatprep.mubr.f32.mxu0 0.0
        %599 = vmatmul.mubr.f32.gmra.mrb[0].mxu0 %v444
        %v600 = vpop.f32.mrb[0].mxu0
        %v601 = vadd.f32 0.0, %v600
        %v602 = vpop.f32.mrb[0].mxu0
        %v603 = vadd.f32 0.0, %v602
        %604 = vmatprep.mubr.f32.mxu0 0.0
        %605 = vmatmul.mubr.f32.gmra.mrb[0].mxu0 %v447
        %v606 = vpop.f32.mrb[0].mxu0
        %v607 = vadd.f32 0.0, %v606
        %v608 = vpop.f32.mrb[0].mxu0
        %v609 = vadd.f32 0.0, %v608
        %610 = vmatprep.mubr.f32.mxu0 0.0
        %611 = vmatmul.mubr.f32.gmra.mrb[0].mxu0 %v450
        %v612 = vpop.f32.mrb[0].mxu0
        %v613 = vadd.f32 0.0, %v612
        %v614 = vpop.f32.mrb[0].mxu0
        %v615 = vadd.f32 0.0, %v614
        %616 = vmatprep.mubr.f32.mxu0 0.0
        %617 = vmatmul.mubr.f32.gmra.mrb[0].mxu0 %v453
        %v618 = vpop.f32.mrb[0].mxu0
        %v619 = vadd.f32 0.0, %v618
        %v620 = vpop.f32.mrb[0].mxu0
        %v621 = vadd.f32 0.0, %v620
        %622 = vmatprep.mubr.f32.mxu0 0.0
        %623 = vmatmul.mubr.f32.gmra.mrb[0].mxu0 %v456
        %v624 = vpop.f32.mrb[0].mxu0
        %v625 = vadd.f32 0.0, %v624
        %v626 = vpop.f32.mrb[0].mxu0
        %v627 = vadd.f32 0.0, %v626
        %628 = vmatprep.mubr.f32.mxu0 0.0
        %629 = vmatmul.mubr.f32.gmra.mrb[0].mxu0 %v459
        %v630 = vpop.f32.mrb[0].mxu0
        %v631 = vadd.f32 0.0, %v630
        %v632 = vpop.f32.mrb[0].mxu0
        %v633 = vadd.f32 0.0, %v632
        %634 = vmatprep.mubr.f32.mxu0 0.0
        %635 = vmatmul.mubr.f32.gmra.mrb[0].mxu0 %v462
        %v636 = vpop.f32.mrb[0].mxu0
        %v637 = vadd.f32 0.0, %v636
        %v638 = vpop.f32.mrb[0].mxu0
        %v639 = vadd.f32 0.0, %v638
        %640 = vmatprep.mubr.f32.mxu0 0.0
        %641 = vmatmul.mubr.f32.gmra.mrb[0].mxu0 %v465
        %v642 = vpop.f32.mrb[0].mxu0
        %v643 = vadd.f32 0.0, %v642
        %v644 = vpop.f32.mrb[0].mxu0
        %v645 = vadd.f32 0.0, %v644
        %646 = vmatprep.mubr.f32.mxu0 0.0
        %647 = vmatmul.mubr.f32.gmra.mrb[0].mxu0 %v468
        %v648 = vpop.f32.mrb[0].mxu0
        %v649 = vadd.f32 0.0, %v648
        %v650 = vpop.f32.mrb[0].mxu0
        %v651 = vadd.f32 0.0, %v650
        %652 = vmatprep.mubr.f32.mxu0 0.0
        %653 = vmatmul.mubr.f32.gmra.mrb[0].mxu0 %v471
        %v654 = vpop.f32.mrb[0].mxu0
        %v655 = vadd.f32 0.0, %v654
        %v656 = vpop.f32.mrb[0].mxu0
        %v657 = vadd.f32 0.0, %v656
        %658 = vmatprep.mubr.f32.mxu0 0.0
        %659 = vmatmul.mubr.f32.gmra.mrb[0].mxu0 %v474
        %v660 = vpop.f32.mrb[0].mxu0
        %v661 = vadd.f32 0.0, %v660
        %v662 = vpop.f32.mrb[0].mxu0
        %v663 = vadd.f32 0.0, %v662
        %664 = vmatprep.mubr.f32.mxu0 0.0
        %665 = vmatmul.mubr.f32.gmra.mrb[0].mxu0 %v477
        %v666 = vpop.f32.mrb[0].mxu0
        %v667 = vadd.f32 0.0, %v666
        %v668 = vpop.f32.mrb[0].mxu0
        %v669 = vadd.f32 0.0, %v668
        %670 = vmatprep.mubr.f32.mxu0 0.0
        %671 = vmatmul.mubr.f32.gmra.mrb[0].mxu0 %v480
        %v672 = vpop.f32.mrb[0].mxu0
        %v673 = vadd.f32 0.0, %v672
        %v674 = vpop.f32.mrb[0].mxu0
        %v675 = vadd.f32 0.0, %v674
        %676 = vmatprep.mubr.f32.mxu0 0.0
        %677 = vmatmul.mubr.f32.gmra.mrb[0].mxu0 %v483
        %v678 = vpop.f32.mrb[0].mxu0
        %v679 = vadd.f32 0.0, %v678
        %v680 = vpop.f32.mrb[0].mxu0
        %v681 = vadd.f32 0.0, %v680
        %682 = vmatprep.mubr.f32.mxu0 0.0
        %683 = vmatmul.mubr.f32.gmra.mrb[0].mxu0 %v486
        %v684 = vpop.f32.mrb[0].mxu0
        %v685 = vadd.f32 0.0, %v684
        %v686 = vpop.f32.mrb[0].mxu0
        %v687 = vadd.f32 0.0, %v686
        %688 = vmatprep.mubr.f32.mxu0 0.0
        %689 = vmatmul.mubr.f32.gmra.mrb[0].mxu0 %v489
        %v690 = vpop.f32.mrb[0].mxu0
        %v691 = vadd.f32 0.0, %v690
        %v692 = vpop.f32.mrb[0].mxu0
        %v693 = vadd.f32 0.0, %v692
        %694 = vmatprep.mubr.f32.mxu0 0.0
        %695 = vmatmul.mubr.f32.gmra.mrb[0].mxu0 %v492
        %v696 = vpop.f32.mrb[0].mxu0
        %v697 = vadd.f32 0.0, %v696
        %v698 = vpop.f32.mrb[0].mxu0
        %v699 = vadd.f32 0.0, %v698
        %700 = vmatprep.mubr.f32.mxu0 0.0
        %701 = vmatmul.mubr.f32.gmra.mrb[0].mxu0 %v495
        %v702 = vpop.f32.mrb[0].mxu0
        %v703 = vadd.f32 0.0, %v702
        %v704 = vpop.f32.mrb[0].mxu0
        %v705 = vadd.f32 0.0, %v704
        %706 = vmatprep.mubr.f32.mxu0 0.0
        %707 = vmatmul.mubr.f32.gmra.mrb[0].mxu0 %v498
        %v708 = vpop.f32.mrb[0].mxu0
        %v709 = vadd.f32 0.0, %v708
        %v710 = vpop.f32.mrb[0].mxu0
        %v711 = vadd.f32 0.0, %v710
        %712 = vmatprep.mubr.f32.mxu0 0.0
        %713 = vmatmul.mubr.f32.gmra.mrb[0].mxu0 %v501
        %v714 = vpop.f32.mrb[0].mxu0
        %v715 = vadd.f32 0.0, %v714
        %v716 = vpop.f32.mrb[0].mxu0
        %v717 = vadd.f32 0.0, %v716
        %718 = vdwg.mxu0
        %v720 = vsel %vm430, %v385, 0
        %v723 = vsel %vm503, %v419, 0
        %v726 = vsel %vm503, %v420, 0
        %728 = vmatprep.subr.mxu0 %v414
        %729 = vmatpush1.msra.mxu0 %v413
        %730 = vmatprep.subr.mxu0 %v416
        %731 = vmatpush1.msra.mxu0 %v415
        %732 = vmatprep.subr.mxu0 %v418
        %733 = vmatpush1.msra.mxu0 %v417
        %734 = vmatprep.subr.mxu0 %v726
        %735 = vmatpush1.msra.mxu0 %v723
        %736 = vmatprep.subr.mxu0 0.0
        %737 = vmatpush1.msra.mxu0 0.0
        %738 = vmatprep.subr.mxu0 0.0
        %739 = vmatpush1.msra.mxu0 0.0
        %740 = vmatprep.subr.mxu0 0.0
        %741 = vmatpush1.msra.mxu0 0.0
        %742 = vmatprep.subr.mxu0 0.0
        %743 = vmatpush1.msra.mxu0 0.0
        %744 = vmatprep.subr.mxu0 0.0
        %745 = vmatpush1.msra.mxu0 0.0
        %746 = vmatprep.subr.mxu0 0.0
        %747 = vmatpush1.msra.mxu0 0.0
        %748 = vmatprep.subr.mxu0 0.0
        %749 = vmatpush1.msra.mxu0 0.0
        %750 = vmatprep.subr.mxu0 0.0
        %751 = vmatpush1.msra.mxu0 0.0
        %752 = vmatprep.subr.mxu0 0.0
        %753 = vmatpush1.msra.mxu0 0.0
        %754 = vmatprep.subr.mxu0 0.0
        %755 = vmatpush1.msra.mxu0 0.0
        %756 = vmatprep.subr.mxu0 0.0
        %757 = vmatpush1.msra.mxu0 0.0
        %758 = vmatprep.subr.mxu0 0.0
        %759 = vmatpush1.msra.mxu0 0.0
        %760 = vmatprep.subr.mxu0 0.0
        %761 = vmatpush1.msra.mxu0 0.0
        %762 = vmatprep.subr.mxu0 0.0
        %763 = vmatpush1.msra.mxu0 0.0
        %764 = vmatprep.subr.mxu0 0.0
        %765 = vmatpush1.msra.mxu0 0.0
        %766 = vmatprep.subr.mxu0 0.0
        %767 = vmatpush1.msra.mxu0 0.0
        %768 = vmatprep.subr.mxu0 0.0
        %769 = vmatpush1.msra.mxu0 0.0
        %770 = vmatprep.subr.mxu0 0.0
        %771 = vmatpush1.msra.mxu0 0.0
        %772 = vmatprep.subr.mxu0 0.0
        %773 = vmatpush1.msra.mxu0 0.0
        %774 = vmatprep.subr.mxu0 0.0
        %775 = vmatpush1.msra.mxu0 0.0
        %776 = vmatprep.subr.mxu0 0.0
        %777 = vmatpush1.msra.mxu0 0.0
        %778 = vmatprep.subr.mxu0 0.0
        %779 = vmatpush1.msra.mxu0 0.0
        %780 = vmatprep.subr.mxu0 0.0
        %781 = vmatpush1.msra.mxu0 0.0
        %782 = vmatprep.subr.mxu0 0.0
        %783 = vmatpush1.msra.mxu0 0.0
        %784 = vmatprep.subr.mxu0 0.0
        %785 = vmatpush1.msra.mxu0 0.0
        %786 = vmatprep.subr.mxu0 0.0
        %787 = vmatpush1.msra.mxu0 0.0
        %788 = vmatprep.subr.mxu0 0.0
        %789 = vmatpush1.msra.mxu0 0.0
        %790 = vmatprep.subr.mxu0 0.0
        %791 = vmatpush1.msra.mxu0 0.0
        %792 = vmatprep.mubr.f32.mxu0 0.0
        %793 = vmatmul.mubr.f32.gmra.mrb[0].mxu0 %v720
        %v794 = vpop.f32.mrb[0].mxu0
        %v795 = vadd.f32 %v577, %v794
        %v796 = vpop.f32.mrb[0].mxu0
        %v797 = vadd.f32 %v579, %v796
        %798 = vmatprep.mubr.f32.mxu0 0.0
        %799 = vmatmul.mubr.f32.gmra.mrb[0].mxu0 %v432
        %v800 = vpop.f32.mrb[0].mxu0
        %v801 = vadd.f32 %v583, %v800
        %v802 = vpop.f32.mrb[0].mxu0
        %v803 = vadd.f32 %v585, %v802
        %804 = vmatprep.mubr.f32.mxu0 0.0
        %805 = vmatmul.mubr.f32.gmra.mrb[0].mxu0 %v435
        %v806 = vpop.f32.mrb[0].mxu0
        %v807 = vadd.f32 %v589, %v806
        %v808 = vpop.f32.mrb[0].mxu0
        %v809 = vadd.f32 %v591, %v808
        %810 = vmatprep.mubr.f32.mxu0 0.0
        %811 = vmatmul.mubr.f32.gmra.mrb[0].mxu0 %v438
        %v812 = vpop.f32.mrb[0].mxu0
        %v813 = vadd.f32 %v595, %v812
        %v814 = vpop.f32.mrb[0].mxu0
        %v815 = vadd.f32 %v597, %v814
        %816 = vmatprep.mubr.f32.mxu0 0.0
        %817 = vmatmul.mubr.f32.gmra.mrb[0].mxu0 %v441
        %v818 = vpop.f32.mrb[0].mxu0
        %v819 = vadd.f32 %v601, %v818
        %v820 = vpop.f32.mrb[0].mxu0
        %v821 = vadd.f32 %v603, %v820
        %822 = vmatprep.mubr.f32.mxu0 0.0
        %823 = vmatmul.mubr.f32.gmra.mrb[0].mxu0 %v444
        %v824 = vpop.f32.mrb[0].mxu0
        %v825 = vadd.f32 %v607, %v824
        %v826 = vpop.f32.mrb[0].mxu0
        %v827 = vadd.f32 %v609, %v826
        %828 = vmatprep.mubr.f32.mxu0 0.0
        %829 = vmatmul.mubr.f32.gmra.mrb[0].mxu0 %v447
        %v830 = vpop.f32.mrb[0].mxu0
        %v831 = vadd.f32 %v613, %v830
        %v832 = vpop.f32.mrb[0].mxu0
        %v833 = vadd.f32 %v615, %v832
        %834 = vmatprep.mubr.f32.mxu0 0.0
        %835 = vmatmul.mubr.f32.gmra.mrb[0].mxu0 %v450
        %v836 = vpop.f32.mrb[0].mxu0
        %v837 = vadd.f32 %v619, %v836
        %v838 = vpop.f32.mrb[0].mxu0
        %v839 = vadd.f32 %v621, %v838
        %840 = vmatprep.mubr.f32.mxu0 0.0
        %841 = vmatmul.mubr.f32.gmra.mrb[0].mxu0 %v453
        %v842 = vpop.f32.mrb[0].mxu0
        %v843 = vadd.f32 %v625, %v842
        %v844 = vpop.f32.mrb[0].mxu0
        %v845 = vadd.f32 %v627, %v844
        %846 = vmatprep.mubr.f32.mxu0 0.0
        %847 = vmatmul.mubr.f32.gmra.mrb[0].mxu0 %v456
        %v848 = vpop.f32.mrb[0].mxu0
        %v849 = vadd.f32 %v631, %v848
        %v850 = vpop.f32.mrb[0].mxu0
        %v851 = vadd.f32 %v633, %v850
        %852 = vmatprep.mubr.f32.mxu0 0.0
        %853 = vmatmul.mubr.f32.gmra.mrb[0].mxu0 %v459
        %v854 = vpop.f32.mrb[0].mxu0
        %v855 = vadd.f32 %v637, %v854
        %v856 = vpop.f32.mrb[0].mxu0
        %v857 = vadd.f32 %v639, %v856
        %858 = vmatprep.mubr.f32.mxu0 0.0
        %859 = vmatmul.mubr.f32.gmra.mrb[0].mxu0 %v462
        %v860 = vpop.f32.mrb[0].mxu0
        %v861 = vadd.f32 %v643, %v860
        %v862 = vpop.f32.mrb[0].mxu0
        %v863 = vadd.f32 %v645, %v862
        %864 = vmatprep.mubr.f32.mxu0 0.0
        %865 = vmatmul.mubr.f32.gmra.mrb[0].mxu0 %v465
        %v866 = vpop.f32.mrb[0].mxu0
        %v867 = vadd.f32 %v649, %v866
        %v868 = vpop.f32.mrb[0].mxu0
        %v869 = vadd.f32 %v651, %v868
        %870 = vmatprep.mubr.f32.mxu0 0.0
        %871 = vmatmul.mubr.f32.gmra.mrb[0].mxu0 %v468
        %v872 = vpop.f32.mrb[0].mxu0
        %v873 = vadd.f32 %v655, %v872
        %v874 = vpop.f32.mrb[0].mxu0
        %v875 = vadd.f32 %v657, %v874
        %876 = vmatprep.mubr.f32.mxu0 0.0
        %877 = vmatmul.mubr.f32.gmra.mrb[0].mxu0 %v471
        %v878 = vpop.f32.mrb[0].mxu0
        %v879 = vadd.f32 %v661, %v878
        %v880 = vpop.f32.mrb[0].mxu0
        %v881 = vadd.f32 %v663, %v880
        %882 = vmatprep.mubr.f32.mxu0 0.0
        %883 = vmatmul.mubr.f32.gmra.mrb[0].mxu0 %v474
        %v884 = vpop.f32.mrb[0].mxu0
        %v885 = vadd.f32 %v667, %v884
        %v886 = vpop.f32.mrb[0].mxu0
        %v887 = vadd.f32 %v669, %v886
        %888 = vmatprep.mubr.f32.mxu0 0.0
        %889 = vmatmul.mubr.f32.gmra.mrb[0].mxu0 %v477
        %v890 = vpop.f32.mrb[0].mxu0
        %v891 = vadd.f32 %v673, %v890
        %v892 = vpop.f32.mrb[0].mxu0
        %v893 = vadd.f32 %v675, %v892
        %894 = vmatprep.mubr.f32.mxu0 0.0
        %895 = vmatmul.mubr.f32.gmra.mrb[0].mxu0 %v480
        %v896 = vpop.f32.mrb[0].mxu0
        %v897 = vadd.f32 %v679, %v896
        %v898 = vpop.f32.mrb[0].mxu0
        %v899 = vadd.f32 %v681, %v898
        %900 = vmatprep.mubr.f32.mxu0 0.0
        %901 = vmatmul.mubr.f32.gmra.mrb[0].mxu0 %v483
        %v902 = vpop.f32.mrb[0].mxu0
        %v903 = vadd.f32 %v685, %v902
        %v904 = vpop.f32.mrb[0].mxu0
        %v905 = vadd.f32 %v687, %v904
        %906 = vmatprep.mubr.f32.mxu0 0.0
        %907 = vmatmul.mubr.f32.gmra.mrb[0].mxu0 %v486
        %v908 = vpop.f32.mrb[0].mxu0
        %v909 = vadd.f32 %v691, %v908
        %v910 = vpop.f32.mrb[0].mxu0
        %v911 = vadd.f32 %v693, %v910
        %912 = vmatprep.mubr.f32.mxu0 0.0
        %913 = vmatmul.mubr.f32.gmra.mrb[0].mxu0 %v489
        %v914 = vpop.f32.mrb[0].mxu0
        %v915 = vadd.f32 %v697, %v914
        %v916 = vpop.f32.mrb[0].mxu0
        %v917 = vadd.f32 %v699, %v916
        %918 = vmatprep.mubr.f32.mxu0 0.0
        %919 = vmatmul.mubr.f32.gmra.mrb[0].mxu0 %v492
        %v920 = vpop.f32.mrb[0].mxu0
        %v921 = vadd.f32 %v703, %v920
        %v922 = vpop.f32.mrb[0].mxu0
        %v923 = vadd.f32 %v705, %v922
        %924 = vmatprep.mubr.f32.mxu0 0.0
        %925 = vmatmul.mubr.f32.gmra.mrb[0].mxu0 %v495
        %v926 = vpop.f32.mrb[0].mxu0
        %v927 = vadd.f32 %v709, %v926
        %v928 = vpop.f32.mrb[0].mxu0
        %v929 = vadd.f32 %v711, %v928
        %930 = vmatprep.mubr.f32.mxu0 0.0
        %931 = vmatmul.mubr.f32.gmra.mrb[0].mxu0 %v498
        %v932 = vpop.f32.mrb[0].mxu0
        %v933 = vadd.f32 %v715, %v932
        %v934 = vpop.f32.mrb[0].mxu0
        %v935 = vadd.f32 %v717, %v934
        %936 = vdwg.mxu0
        %s937 = scalar_lea.vmem %s1, 128
        %v938 = vld [vmem:[%s937] sm:$0xff]
        %v939 = vld [vmem:[%s937 + $0x8] sm:$0xff]
        %v940 = vld [vmem:[%s937 + $0x10] sm:$0xff]
        %v941 = vld [vmem:[%s937 + $0x18] sm:$0xff]
        %v942 = vld [vmem:[%s937 + $0x20] sm:$0xff]
        %v943 = vld [vmem:[%s937 + $0x28] sm:$0xff]
        %v944 = vld [vmem:[%s937 + $0x30] sm:$0xf]
        %v945 = vld [vmem:[%s937 + $0x38] sm:$0xf]
        %v947 = vsel %vm430, %v410, 0
        %v950 = vsel %vm503, %v944, 0
        %v953 = vsel %vm503, %v945, 0
        %955 = vmatprep.subr.mxu0 %v939
        %956 = vmatpush1.msra.mxu0 %v938
        %957 = vmatprep.subr.mxu0 %v941
        %958 = vmatpush1.msra.mxu0 %v940
        %959 = vmatprep.subr.mxu0 %v943
        %960 = vmatpush1.msra.mxu0 %v942
        %961 = vmatprep.subr.mxu0 %v953
        %962 = vmatpush1.msra.mxu0 %v950
        %963 = vmatprep.subr.mxu0 0.0
        %964 = vmatpush1.msra.mxu0 0.0
        %965 = vmatprep.subr.mxu0 0.0
        %966 = vmatpush1.msra.mxu0 0.0
        %967 = vmatprep.subr.mxu0 0.0
        %968 = vmatpush1.msra.mxu0 0.0
        %969 = vmatprep.subr.mxu0 0.0
        %970 = vmatpush1.msra.mxu0 0.0
        %971 = vmatprep.subr.mxu0 0.0
        %972 = vmatpush1.msra.mxu0 0.0
        %973 = vmatprep.subr.mxu0 0.0
        %974 = vmatpush1.msra.mxu0 0.0
        %975 = vmatprep.subr.mxu0 0.0
        %976 = vmatpush1.msra.mxu0 0.0
        %977 = vmatprep.subr.mxu0 0.0
        %978 = vmatpush1.msra.mxu0 0.0
        %979 = vmatprep.subr.mxu0 0.0
        %980 = vmatpush1.msra.mxu0 0.0
        %981 = vmatprep.subr.mxu0 0.0
        %982 = vmatpush1.msra.mxu0 0.0
        %983 = vmatprep.subr.mxu0 0.0
        %984 = vmatpush1.msra.mxu0 0.0
        %985 = vmatprep.subr.mxu0 0.0
        %986 = vmatpush1.msra.mxu0 0.0
        %987 = vmatprep.subr.mxu0 0.0
        %988 = vmatpush1.msra.mxu0 0.0
        %989 = vmatprep.subr.mxu0 0.0
        %990 = vmatpush1.msra.mxu0 0.0
        %991 = vmatprep.subr.mxu0 0.0
        %992 = vmatpush1.msra.mxu0 0.0
        %993 = vmatprep.subr.mxu0 0.0
        %994 = vmatpush1.msra.mxu0 0.0
        %995 = vmatprep.subr.mxu0 0.0
        %996 = vmatpush1.msra.mxu0 0.0
        %997 = vmatprep.subr.mxu0 0.0
        %998 = vmatpush1.msra.mxu0 0.0
        %999 = vmatprep.subr.mxu0 0.0
        %1000 = vmatpush1.msra.mxu0 0.0
        %1001 = vmatprep.subr.mxu0 0.0
        %1002 = vmatpush1.msra.mxu0 0.0
        %1003 = vmatprep.subr.mxu0 0.0
        %1004 = vmatpush1.msra.mxu0 0.0
        %1005 = vmatprep.subr.mxu0 0.0
        %1006 = vmatpush1.msra.mxu0 0.0
        %1007 = vmatprep.subr.mxu0 0.0
        %1008 = vmatpush1.msra.mxu0 0.0
        %1009 = vmatprep.subr.mxu0 0.0
        %1010 = vmatpush1.msra.mxu0 0.0
        %1011 = vmatprep.subr.mxu0 0.0
        %1012 = vmatpush1.msra.mxu0 0.0
        %1013 = vmatprep.subr.mxu0 0.0
        %1014 = vmatpush1.msra.mxu0 0.0
        %1015 = vmatprep.subr.mxu0 0.0
        %1016 = vmatpush1.msra.mxu0 0.0
        %1017 = vmatprep.subr.mxu0 0.0
        %1018 = vmatpush1.msra.mxu0 0.0
        %1019 = vmatprep.mubr.f32.mxu0 0.0
        %1020 = vmatmul.mubr.f32.gmra.mrb[0].mxu0 %v435
        %v1021 = vpop.f32.mrb[0].mxu0
        %v1022 = vadd.f32 0.0, %v1021
        %v1023 = vpop.f32.mrb[0].mxu0
        %v1024 = vadd.f32 0.0, %v1023
        %1025 = vmatprep.mubr.f32.mxu0 0.0
        %1026 = vmatmul.mubr.f32.gmra.mrb[0].mxu0 %v438
        %v1027 = vpop.f32.mrb[0].mxu0
        %v1028 = vadd.f32 0.0, %v1027
        %v1029 = vpop.f32.mrb[0].mxu0
        %v1030 = vadd.f32 0.0, %v1029
        %1031 = vmatprep.mubr.f32.mxu0 0.0
        %1032 = vmatmul.mubr.f32.gmra.mrb[0].mxu0 %v441
        %v1033 = vpop.f32.mrb[0].mxu0
        %v1034 = vadd.f32 0.0, %v1033
        %v1035 = vpop.f32.mrb[0].mxu0
        %v1036 = vadd.f32 0.0, %v1035
        %1037 = vmatprep.mubr.f32.mxu0 0.0
        %1038 = vmatmul.mubr.f32.gmra.mrb[0].mxu0 %v444
        %v1039 = vpop.f32.mrb[0].mxu0
        %v1040 = vadd.f32 0.0, %v1039
        %v1041 = vpop.f32.mrb[0].mxu0
        %v1042 = vadd.f32 0.0, %v1041
        %1043 = vmatprep.mubr.f32.mxu0 0.0
        %1044 = vmatmul.mubr.f32.gmra.mrb[0].mxu0 %v447
        %v1045 = vpop.f32.mrb[0].mxu0
        %v1046 = vadd.f32 0.0, %v1045
        %v1047 = vpop.f32.mrb[0].mxu0
        %v1048 = vadd.f32 0.0, %v1047
        %1049 = vmatprep.mubr.f32.mxu0 0.0
        %1050 = vmatmul.mubr.f32.gmra.mrb[0].mxu0 %v450
        %v1051 = vpop.f32.mrb[0].mxu0
        %v1052 = vadd.f32 0.0, %v1051
        %v1053 = vpop.f32.mrb[0].mxu0
        %v1054 = vadd.f32 0.0, %v1053
        %1055 = vmatprep.mubr.f32.mxu0 0.0
        %1056 = vmatmul.mubr.f32.gmra.mrb[0].mxu0 %v453
        %v1057 = vpop.f32.mrb[0].mxu0
        %v1058 = vadd.f32 0.0, %v1057
        %v1059 = vpop.f32.mrb[0].mxu0
        %v1060 = vadd.f32 0.0, %v1059
        %1061 = vmatprep.mubr.f32.mxu0 0.0
        %1062 = vmatmul.mubr.f32.gmra.mrb[0].mxu0 %v456
        %v1063 = vpop.f32.mrb[0].mxu0
        %v1064 = vadd.f32 0.0, %v1063
        %v1065 = vpop.f32.mrb[0].mxu0
        %v1066 = vadd.f32 0.0, %v1065
        %1067 = vmatprep.mubr.f32.mxu0 0.0
        %1068 = vmatmul.mubr.f32.gmra.mrb[0].mxu0 %v459
        %v1069 = vpop.f32.mrb[0].mxu0
        %v1070 = vadd.f32 0.0, %v1069
        %v1071 = vpop.f32.mrb[0].mxu0
        %v1072 = vadd.f32 0.0, %v1071
        %1073 = vmatprep.mubr.f32.mxu0 0.0
        %1074 = vmatmul.mubr.f32.gmra.mrb[0].mxu0 %v462
        %v1075 = vpop.f32.mrb[0].mxu0
        %v1076 = vadd.f32 0.0, %v1075
        %v1077 = vpop.f32.mrb[0].mxu0
        %v1078 = vadd.f32 0.0, %v1077
        %1079 = vmatprep.mubr.f32.mxu0 0.0
        %1080 = vmatmul.mubr.f32.gmra.mrb[0].mxu0 %v465
        %v1081 = vpop.f32.mrb[0].mxu0
        %v1082 = vadd.f32 0.0, %v1081
        %v1083 = vpop.f32.mrb[0].mxu0
        %v1084 = vadd.f32 0.0, %v1083
        %1085 = vmatprep.mubr.f32.mxu0 0.0
        %1086 = vmatmul.mubr.f32.gmra.mrb[0].mxu0 %v468
        %v1087 = vpop.f32.mrb[0].mxu0
        %v1088 = vadd.f32 0.0, %v1087
        %v1089 = vpop.f32.mrb[0].mxu0
        %v1090 = vadd.f32 0.0, %v1089
        %1091 = vmatprep.mubr.f32.mxu0 0.0
        %1092 = vmatmul.mubr.f32.gmra.mrb[0].mxu0 %v471
        %v1093 = vpop.f32.mrb[0].mxu0
        %v1094 = vadd.f32 0.0, %v1093
        %v1095 = vpop.f32.mrb[0].mxu0
        %v1096 = vadd.f32 0.0, %v1095
        %1097 = vmatprep.mubr.f32.mxu0 0.0
        %1098 = vmatmul.mubr.f32.gmra.mrb[0].mxu0 %v474
        %v1099 = vpop.f32.mrb[0].mxu0
        %v1100 = vadd.f32 0.0, %v1099
        %v1101 = vpop.f32.mrb[0].mxu0
        %v1102 = vadd.f32 0.0, %v1101
        %1103 = vmatprep.mubr.f32.mxu0 0.0
        %1104 = vmatmul.mubr.f32.gmra.mrb[0].mxu0 %v477
        %v1105 = vpop.f32.mrb[0].mxu0
        %v1106 = vadd.f32 0.0, %v1105
        %v1107 = vpop.f32.mrb[0].mxu0
        %v1108 = vadd.f32 0.0, %v1107
        %1109 = vmatprep.mubr.f32.mxu0 0.0
        %1110 = vmatmul.mubr.f32.gmra.mrb[0].mxu0 %v480
        %v1111 = vpop.f32.mrb[0].mxu0
        %v1112 = vadd.f32 0.0, %v1111
        %v1113 = vpop.f32.mrb[0].mxu0
        %v1114 = vadd.f32 0.0, %v1113
        %1115 = vmatprep.mubr.f32.mxu0 0.0
        %1116 = vmatmul.mubr.f32.gmra.mrb[0].mxu0 %v483
        %v1117 = vpop.f32.mrb[0].mxu0
        %v1118 = vadd.f32 0.0, %v1117
        %v1119 = vpop.f32.mrb[0].mxu0
        %v1120 = vadd.f32 0.0, %v1119
        %1121 = vmatprep.mubr.f32.mxu0 0.0
        %1122 = vmatmul.mubr.f32.gmra.mrb[0].mxu0 %v486
        %v1123 = vpop.f32.mrb[0].mxu0
        %v1124 = vadd.f32 0.0, %v1123
        %v1125 = vpop.f32.mrb[0].mxu0
        %v1126 = vadd.f32 0.0, %v1125
        %1127 = vmatprep.mubr.f32.mxu0 0.0
        %1128 = vmatmul.mubr.f32.gmra.mrb[0].mxu0 %v489
        %v1129 = vpop.f32.mrb[0].mxu0
        %v1130 = vadd.f32 0.0, %v1129
        %v1131 = vpop.f32.mrb[0].mxu0
        %v1132 = vadd.f32 0.0, %v1131
        %1133 = vmatprep.mubr.f32.mxu0 0.0
        %1134 = vmatmul.mubr.f32.gmra.mrb[0].mxu0 %v492
        %v1135 = vpop.f32.mrb[0].mxu0
        %v1136 = vadd.f32 0.0, %v1135
        %v1137 = vpop.f32.mrb[0].mxu0
        %v1138 = vadd.f32 0.0, %v1137
        %1139 = vmatprep.mubr.f32.mxu0 0.0
        %1140 = vmatmul.mubr.f32.gmra.mrb[0].mxu0 %v495
        %v1141 = vpop.f32.mrb[0].mxu0
        %v1142 = vadd.f32 0.0, %v1141
        %v1143 = vpop.f32.mrb[0].mxu0
        %v1144 = vadd.f32 0.0, %v1143
        %1145 = vmatprep.mubr.f32.mxu0 0.0
        %1146 = vmatmul.mubr.f32.gmra.mrb[0].mxu0 %v498
        %v1147 = vpop.f32.mrb[0].mxu0
        %v1148 = vadd.f32 0.0, %v1147
        %v1149 = vpop.f32.mrb[0].mxu0
        %v1150 = vadd.f32 0.0, %v1149
        %1151 = vmatprep.mubr.f32.mxu0 0.0
        %1152 = vmatmul.mubr.f32.gmra.mrb[0].mxu0 %v501
        %v1153 = vpop.f32.mrb[0].mxu0
        %v1154 = vadd.f32 0.0, %v1153
        %v1155 = vpop.f32.mrb[0].mxu0
        %v1156 = vadd.f32 0.0, %v1155
        %1157 = vmatprep.mubr.f32.mxu0 0.0
        %1158 = vmatmul.mubr.f32.gmra.mrb[0].mxu0 %v947
        %v1159 = vpop.f32.mrb[0].mxu0
        %v1160 = vadd.f32 0.0, %v1159
        %v1161 = vpop.f32.mrb[0].mxu0
        %v1162 = vadd.f32 0.0, %v1161
        %1163 = vdwg.mxu0
        %v1164 = vadd.f32 %v795, %v1022
        %v1165 = vadd.f32 %v797, %v1024
        %v1166 = vadd.f32 %v801, %v1028
        %v1167 = vadd.f32 %v803, %v1030
        %v1168 = vadd.f32 %v807, %v1034
        %v1169 = vadd.f32 %v809, %v1036
        %v1170 = vadd.f32 %v813, %v1040
        %v1171 = vadd.f32 %v815, %v1042
        %v1172 = vadd.f32 %v819, %v1046
        %v1173 = vadd.f32 %v821, %v1048
        %v1174 = vadd.f32 %v825, %v1052
        %v1175 = vadd.f32 %v827, %v1054
        %v1176 = vadd.f32 %v831, %v1058
        %v1177 = vadd.f32 %v833, %v1060
        %v1178 = vadd.f32 %v837, %v1064
        %v1179 = vadd.f32 %v839, %v1066
        %v1180 = vadd.f32 %v843, %v1070
        %v1181 = vadd.f32 %v845, %v1072
        %v1182 = vadd.f32 %v849, %v1076
        %v1183 = vadd.f32 %v851, %v1078
        %v1184 = vadd.f32 %v855, %v1082
        %v1185 = vadd.f32 %v857, %v1084
        %v1186 = vadd.f32 %v861, %v1088
        %v1187 = vadd.f32 %v863, %v1090
        %v1188 = vadd.f32 %v867, %v1094
        %v1189 = vadd.f32 %v869, %v1096
        %v1190 = vadd.f32 %v873, %v1100
        %v1191 = vadd.f32 %v875, %v1102
        %v1192 = vadd.f32 %v879, %v1106
        %v1193 = vadd.f32 %v881, %v1108
        %v1194 = vadd.f32 %v885, %v1112
        %v1195 = vadd.f32 %v887, %v1114
        %v1196 = vadd.f32 %v891, %v1118
        %v1197 = vadd.f32 %v893, %v1120
        %v1198 = vadd.f32 %v897, %v1124
        %v1199 = vadd.f32 %v899, %v1126
        %v1200 = vadd.f32 %v903, %v1130
        %v1201 = vadd.f32 %v905, %v1132
        %v1202 = vadd.f32 %v909, %v1136
        %v1203 = vadd.f32 %v911, %v1138
        %v1204 = vadd.f32 %v915, %v1142
        %v1205 = vadd.f32 %v917, %v1144
        %v1206 = vadd.f32 %v921, %v1148
        %v1207 = vadd.f32 %v923, %v1150
        %v1208 = vadd.f32 %v927, %v1154
        %v1209 = vadd.f32 %v929, %v1156
        %v1210 = vadd.f32 %v933, %v1160
        %v1211 = vadd.f32 %v935, %v1162
        %s1212 = scalar_lea.vmem %s1, 192
        %v1213 = vld [vmem:[%s1212] sm:$0xff]
        %v1214 = vld [vmem:[%s1212 + $0x8] sm:$0xff]
        %v1215 = vld [vmem:[%s1212 + $0x10] sm:$0xff]
        %v1216 = vld [vmem:[%s1212 + $0x18] sm:$0xff]
        %v1217 = vld [vmem:[%s1212 + $0x20] sm:$0xff]
        %v1218 = vld [vmem:[%s1212 + $0x28] sm:$0xff]
        %v1219 = vld [vmem:[%s1212 + $0x30] sm:$0xf]
        %v1220 = vld [vmem:[%s1212 + $0x38] sm:$0xf]
        %v1222 = vsel %vm430, %v411, 0
        %v1225 = vsel %vm503, %v1219, 0
        %v1228 = vsel %vm503, %v1220, 0
        %1230 = vmatprep.subr.mxu0 %v1214
        %1231 = vmatpush1.msra.mxu0 %v1213
        %1232 = vmatprep.subr.mxu0 %v1216
        %1233 = vmatpush1.msra.mxu0 %v1215
        %1234 = vmatprep.subr.mxu0 %v1218
        %1235 = vmatpush1.msra.mxu0 %v1217
        %1236 = vmatprep.subr.mxu0 %v1228
        %1237 = vmatpush1.msra.mxu0 %v1225
        %1238 = vmatprep.subr.mxu0 0.0
        %1239 = vmatpush1.msra.mxu0 0.0
        %1240 = vmatprep.subr.mxu0 0.0
        %1241 = vmatpush1.msra.mxu0 0.0
        %1242 = vmatprep.subr.mxu0 0.0
        %1243 = vmatpush1.msra.mxu0 0.0
        %1244 = vmatprep.subr.mxu0 0.0
        %1245 = vmatpush1.msra.mxu0 0.0
        %1246 = vmatprep.subr.mxu0 0.0
        %1247 = vmatpush1.msra.mxu0 0.0
        %1248 = vmatprep.subr.mxu0 0.0
        %1249 = vmatpush1.msra.mxu0 0.0
        %1250 = vmatprep.subr.mxu0 0.0
        %1251 = vmatpush1.msra.mxu0 0.0
        %1252 = vmatprep.subr.mxu0 0.0
        %1253 = vmatpush1.msra.mxu0 0.0
        %1254 = vmatprep.subr.mxu0 0.0
        %1255 = vmatpush1.msra.mxu0 0.0
        %1256 = vmatprep.subr.mxu0 0.0
        %1257 = vmatpush1.msra.mxu0 0.0
        %1258 = vmatprep.subr.mxu0 0.0
        %1259 = vmatpush1.msra.mxu0 0.0
        %1260 = vmatprep.subr.mxu0 0.0
        %1261 = vmatpush1.msra.mxu0 0.0
        %1262 = vmatprep.subr.mxu0 0.0
        %1263 = vmatpush1.msra.mxu0 0.0
        %1264 = vmatprep.subr.mxu0 0.0
        %1265 = vmatpush1.msra.mxu0 0.0
        %1266 = vmatprep.subr.mxu0 0.0
        %1267 = vmatpush1.msra.mxu0 0.0
        %1268 = vmatprep.subr.mxu0 0.0
        %1269 = vmatpush1.msra.mxu0 0.0
        %1270 = vmatprep.subr.mxu0 0.0
        %1271 = vmatpush1.msra.mxu0 0.0
        %1272 = vmatprep.subr.mxu0 0.0
        %1273 = vmatpush1.msra.mxu0 0.0
        %1274 = vmatprep.subr.mxu0 0.0
        %1275 = vmatpush1.msra.mxu0 0.0
        %1276 = vmatprep.subr.mxu0 0.0
        %1277 = vmatpush1.msra.mxu0 0.0
        %1278 = vmatprep.subr.mxu0 0.0
        %1279 = vmatpush1.msra.mxu0 0.0
        %1280 = vmatprep.subr.mxu0 0.0
        %1281 = vmatpush1.msra.mxu0 0.0
        %1282 = vmatprep.subr.mxu0 0.0
        %1283 = vmatpush1.msra.mxu0 0.0
        %1284 = vmatprep.subr.mxu0 0.0
        %1285 = vmatpush1.msra.mxu0 0.0
        %1286 = vmatprep.subr.mxu0 0.0
        %1287 = vmatpush1.msra.mxu0 0.0
        %1288 = vmatprep.subr.mxu0 0.0
        %1289 = vmatpush1.msra.mxu0 0.0
        %1290 = vmatprep.subr.mxu0 0.0
        %1291 = vmatpush1.msra.mxu0 0.0
        %1292 = vmatprep.subr.mxu0 0.0
        %1293 = vmatpush1.msra.mxu0 0.0
        %1294 = vmatprep.mubr.f32.mxu0 0.0
        %1295 = vmatmul.mubr.f32.gmra.mrb[0].mxu0 %v438
        %v1296 = vpop.f32.mrb[0].mxu0
        %v1297 = vadd.f32 0.0, %v1296
        %v1298 = vpop.f32.mrb[0].mxu0
        %v1299 = vadd.f32 0.0, %v1298
        %1300 = vmatprep.mubr.f32.mxu0 0.0
        %1301 = vmatmul.mubr.f32.gmra.mrb[0].mxu0 %v441
        %v1302 = vpop.f32.mrb[0].mxu0
        %v1303 = vadd.f32 0.0, %v1302
        %v1304 = vpop.f32.mrb[0].mxu0
        %v1305 = vadd.f32 0.0, %v1304
        %1306 = vmatprep.mubr.f32.mxu0 0.0
        %1307 = vmatmul.mubr.f32.gmra.mrb[0].mxu0 %v444
        %v1308 = vpop.f32.mrb[0].mxu0
        %v1309 = vadd.f32 0.0, %v1308
        %v1310 = vpop.f32.mrb[0].mxu0
        %v1311 = vadd.f32 0.0, %v1310
        %1312 = vmatprep.mubr.f32.mxu0 0.0
        %1313 = vmatmul.mubr.f32.gmra.mrb[0].mxu0 %v447
        %v1314 = vpop.f32.mrb[0].mxu0
        %v1315 = vadd.f32 0.0, %v1314
        %v1316 = vpop.f32.mrb[0].mxu0
        %v1317 = vadd.f32 0.0, %v1316
        %1318 = vmatprep.mubr.f32.mxu0 0.0
        %1319 = vmatmul.mubr.f32.gmra.mrb[0].mxu0 %v450
        %v1320 = vpop.f32.mrb[0].mxu0
        %v1321 = vadd.f32 0.0, %v1320
        %v1322 = vpop.f32.mrb[0].mxu0
        %v1323 = vadd.f32 0.0, %v1322
        %1324 = vmatprep.mubr.f32.mxu0 0.0
        %1325 = vmatmul.mubr.f32.gmra.mrb[0].mxu0 %v453
        %v1326 = vpop.f32.mrb[0].mxu0
        %v1327 = vadd.f32 0.0, %v1326
        %v1328 = vpop.f32.mrb[0].mxu0
        %v1329 = vadd.f32 0.0, %v1328
        %1330 = vmatprep.mubr.f32.mxu0 0.0
        %1331 = vmatmul.mubr.f32.gmra.mrb[0].mxu0 %v456
        %v1332 = vpop.f32.mrb[0].mxu0
        %v1333 = vadd.f32 0.0, %v1332
        %v1334 = vpop.f32.mrb[0].mxu0
        %v1335 = vadd.f32 0.0, %v1334
        %1336 = vmatprep.mubr.f32.mxu0 0.0
        %1337 = vmatmul.mubr.f32.gmra.mrb[0].mxu0 %v459
        %v1338 = vpop.f32.mrb[0].mxu0
        %v1339 = vadd.f32 0.0, %v1338
        %v1340 = vpop.f32.mrb[0].mxu0
        %v1341 = vadd.f32 0.0, %v1340
        %1342 = vmatprep.mubr.f32.mxu0 0.0
        %1343 = vmatmul.mubr.f32.gmra.mrb[0].mxu0 %v462
        %v1344 = vpop.f32.mrb[0].mxu0
        %v1345 = vadd.f32 0.0, %v1344
        %v1346 = vpop.f32.mrb[0].mxu0
        %v1347 = vadd.f32 0.0, %v1346
        %1348 = vmatprep.mubr.f32.mxu0 0.0
        %1349 = vmatmul.mubr.f32.gmra.mrb[0].mxu0 %v465
        %v1350 = vpop.f32.mrb[0].mxu0
        %v1351 = vadd.f32 0.0, %v1350
        %v1352 = vpop.f32.mrb[0].mxu0
        %v1353 = vadd.f32 0.0, %v1352
        %1354 = vmatprep.mubr.f32.mxu0 0.0
        %1355 = vmatmul.mubr.f32.gmra.mrb[0].mxu0 %v468
        %v1356 = vpop.f32.mrb[0].mxu0
        %v1357 = vadd.f32 0.0, %v1356
        %v1358 = vpop.f32.mrb[0].mxu0
        %v1359 = vadd.f32 0.0, %v1358
        %1360 = vmatprep.mubr.f32.mxu0 0.0
        %1361 = vmatmul.mubr.f32.gmra.mrb[0].mxu0 %v471
        %v1362 = vpop.f32.mrb[0].mxu0
        %v1363 = vadd.f32 0.0, %v1362
        %v1364 = vpop.f32.mrb[0].mxu0
        %v1365 = vadd.f32 0.0, %v1364
        %1366 = vmatprep.mubr.f32.mxu0 0.0
        %1367 = vmatmul.mubr.f32.gmra.mrb[0].mxu0 %v474
        %v1368 = vpop.f32.mrb[0].mxu0
        %v1369 = vadd.f32 0.0, %v1368
        %v1370 = vpop.f32.mrb[0].mxu0
        %v1371 = vadd.f32 0.0, %v1370
        %1372 = vmatprep.mubr.f32.mxu0 0.0
        %1373 = vmatmul.mubr.f32.gmra.mrb[0].mxu0 %v477
        %v1374 = vpop.f32.mrb[0].mxu0
        %v1375 = vadd.f32 0.0, %v1374
        %v1376 = vpop.f32.mrb[0].mxu0
        %v1377 = vadd.f32 0.0, %v1376
        %1378 = vmatprep.mubr.f32.mxu0 0.0
        %1379 = vmatmul.mubr.f32.gmra.mrb[0].mxu0 %v480
        %v1380 = vpop.f32.mrb[0].mxu0
        %v1381 = vadd.f32 0.0, %v1380
        %v1382 = vpop.f32.mrb[0].mxu0
        %v1383 = vadd.f32 0.0, %v1382
        %1384 = vmatprep.mubr.f32.mxu0 0.0
        %1385 = vmatmul.mubr.f32.gmra.mrb[0].mxu0 %v483
        %v1386 = vpop.f32.mrb[0].mxu0
        %v1387 = vadd.f32 0.0, %v1386
        %v1388 = vpop.f32.mrb[0].mxu0
        %v1389 = vadd.f32 0.0, %v1388
        %1390 = vmatprep.mubr.f32.mxu0 0.0
        %1391 = vmatmul.mubr.f32.gmra.mrb[0].mxu0 %v486
        %v1392 = vpop.f32.mrb[0].mxu0
        %v1393 = vadd.f32 0.0, %v1392
        %v1394 = vpop.f32.mrb[0].mxu0
        %v1395 = vadd.f32 0.0, %v1394
        %1396 = vmatprep.mubr.f32.mxu0 0.0
        %1397 = vmatmul.mubr.f32.gmra.mrb[0].mxu0 %v489
        %v1398 = vpop.f32.mrb[0].mxu0
        %v1399 = vadd.f32 0.0, %v1398
        %v1400 = vpop.f32.mrb[0].mxu0
        %v1401 = vadd.f32 0.0, %v1400
        %1402 = vmatprep.mubr.f32.mxu0 0.0
        %1403 = vmatmul.mubr.f32.gmra.mrb[0].mxu0 %v492
        %v1404 = vpop.f32.mrb[0].mxu0
        %v1405 = vadd.f32 0.0, %v1404
        %v1406 = vpop.f32.mrb[0].mxu0
        %v1407 = vadd.f32 0.0, %v1406
        %1408 = vmatprep.mubr.f32.mxu0 0.0
        %1409 = vmatmul.mubr.f32.gmra.mrb[0].mxu0 %v495
        %v1410 = vpop.f32.mrb[0].mxu0
        %v1411 = vadd.f32 0.0, %v1410
        %v1412 = vpop.f32.mrb[0].mxu0
        %v1413 = vadd.f32 0.0, %v1412
        %1414 = vmatprep.mubr.f32.mxu0 0.0
        %1415 = vmatmul.mubr.f32.gmra.mrb[0].mxu0 %v498
        %v1416 = vpop.f32.mrb[0].mxu0
        %v1417 = vadd.f32 0.0, %v1416
        %v1418 = vpop.f32.mrb[0].mxu0
        %v1419 = vadd.f32 0.0, %v1418
        %1420 = vmatprep.mubr.f32.mxu0 0.0
        %1421 = vmatmul.mubr.f32.gmra.mrb[0].mxu0 %v501
        %v1422 = vpop.f32.mrb[0].mxu0
        %v1423 = vadd.f32 0.0, %v1422
        %v1424 = vpop.f32.mrb[0].mxu0
        %v1425 = vadd.f32 0.0, %v1424
        %1426 = vmatprep.mubr.f32.mxu0 0.0
        %1427 = vmatmul.mubr.f32.gmra.mrb[0].mxu0 %v947
        %v1428 = vpop.f32.mrb[0].mxu0
        %v1429 = vadd.f32 0.0, %v1428
        %v1430 = vpop.f32.mrb[0].mxu0
        %v1431 = vadd.f32 0.0, %v1430
        %1432 = vmatprep.mubr.f32.mxu0 0.0
        %1433 = vmatmul.mubr.f32.gmra.mrb[0].mxu0 %v1222
        %v1434 = vpop.f32.mrb[0].mxu0
        %v1435 = vadd.f32 0.0, %v1434
        %v1436 = vpop.f32.mrb[0].mxu0
        %v1437 = vadd.f32 0.0, %v1436
        %1438 = vdwg.mxu0
        %v1439 = vadd.f32 %v1164, %v1297
        %v1440 = vadd.f32 %v1165, %v1299
        %v1441 = vadd.f32 %v1166, %v1303
        %v1442 = vadd.f32 %v1167, %v1305
        %v1443 = vadd.f32 %v1168, %v1309
        %v1444 = vadd.f32 %v1169, %v1311
        %v1445 = vadd.f32 %v1170, %v1315
        %v1446 = vadd.f32 %v1171, %v1317
        %v1447 = vadd.f32 %v1172, %v1321
        %v1448 = vadd.f32 %v1173, %v1323
        %v1449 = vadd.f32 %v1174, %v1327
        %v1450 = vadd.f32 %v1175, %v1329
        %v1451 = vadd.f32 %v1176, %v1333
        %v1452 = vadd.f32 %v1177, %v1335
        %v1453 = vadd.f32 %v1178, %v1339
        %v1454 = vadd.f32 %v1179, %v1341
        %v1455 = vadd.f32 %v1180, %v1345
        %v1456 = vadd.f32 %v1181, %v1347
        %v1457 = vadd.f32 %v1182, %v1351
        %v1458 = vadd.f32 %v1183, %v1353
        %v1459 = vadd.f32 %v1184, %v1357
        %v1460 = vadd.f32 %v1185, %v1359
        %v1461 = vadd.f32 %v1186, %v1363
        %v1462 = vadd.f32 %v1187, %v1365
        %v1463 = vadd.f32 %v1188, %v1369
        %v1464 = vadd.f32 %v1189, %v1371
        %v1465 = vadd.f32 %v1190, %v1375
        %v1466 = vadd.f32 %v1191, %v1377
        %v1467 = vadd.f32 %v1192, %v1381
        %v1468 = vadd.f32 %v1193, %v1383
        %v1469 = vadd.f32 %v1194, %v1387
        %v1470 = vadd.f32 %v1195, %v1389
        %v1471 = vadd.f32 %v1196, %v1393
        %v1472 = vadd.f32 %v1197, %v1395
        %v1473 = vadd.f32 %v1198, %v1399
        %v1474 = vadd.f32 %v1199, %v1401
        %v1475 = vadd.f32 %v1200, %v1405
        %v1476 = vadd.f32 %v1201, %v1407
        %v1477 = vadd.f32 %v1202, %v1411
        %v1478 = vadd.f32 %v1203, %v1413
        %v1479 = vadd.f32 %v1204, %v1417
        %v1480 = vadd.f32 %v1205, %v1419
        %v1481 = vadd.f32 %v1206, %v1423
        %v1482 = vadd.f32 %v1207, %v1425
        %v1483 = vadd.f32 %v1208, %v1429
        %v1484 = vadd.f32 %v1209, %v1431
        %v1485 = vadd.f32 %v1210, %v1435
        %v1486 = vadd.f32 %v1211, %v1437
        %s1487 = scalar_lea.vmem %s1, 256
        %v1488 = vld [vmem:[%s1487] sm:$0xff]
        %v1489 = vld [vmem:[%s1487 + $0x8] sm:$0xff]
        %v1490 = vld [vmem:[%s1487 + $0x10] sm:$0xff]
        %v1491 = vld [vmem:[%s1487 + $0x18] sm:$0xff]
        %v1492 = vld [vmem:[%s1487 + $0x20] sm:$0xff]
        %v1493 = vld [vmem:[%s1487 + $0x28] sm:$0xff]
        %v1494 = vld [vmem:[%s1487 + $0x30] sm:$0xf]
        %v1495 = vld [vmem:[%s1487 + $0x38] sm:$0xf]
        %v1497 = vsel %vm430, %v412, 0
        %v1500 = vsel %vm503, %v1494, 0
        %v1503 = vsel %vm503, %v1495, 0
        %1505 = vmatprep.subr.mxu0 %v1489
        %1506 = vmatpush1.msra.mxu0 %v1488
        %1507 = vmatprep.subr.mxu0 %v1491
        %1508 = vmatpush1.msra.mxu0 %v1490
        %1509 = vmatprep.subr.mxu0 %v1493
        %1510 = vmatpush1.msra.mxu0 %v1492
        %1511 = vmatprep.subr.mxu0 %v1503
        %1512 = vmatpush1.msra.mxu0 %v1500
        %1513 = vmatprep.subr.mxu0 0.0
        %1514 = vmatpush1.msra.mxu0 0.0
        %1515 = vmatprep.subr.mxu0 0.0
        %1516 = vmatpush1.msra.mxu0 0.0
        %1517 = vmatprep.subr.mxu0 0.0
        %1518 = vmatpush1.msra.mxu0 0.0
        %1519 = vmatprep.subr.mxu0 0.0
        %1520 = vmatpush1.msra.mxu0 0.0
        %1521 = vmatprep.subr.mxu0 0.0
        %1522 = vmatpush1.msra.mxu0 0.0
        %1523 = vmatprep.subr.mxu0 0.0
        %1524 = vmatpush1.msra.mxu0 0.0
        %1525 = vmatprep.subr.mxu0 0.0
        %1526 = vmatpush1.msra.mxu0 0.0
        %1527 = vmatprep.subr.mxu0 0.0
        %1528 = vmatpush1.msra.mxu0 0.0
        %1529 = vmatprep.subr.mxu0 0.0
        %1530 = vmatpush1.msra.mxu0 0.0
        %1531 = vmatprep.subr.mxu0 0.0
        %1532 = vmatpush1.msra.mxu0 0.0
        %1533 = vmatprep.subr.mxu0 0.0
        %1534 = vmatpush1.msra.mxu0 0.0
        %1535 = vmatprep.subr.mxu0 0.0
        %1536 = vmatpush1.msra.mxu0 0.0
        %1537 = vmatprep.subr.mxu0 0.0
        %1538 = vmatpush1.msra.mxu0 0.0
        %1539 = vmatprep.subr.mxu0 0.0
        %1540 = vmatpush1.msra.mxu0 0.0
        %1541 = vmatprep.subr.mxu0 0.0
        %1542 = vmatpush1.msra.mxu0 0.0
        %1543 = vmatprep.subr.mxu0 0.0
        %1544 = vmatpush1.msra.mxu0 0.0
        %1545 = vmatprep.subr.mxu0 0.0
        %1546 = vmatpush1.msra.mxu0 0.0
        %1547 = vmatprep.subr.mxu0 0.0
        %1548 = vmatpush1.msra.mxu0 0.0
        %1549 = vmatprep.subr.mxu0 0.0
        %1550 = vmatpush1.msra.mxu0 0.0
        %1551 = vmatprep.subr.mxu0 0.0
        %1552 = vmatpush1.msra.mxu0 0.0
        %1553 = vmatprep.subr.mxu0 0.0
        %1554 = vmatpush1.msra.mxu0 0.0
        %1555 = vmatprep.subr.mxu0 0.0
        %1556 = vmatpush1.msra.mxu0 0.0
        %1557 = vmatprep.subr.mxu0 0.0
        %1558 = vmatpush1.msra.mxu0 0.0
        %1559 = vmatprep.subr.mxu0 0.0
        %1560 = vmatpush1.msra.mxu0 0.0
        %1561 = vmatprep.subr.mxu0 0.0
        %1562 = vmatpush1.msra.mxu0 0.0
        %1563 = vmatprep.subr.mxu0 0.0
        %1564 = vmatpush1.msra.mxu0 0.0
        %1565 = vmatprep.subr.mxu0 0.0
        %1566 = vmatpush1.msra.mxu0 0.0
        %1567 = vmatprep.subr.mxu0 0.0
        %1568 = vmatpush1.msra.mxu0 0.0
        %1569 = vmatprep.mubr.f32.mxu0 0.0
        %1570 = vmatmul.mubr.f32.gmra.mrb[0].mxu0 %v441
        %v1571 = vpop.f32.mrb[0].mxu0
        %v1572 = vadd.f32 0.0, %v1571
        %v1573 = vpop.f32.mrb[0].mxu0
        %v1574 = vadd.f32 0.0, %v1573
        %1575 = vmatprep.mubr.f32.mxu0 0.0
        %1576 = vmatmul.mubr.f32.gmra.mrb[0].mxu0 %v444
        %v1577 = vpop.f32.mrb[0].mxu0
        %v1578 = vadd.f32 0.0, %v1577
        %v1579 = vpop.f32.mrb[0].mxu0
        %v1580 = vadd.f32 0.0, %v1579
        %1581 = vmatprep.mubr.f32.mxu0 0.0
        %1582 = vmatmul.mubr.f32.gmra.mrb[0].mxu0 %v447
        %v1583 = vpop.f32.mrb[0].mxu0
        %v1584 = vadd.f32 0.0, %v1583
        %v1585 = vpop.f32.mrb[0].mxu0
        %v1586 = vadd.f32 0.0, %v1585
        %1587 = vmatprep.mubr.f32.mxu0 0.0
        %1588 = vmatmul.mubr.f32.gmra.mrb[0].mxu0 %v450
        %v1589 = vpop.f32.mrb[0].mxu0
        %v1590 = vadd.f32 0.0, %v1589
        %v1591 = vpop.f32.mrb[0].mxu0
        %v1592 = vadd.f32 0.0, %v1591
        %1593 = vmatprep.mubr.f32.mxu0 0.0
        %1594 = vmatmul.mubr.f32.gmra.mrb[0].mxu0 %v453
        %v1595 = vpop.f32.mrb[0].mxu0
        %v1596 = vadd.f32 0.0, %v1595
        %v1597 = vpop.f32.mrb[0].mxu0
        %v1598 = vadd.f32 0.0, %v1597
        %1599 = vmatprep.mubr.f32.mxu0 0.0
        %1600 = vmatmul.mubr.f32.gmra.mrb[0].mxu0 %v456
        %v1601 = vpop.f32.mrb[0].mxu0
        %v1602 = vadd.f32 0.0, %v1601
        %v1603 = vpop.f32.mrb[0].mxu0
        %v1604 = vadd.f32 0.0, %v1603
        %1605 = vmatprep.mubr.f32.mxu0 0.0
        %1606 = vmatmul.mubr.f32.gmra.mrb[0].mxu0 %v459
        %v1607 = vpop.f32.mrb[0].mxu0
        %v1608 = vadd.f32 0.0, %v1607
        %v1609 = vpop.f32.mrb[0].mxu0
        %v1610 = vadd.f32 0.0, %v1609
        %1611 = vmatprep.mubr.f32.mxu0 0.0
        %1612 = vmatmul.mubr.f32.gmra.mrb[0].mxu0 %v462
        %v1613 = vpop.f32.mrb[0].mxu0
        %v1614 = vadd.f32 0.0, %v1613
        %v1615 = vpop.f32.mrb[0].mxu0
        %v1616 = vadd.f32 0.0, %v1615
        %1617 = vmatprep.mubr.f32.mxu0 0.0
        %1618 = vmatmul.mubr.f32.gmra.mrb[0].mxu0 %v465
        %v1619 = vpop.f32.mrb[0].mxu0
        %v1620 = vadd.f32 0.0, %v1619
        %v1621 = vpop.f32.mrb[0].mxu0
        %v1622 = vadd.f32 0.0, %v1621
        %1623 = vmatprep.mubr.f32.mxu0 0.0
        %1624 = vmatmul.mubr.f32.gmra.mrb[0].mxu0 %v468
        %v1625 = vpop.f32.mrb[0].mxu0
        %v1626 = vadd.f32 0.0, %v1625
        %v1627 = vpop.f32.mrb[0].mxu0
        %v1628 = vadd.f32 0.0, %v1627
        %1629 = vmatprep.mubr.f32.mxu0 0.0
        %1630 = vmatmul.mubr.f32.gmra.mrb[0].mxu0 %v471
        %v1631 = vpop.f32.mrb[0].mxu0
        %v1632 = vadd.f32 0.0, %v1631
        %v1633 = vpop.f32.mrb[0].mxu0
        %v1634 = vadd.f32 0.0, %v1633
        %1635 = vmatprep.mubr.f32.mxu0 0.0
        %1636 = vmatmul.mubr.f32.gmra.mrb[0].mxu0 %v474
        %v1637 = vpop.f32.mrb[0].mxu0
        %v1638 = vadd.f32 0.0, %v1637
        %v1639 = vpop.f32.mrb[0].mxu0
        %v1640 = vadd.f32 0.0, %v1639
        %1641 = vmatprep.mubr.f32.mxu0 0.0
        %1642 = vmatmul.mubr.f32.gmra.mrb[0].mxu0 %v477
        %v1643 = vpop.f32.mrb[0].mxu0
        %v1644 = vadd.f32 0.0, %v1643
        %v1645 = vpop.f32.mrb[0].mxu0
        %v1646 = vadd.f32 0.0, %v1645
        %1647 = vmatprep.mubr.f32.mxu0 0.0
        %1648 = vmatmul.mubr.f32.gmra.mrb[0].mxu0 %v480
        %v1649 = vpop.f32.mrb[0].mxu0
        %v1650 = vadd.f32 0.0, %v1649
        %v1651 = vpop.f32.mrb[0].mxu0
        %v1652 = vadd.f32 0.0, %v1651
        %1653 = vmatprep.mubr.f32.mxu0 0.0
        %1654 = vmatmul.mubr.f32.gmra.mrb[0].mxu0 %v483
        %v1655 = vpop.f32.mrb[0].mxu0
        %v1656 = vadd.f32 0.0, %v1655
        %v1657 = vpop.f32.mrb[0].mxu0
        %v1658 = vadd.f32 0.0, %v1657
        %1659 = vmatprep.mubr.f32.mxu0 0.0
        %1660 = vmatmul.mubr.f32.gmra.mrb[0].mxu0 %v486
        %v1661 = vpop.f32.mrb[0].mxu0
        %v1662 = vadd.f32 0.0, %v1661
        %v1663 = vpop.f32.mrb[0].mxu0
        %v1664 = vadd.f32 0.0, %v1663
        %1665 = vmatprep.mubr.f32.mxu0 0.0
        %1666 = vmatmul.mubr.f32.gmra.mrb[0].mxu0 %v489
        %v1667 = vpop.f32.mrb[0].mxu0
        %v1668 = vadd.f32 0.0, %v1667
        %v1669 = vpop.f32.mrb[0].mxu0
        %v1670 = vadd.f32 0.0, %v1669
        %1671 = vmatprep.mubr.f32.mxu0 0.0
        %1672 = vmatmul.mubr.f32.gmra.mrb[0].mxu0 %v492
        %v1673 = vpop.f32.mrb[0].mxu0
        %v1674 = vadd.f32 0.0, %v1673
        %v1675 = vpop.f32.mrb[0].mxu0
        %v1676 = vadd.f32 0.0, %v1675
        %1677 = vmatprep.mubr.f32.mxu0 0.0
        %1678 = vmatmul.mubr.f32.gmra.mrb[0].mxu0 %v495
        %v1679 = vpop.f32.mrb[0].mxu0
        %v1680 = vadd.f32 0.0, %v1679
        %v1681 = vpop.f32.mrb[0].mxu0
        %v1682 = vadd.f32 0.0, %v1681
        %1683 = vmatprep.mubr.f32.mxu0 0.0
        %1684 = vmatmul.mubr.f32.gmra.mrb[0].mxu0 %v498
        %v1685 = vpop.f32.mrb[0].mxu0
        %v1686 = vadd.f32 0.0, %v1685
        %v1687 = vpop.f32.mrb[0].mxu0
        %v1688 = vadd.f32 0.0, %v1687
        %1689 = vmatprep.mubr.f32.mxu0 0.0
        %1690 = vmatmul.mubr.f32.gmra.mrb[0].mxu0 %v501
        %v1691 = vpop.f32.mrb[0].mxu0
        %v1692 = vadd.f32 0.0, %v1691
        %v1693 = vpop.f32.mrb[0].mxu0
        %v1694 = vadd.f32 0.0, %v1693
        %1695 = vmatprep.mubr.f32.mxu0 0.0
        %1696 = vmatmul.mubr.f32.gmra.mrb[0].mxu0 %v947
        %v1697 = vpop.f32.mrb[0].mxu0
        %v1698 = vadd.f32 0.0, %v1697
        %v1699 = vpop.f32.mrb[0].mxu0
        %v1700 = vadd.f32 0.0, %v1699
        %1701 = vmatprep.mubr.f32.mxu0 0.0
        %1702 = vmatmul.mubr.f32.gmra.mrb[0].mxu0 %v1222
        %v1703 = vpop.f32.mrb[0].mxu0
        %v1704 = vadd.f32 0.0, %v1703
        %v1705 = vpop.f32.mrb[0].mxu0
        %v1706 = vadd.f32 0.0, %v1705
        %1707 = vmatprep.mubr.f32.mxu0 0.0
        %1708 = vmatmul.mubr.f32.gmra.mrb[0].mxu0 %v1497
        %v1709 = vpop.f32.mrb[0].mxu0
        %v1710 = vadd.f32 0.0, %v1709
        %v1711 = vpop.f32.mrb[0].mxu0
        %v1712 = vadd.f32 0.0, %v1711
        %1713 = vdwg.mxu0
        %v1714 = vadd.f32 %v1439, %v1572
        %v1715 = vadd.f32 %v1440, %v1574
        %v1716 = vadd.f32 %v1441, %v1578
        %v1717 = vadd.f32 %v1442, %v1580
        %v1718 = vadd.f32 %v1443, %v1584
        %v1719 = vadd.f32 %v1444, %v1586
        %v1720 = vadd.f32 %v1445, %v1590
        %v1721 = vadd.f32 %v1446, %v1592
        %v1722 = vadd.f32 %v1447, %v1596
        %v1723 = vadd.f32 %v1448, %v1598
        %v1724 = vadd.f32 %v1449, %v1602
        %v1725 = vadd.f32 %v1450, %v1604
        %v1726 = vadd.f32 %v1451, %v1608
        %v1727 = vadd.f32 %v1452, %v1610
        %v1728 = vadd.f32 %v1453, %v1614
        %v1729 = vadd.f32 %v1454, %v1616
        %v1730 = vadd.f32 %v1455, %v1620
        %v1731 = vadd.f32 %v1456, %v1622
        %v1732 = vadd.f32 %v1457, %v1626
        %v1733 = vadd.f32 %v1458, %v1628
        %v1734 = vadd.f32 %v1459, %v1632
        %v1735 = vadd.f32 %v1460, %v1634
        %v1736 = vadd.f32 %v1461, %v1638
        %v1737 = vadd.f32 %v1462, %v1640
        %v1738 = vadd.f32 %v1463, %v1644
        %v1739 = vadd.f32 %v1464, %v1646
        %v1740 = vadd.f32 %v1465, %v1650
        %v1741 = vadd.f32 %v1466, %v1652
        %v1742 = vadd.f32 %v1467, %v1656
        %v1743 = vadd.f32 %v1468, %v1658
        %v1744 = vadd.f32 %v1469, %v1662
        %v1745 = vadd.f32 %v1470, %v1664
        %v1746 = vadd.f32 %v1471, %v1668
        %v1747 = vadd.f32 %v1472, %v1670
        %v1748 = vadd.f32 %v1473, %v1674
        %v1749 = vadd.f32 %v1474, %v1676
        %v1750 = vadd.f32 %v1475, %v1680
        %v1751 = vadd.f32 %v1476, %v1682
        %v1752 = vadd.f32 %v1477, %v1686
        %v1753 = vadd.f32 %v1478, %v1688
        %v1754 = vadd.f32 %v1479, %v1692
        %v1755 = vadd.f32 %v1480, %v1694
        %v1756 = vadd.f32 %v1481, %v1698
        %v1757 = vadd.f32 %v1482, %v1700
        %v1758 = vadd.f32 %v1483, %v1704
        %v1759 = vadd.f32 %v1484, %v1706
        %v1760 = vadd.f32 %v1485, %v1710
        %v1761 = vadd.f32 %v1486, %v1712
        %v1762 = vld [vmem:[%s2] sm:$0x3]
        %v1764 = vlaneseq
        %v1765 = vshrl.u32 %v1764, 7
        %v1766 = vsub.s32 0, %v1765
        %v1767 = vrot.slane %v1762, %v1766
        %v1768 = vlaneseq
        %v1769 = vshrl.u32 %v1768, 7
        %v1770 = vsub.s32 1, %v1769
        %v1771 = vrot.slane %v1762, %v1770
        %v1774 = vadd.f32 %v1714, %v1767
        %v1775 = vadd.f32 %v1715, %v1771
        %v1776 = vadd.f32 %v1716, %v1767
        %v1777 = vadd.f32 %v1717, %v1771
        %v1778 = vadd.f32 %v1718, %v1767
        %v1779 = vadd.f32 %v1719, %v1771
        %v1780 = vadd.f32 %v1720, %v1767
        %v1781 = vadd.f32 %v1721, %v1771
        %v1782 = vadd.f32 %v1722, %v1767
        %v1783 = vadd.f32 %v1723, %v1771
        %v1784 = vadd.f32 %v1724, %v1767
        %v1785 = vadd.f32 %v1725, %v1771
        %v1786 = vadd.f32 %v1726, %v1767
        %v1787 = vadd.f32 %v1727, %v1771
        %v1788 = vadd.f32 %v1728, %v1767
        %v1789 = vadd.f32 %v1729, %v1771
        %v1790 = vadd.f32 %v1730, %v1767
        %v1791 = vadd.f32 %v1731, %v1771
        %v1792 = vadd.f32 %v1732, %v1767
        %v1793 = vadd.f32 %v1733, %v1771
        %v1794 = vadd.f32 %v1734, %v1767
        %v1795 = vadd.f32 %v1735, %v1771
        %v1796 = vadd.f32 %v1736, %v1767
        %v1797 = vadd.f32 %v1737, %v1771
        %v1798 = vadd.f32 %v1738, %v1767
        %v1799 = vadd.f32 %v1739, %v1771
        %v1800 = vadd.f32 %v1740, %v1767
        %v1801 = vadd.f32 %v1741, %v1771
        %v1802 = vadd.f32 %v1742, %v1767
        %v1803 = vadd.f32 %v1743, %v1771
        %v1804 = vadd.f32 %v1744, %v1767
        %v1805 = vadd.f32 %v1745, %v1771
        %v1806 = vadd.f32 %v1746, %v1767
        %v1807 = vadd.f32 %v1747, %v1771
        %v1808 = vadd.f32 %v1748, %v1767
        %v1809 = vadd.f32 %v1749, %v1771
        %v1810 = vadd.f32 %v1750, %v1767
        %v1811 = vadd.f32 %v1751, %v1771
        %v1812 = vadd.f32 %v1752, %v1767
        %v1813 = vadd.f32 %v1753, %v1771
        %v1814 = vadd.f32 %v1754, %v1767
        %v1815 = vadd.f32 %v1755, %v1771
        %v1816 = vadd.f32 %v1756, %v1767
        %v1817 = vadd.f32 %v1757, %v1771
        %v1818 = vadd.f32 %v1758, %v1767
        %v1819 = vadd.f32 %v1759, %v1771
        %v1820 = vadd.f32 %v1760, %v1767
        %v1821 = vadd.f32 %v1761, %v1771
        %v1822 = vmax.f32 %v1774, %v1776
        %v1823 = vmax.f32 %v1775, %v1777
        %v1824 = vmax.f32 %v1778, %v1780
        %v1825 = vmax.f32 %v1779, %v1781
        %v1826 = vmax.f32 %v1782, %v1784
        %v1827 = vmax.f32 %v1783, %v1785
        %v1828 = vmax.f32 %v1786, %v1788
        %v1829 = vmax.f32 %v1787, %v1789
        %v1830 = vmax.f32 %v1790, %v1792
        %v1831 = vmax.f32 %v1791, %v1793
        %v1832 = vmax.f32 %v1794, %v1796
        %v1833 = vmax.f32 %v1795, %v1797
        %v1834 = vmax.f32 %v1798, %v1800
        %v1835 = vmax.f32 %v1799, %v1801
        %v1836 = vmax.f32 %v1802, %v1804
        %v1837 = vmax.f32 %v1803, %v1805
        %v1838 = vmax.f32 %v1806, %v1808
        %v1839 = vmax.f32 %v1807, %v1809
        %v1840 = vmax.f32 %v1810, %v1812
        %v1841 = vmax.f32 %v1811, %v1813
        %v1842 = vmax.f32 %v1814, %v1816
        %v1843 = vmax.f32 %v1815, %v1817
        %v1844 = vmax.f32 %v1818, %v1820
        %v1845 = vmax.f32 %v1819, %v1821
        %1870 = vrot.lane.b32.xlu0 %v1822, 127
        %v1871 = vpop.permute.xlu0 %1870
        %1872 = vrot.lane.b32.xlu0 %v1823, 127
        %v1873 = vpop.permute.xlu0 %1872
        %1874 = vrot.lane.b32.xlu0 %v1824, 127
        %v1875 = vpop.permute.xlu0 %1874
        %1876 = vrot.lane.b32.xlu0 %v1825, 127
        %v1877 = vpop.permute.xlu0 %1876
        %1878 = vrot.lane.b32.xlu0 %v1826, 127
        %v1879 = vpop.permute.xlu0 %1878
        %1880 = vrot.lane.b32.xlu0 %v1827, 127
        %v1881 = vpop.permute.xlu0 %1880
        %1882 = vrot.lane.b32.xlu0 %v1828, 127
        %v1883 = vpop.permute.xlu0 %1882
        %1884 = vrot.lane.b32.xlu0 %v1829, 127
        %v1885 = vpop.permute.xlu0 %1884
        %1886 = vrot.lane.b32.xlu0 %v1830, 127
        %v1887 = vpop.permute.xlu0 %1886
        %1888 = vrot.lane.b32.xlu0 %v1831, 127
        %v1889 = vpop.permute.xlu0 %1888
        %1890 = vrot.lane.b32.xlu0 %v1832, 127
        %v1891 = vpop.permute.xlu0 %1890
        %1892 = vrot.lane.b32.xlu0 %v1833, 127
        %v1893 = vpop.permute.xlu0 %1892
        %1894 = vrot.lane.b32.xlu0 %v1834, 127
        %v1895 = vpop.permute.xlu0 %1894
        %1896 = vrot.lane.b32.xlu0 %v1835, 127
        %v1897 = vpop.permute.xlu0 %1896
        %1898 = vrot.lane.b32.xlu0 %v1836, 127
        %v1899 = vpop.permute.xlu0 %1898
        %1900 = vrot.lane.b32.xlu0 %v1837, 127
        %v1901 = vpop.permute.xlu0 %1900
        %1902 = vrot.lane.b32.xlu0 %v1838, 127
        %v1903 = vpop.permute.xlu0 %1902
        %1904 = vrot.lane.b32.xlu0 %v1839, 127
        %v1905 = vpop.permute.xlu0 %1904
        %1906 = vrot.lane.b32.xlu0 %v1840, 127
        %v1907 = vpop.permute.xlu0 %1906
        %1908 = vrot.lane.b32.xlu0 %v1841, 127
        %v1909 = vpop.permute.xlu0 %1908
        %1910 = vrot.lane.b32.xlu0 %v1842, 127
        %v1911 = vpop.permute.xlu0 %1910
        %1912 = vrot.lane.b32.xlu0 %v1843, 127
        %v1913 = vpop.permute.xlu0 %1912
        %1914 = vrot.lane.b32.xlu0 %v1844, 127
        %v1915 = vpop.permute.xlu0 %1914
        %1916 = vrot.lane.b32.xlu0 %v1845, 127
        %v1917 = vpop.permute.xlu0 %1916
        %vm1918 = vcmask 1039360
        %v1919 = vsel %vm1918, %v1871, %v1873
        %v1920 = vsel %vm1918, %v1875, %v1877
        %v1921 = vsel %vm1918, %v1879, %v1881
        %v1922 = vsel %vm1918, %v1883, %v1885
        %v1923 = vsel %vm1918, %v1887, %v1889
        %v1924 = vsel %vm1918, %v1891, %v1893
        %v1925 = vsel %vm1918, %v1895, %v1897
        %v1926 = vsel %vm1918, %v1899, %v1901
        %v1927 = vsel %vm1918, %v1903, %v1905
        %v1928 = vsel %vm1918, %v1907, %v1909
        %v1929 = vsel %vm1918, %v1911, %v1913
        %v1930 = vsel %vm1918, %v1915, %v1917
        %v1955 = vmax.f32 %v1822, %v1919
        %v1956 = vmax.f32 %v1823, %v1873
        %v1957 = vmax.f32 %v1824, %v1920
        %v1958 = vmax.f32 %v1825, %v1877
        %v1959 = vmax.f32 %v1826, %v1921
        %v1960 = vmax.f32 %v1827, %v1881
        %v1961 = vmax.f32 %v1828, %v1922
        %v1962 = vmax.f32 %v1829, %v1885
        %v1963 = vmax.f32 %v1830, %v1923
        %v1964 = vmax.f32 %v1831, %v1889
        %v1965 = vmax.f32 %v1832, %v1924
        %v1966 = vmax.f32 %v1833, %v1893
        %v1967 = vmax.f32 %v1834, %v1925
        %v1968 = vmax.f32 %v1835, %v1897
        %v1969 = vmax.f32 %v1836, %v1926
        %v1970 = vmax.f32 %v1837, %v1901
        %v1971 = vmax.f32 %v1838, %v1927
        %v1972 = vmax.f32 %v1839, %v1905
        %v1973 = vmax.f32 %v1840, %v1928
        %v1974 = vmax.f32 %v1841, %v1909
        %v1975 = vmax.f32 %v1842, %v1929
        %v1976 = vmax.f32 %v1843, %v1913
        %v1977 = vmax.f32 %v1844, %v1930
        %v1978 = vmax.f32 %v1845, %v1917
        %v1979 = vmax.f32 %v1955, 0.0
        %v1980 = vmax.f32 %v1956, 0.0
        %v1981 = vmax.f32 %v1957, 0.0
        %v1982 = vmax.f32 %v1958, 0.0
        %v1983 = vmax.f32 %v1959, 0.0
        %v1984 = vmax.f32 %v1960, 0.0
        %v1985 = vmax.f32 %v1961, 0.0
        %v1986 = vmax.f32 %v1962, 0.0
        %v1987 = vmax.f32 %v1963, 0.0
        %v1988 = vmax.f32 %v1964, 0.0
        %v1989 = vmax.f32 %v1965, 0.0
        %v1990 = vmax.f32 %v1966, 0.0
        %v1991 = vmax.f32 %v1967, 0.0
        %v1992 = vmax.f32 %v1968, 0.0
        %v1993 = vmax.f32 %v1969, 0.0
        %v1994 = vmax.f32 %v1970, 0.0
        %v1995 = vmax.f32 %v1971, 0.0
        %v1996 = vmax.f32 %v1972, 0.0
        %v1997 = vmax.f32 %v1973, 0.0
        %v1998 = vmax.f32 %v1974, 0.0
        %v1999 = vmax.f32 %v1975, 0.0
        %v2000 = vmax.f32 %v1976, 0.0
        %v2001 = vmax.f32 %v1977, 0.0
        %v2002 = vmax.f32 %v1978, 0.0
        %v2003 = vld [vmem:[%s3] sm:$0xff]
        %v2004 = vld [vmem:[%s3 + $0x8] sm:$0xff]
        %v2005 = vld [vmem:[%s3 + $0x10] sm:$0xff]
        %v2006 = vld [vmem:[%s3 + $0x18] sm:$0xff]
        %v2007 = vld [vmem:[%s3 + $0x20] sm:$0xff]
        %v2008 = vld [vmem:[%s3 + $0x28] sm:$0xff]
        %v2009 = vld [vmem:[%s3 + $0x30] sm:$0xff]
        %v2010 = vld [vmem:[%s3 + $0x38] sm:$0xff]
        %v2011 = vld [vmem:[%s3 + $0x40] sm:$0xff]
        %v2012 = vld [vmem:[%s3 + $0x48] sm:$0xff]
        %v2013 = vld [vmem:[%s3 + $0x50] sm:$0xff]
        %v2014 = vld [vmem:[%s3 + $0x58] sm:$0xff]
        %v2015 = vld [vmem:[%s3 + $0x60] sm:$0xff]
        %v2016 = vld [vmem:[%s3 + $0x68] sm:$0xff]
        %v2017 = vld [vmem:[%s3 + $0x70] sm:$0xff]
        %v2018 = vld [vmem:[%s3 + $0x78] sm:$0xff]
        %v2019 = vld [vmem:[%s3 + $0x80] sm:$0xff]
        %v2020 = vld [vmem:[%s3 + $0x88] sm:$0xff]
        %v2021 = vld [vmem:[%s3 + $0x90] sm:$0xff]
        %v2022 = vld [vmem:[%s3 + $0x98] sm:$0xff]
        %v2023 = vld [vmem:[%s3 + $0xa0] sm:$0xff]
        %v2024 = vld [vmem:[%s3 + $0xa8] sm:$0xff]
        %v2025 = vld [vmem:[%s3 + $0xb0] sm:$0xff]
        %v2026 = vld [vmem:[%s3 + $0xb8] sm:$0xff]
        %v2027 = vld [vmem:[%s3 + $0xc0] sm:$0xff]
        %v2028 = vld [vmem:[%s3 + $0xc8] sm:$0xff]
        %v2029 = vld [vmem:[%s3 + $0xd0] sm:$0xff]
        %v2030 = vld [vmem:[%s3 + $0xd8] sm:$0xff]
        %v2031 = vld [vmem:[%s3 + $0xe0] sm:$0xff]
        %v2032 = vld [vmem:[%s3 + $0xe8] sm:$0xff]
        %v2033 = vld [vmem:[%s3 + $0xf0] sm:$0xff]
        %v2034 = vld [vmem:[%s3 + $0xf8] sm:$0xff]
        %v2035 = vld [vmem:[%s3 + $0x100] sm:$0xff]
        %v2036 = vld [vmem:[%s3 + $0x108] sm:$0xff]
        %v2037 = vld [vmem:[%s3 + $0x110] sm:$0xff]
        %v2038 = vld [vmem:[%s3 + $0x118] sm:$0xff]
        %v2039 = vld [vmem:[%s3 + $0x120] sm:$0xff]
        %v2040 = vld [vmem:[%s3 + $0x128] sm:$0xff]
        %v2041 = vld [vmem:[%s3 + $0x130] sm:$0xff]
        %v2042 = vld [vmem:[%s3 + $0x138] sm:$0xff]
        %v2043 = vld [vmem:[%s3 + $0x140] sm:$0xff]
        %v2044 = vld [vmem:[%s3 + $0x148] sm:$0xff]
        %v2045 = vld [vmem:[%s3 + $0x150] sm:$0xff]
        %v2046 = vld [vmem:[%s3 + $0x158] sm:$0xff]
        %v2047 = vld [vmem:[%s3 + $0x160] sm:$0xff]
        %v2048 = vld [vmem:[%s3 + $0x168] sm:$0xff]
        %v2049 = vld [vmem:[%s3 + $0x170] sm:$0xff]
        %v2050 = vld [vmem:[%s3 + $0x178] sm:$0xff]
        %v2051 = vld [vmem:[%s3 + $0x180] sm:$0xff]
        %v2052 = vld [vmem:[%s3 + $0x188] sm:$0xff]
        %v2053 = vld [vmem:[%s3 + $0x190] sm:$0xff]
        %v2054 = vld [vmem:[%s3 + $0x198] sm:$0xff]
        %v2055 = vld [vmem:[%s3 + $0x1a0] sm:$0xff]
        %v2056 = vld [vmem:[%s3 + $0x1a8] sm:$0xff]
        %v2057 = vld [vmem:[%s3 + $0x1b0] sm:$0xff]
        %v2058 = vld [vmem:[%s3 + $0x1b8] sm:$0xff]
        %v2059 = vld [vmem:[%s3 + $0x1c0] sm:$0xff]
        %v2060 = vld [vmem:[%s3 + $0x1c8] sm:$0xff]
        %v2061 = vld [vmem:[%s3 + $0x1d0] sm:$0x7f]
        %v2062 = vld [vmem:[%s3 + $0x1d8] sm:$0x7f]
        %s2063 = scalar_lea.vmem %s3, 480
        %v2064 = vld [vmem:[%s2063] sm:$0xff]
        %v2065 = vld [vmem:[%s2063 + $0x8] sm:$0xff]
        %v2066 = vld [vmem:[%s2063 + $0x10] sm:$0xff]
        %v2067 = vld [vmem:[%s2063 + $0x18] sm:$0xff]
        %v2068 = vld [vmem:[%s2063 + $0x20] sm:$0xff]
        %v2069 = vld [vmem:[%s2063 + $0x28] sm:$0xff]
        %v2070 = vld [vmem:[%s2063 + $0x30] sm:$0xff]
        %v2071 = vld [vmem:[%s2063 + $0x38] sm:$0xff]
        %v2072 = vld [vmem:[%s2063 + $0x40] sm:$0xff]
        %v2073 = vld [vmem:[%s2063 + $0x48] sm:$0xff]
        %v2074 = vld [vmem:[%s2063 + $0x50] sm:$0xff]
        %v2075 = vld [vmem:[%s2063 + $0x58] sm:$0xff]
        %v2076 = vld [vmem:[%s2063 + $0x60] sm:$0xff]
        %v2077 = vld [vmem:[%s2063 + $0x68] sm:$0xff]
        %v2078 = vld [vmem:[%s2063 + $0x70] sm:$0xff]
        %v2079 = vld [vmem:[%s2063 + $0x78] sm:$0xff]
        %v2080 = vld [vmem:[%s2063 + $0x80] sm:$0xff]
        %v2081 = vld [vmem:[%s2063 + $0x88] sm:$0xff]
        %v2082 = vld [vmem:[%s2063 + $0x90] sm:$0xff]
        %v2083 = vld [vmem:[%s2063 + $0x98] sm:$0xff]
        %v2084 = vld [vmem:[%s2063 + $0xa0] sm:$0xff]
        %v2085 = vld [vmem:[%s2063 + $0xa8] sm:$0xff]
        %v2086 = vld [vmem:[%s2063 + $0xb0] sm:$0xff]
        %v2087 = vld [vmem:[%s2063 + $0xb8] sm:$0xff]
        %v2088 = vld [vmem:[%s2063 + $0xc0] sm:$0xff]
        %v2089 = vld [vmem:[%s2063 + $0xc8] sm:$0xff]
        %v2090 = vld [vmem:[%s2063 + $0xd0] sm:$0xff]
        %v2091 = vld [vmem:[%s2063 + $0xd8] sm:$0xff]
        %v2092 = vld [vmem:[%s2063 + $0xe0] sm:$0xff]
        %v2093 = vld [vmem:[%s2063 + $0xe8] sm:$0xff]
        %v2094 = vld [vmem:[%s2063 + $0xf0] sm:$0xff]
        %v2095 = vld [vmem:[%s2063 + $0xf8] sm:$0xff]
        %v2096 = vld [vmem:[%s2063 + $0x100] sm:$0xff]
        %v2097 = vld [vmem:[%s2063 + $0x108] sm:$0xff]
        %v2098 = vld [vmem:[%s2063 + $0x110] sm:$0xff]
        %v2099 = vld [vmem:[%s2063 + $0x118] sm:$0xff]
        %v2100 = vld [vmem:[%s2063 + $0x120] sm:$0xff]
        %v2101 = vld [vmem:[%s2063 + $0x128] sm:$0xff]
        %v2102 = vld [vmem:[%s2063 + $0x130] sm:$0xff]
        %v2103 = vld [vmem:[%s2063 + $0x138] sm:$0xff]
        %v2104 = vld [vmem:[%s2063 + $0x140] sm:$0xff]
        %v2105 = vld [vmem:[%s2063 + $0x148] sm:$0xff]
        %v2106 = vld [vmem:[%s2063 + $0x150] sm:$0xff]
        %v2107 = vld [vmem:[%s2063 + $0x158] sm:$0xff]
        %v2108 = vld [vmem:[%s2063 + $0x160] sm:$0xff]
        %v2109 = vld [vmem:[%s2063 + $0x168] sm:$0xff]
        %v2110 = vld [vmem:[%s2063 + $0x170] sm:$0xff]
        %v2111 = vld [vmem:[%s2063 + $0x178] sm:$0xff]
        %v2112 = vld [vmem:[%s2063 + $0x180] sm:$0xff]
        %v2113 = vld [vmem:[%s2063 + $0x188] sm:$0xff]
        %v2114 = vld [vmem:[%s2063 + $0x190] sm:$0xff]
        %v2115 = vld [vmem:[%s2063 + $0x198] sm:$0xff]
        %v2116 = vld [vmem:[%s2063 + $0x1a0] sm:$0xff]
        %v2117 = vld [vmem:[%s2063 + $0x1a8] sm:$0xff]
        %v2118 = vld [vmem:[%s2063 + $0x1b0] sm:$0xff]
        %v2119 = vld [vmem:[%s2063 + $0x1b8] sm:$0xff]
        %v2120 = vld [vmem:[%s2063 + $0x1c0] sm:$0xff]
        %v2121 = vld [vmem:[%s2063 + $0x1c8] sm:$0xff]
        %v2122 = vld [vmem:[%s2063 + $0x1d0] sm:$0x7f]
        %v2123 = vld [vmem:[%s2063 + $0x1d8] sm:$0x7f]
        %vm2124 = vcmask 908288
        %v2126 = vsel %vm2124, %v1982, 0
        %v2129 = vsel %vm2124, %v1984, 0
        %v2132 = vsel %vm2124, %v1986, 0
        %v2135 = vsel %vm2124, %v1988, 0
        %v2138 = vsel %vm2124, %v1990, 0
        %v2141 = vsel %vm2124, %v1992, 0
        %v2144 = vsel %vm2124, %v1994, 0
        %v2147 = vsel %vm2124, %v1996, 0
        %vm2149 = vcmask 1046528
        %v2151 = vsel %vm2149, %v2122, 0
        %v2154 = vsel %vm2149, %v2123, 0
        %2156 = vmatprep.subr.mxu0 %v2065
        %2157 = vmatpush1.msra.mxu0 %v2064
        %2158 = vmatprep.subr.mxu0 %v2067
        %2159 = vmatpush1.msra.mxu0 %v2066
        %2160 = vmatprep.subr.mxu0 %v2069
        %2161 = vmatpush1.msra.mxu0 %v2068
        %2162 = vmatprep.subr.mxu0 %v2071
        %2163 = vmatpush1.msra.mxu0 %v2070
        %2164 = vmatprep.subr.mxu0 %v2073
        %2165 = vmatpush1.msra.mxu0 %v2072
        %2166 = vmatprep.subr.mxu0 %v2075
        %2167 = vmatpush1.msra.mxu0 %v2074
        %2168 = vmatprep.subr.mxu0 %v2077
        %2169 = vmatpush1.msra.mxu0 %v2076
        %2170 = vmatprep.subr.mxu0 %v2079
        %2171 = vmatpush1.msra.mxu0 %v2078
        %2172 = vmatprep.subr.mxu0 %v2081
        %2173 = vmatpush1.msra.mxu0 %v2080
        %2174 = vmatprep.subr.mxu0 %v2083
        %2175 = vmatpush1.msra.mxu0 %v2082
        %2176 = vmatprep.subr.mxu0 %v2085
        %2177 = vmatpush1.msra.mxu0 %v2084
        %2178 = vmatprep.subr.mxu0 %v2087
        %2179 = vmatpush1.msra.mxu0 %v2086
        %2180 = vmatprep.subr.mxu0 %v2089
        %2181 = vmatpush1.msra.mxu0 %v2088
        %2182 = vmatprep.subr.mxu0 %v2091
        %2183 = vmatpush1.msra.mxu0 %v2090
        %2184 = vmatprep.subr.mxu0 %v2093
        %2185 = vmatpush1.msra.mxu0 %v2092
        %2186 = vmatprep.subr.mxu0 %v2095
        %2187 = vmatpush1.msra.mxu0 %v2094
        %2188 = vmatprep.subr.mxu0 %v2097
        %2189 = vmatpush1.msra.mxu0 %v2096
        %2190 = vmatprep.subr.mxu0 %v2099
        %2191 = vmatpush1.msra.mxu0 %v2098
        %2192 = vmatprep.subr.mxu0 %v2101
        %2193 = vmatpush1.msra.mxu0 %v2100
        %2194 = vmatprep.subr.mxu0 %v2103
        %2195 = vmatpush1.msra.mxu0 %v2102
        %2196 = vmatprep.subr.mxu0 %v2105
        %2197 = vmatpush1.msra.mxu0 %v2104
        %2198 = vmatprep.subr.mxu0 %v2107
        %2199 = vmatpush1.msra.mxu0 %v2106
        %2200 = vmatprep.subr.mxu0 %v2109
        %2201 = vmatpush1.msra.mxu0 %v2108
        %2202 = vmatprep.subr.mxu0 %v2111
        %2203 = vmatpush1.msra.mxu0 %v2110
        %2204 = vmatprep.subr.mxu0 %v2113
        %2205 = vmatpush1.msra.mxu0 %v2112
        %2206 = vmatprep.subr.mxu0 %v2115
        %2207 = vmatpush1.msra.mxu0 %v2114
        %2208 = vmatprep.subr.mxu0 %v2117
        %2209 = vmatpush1.msra.mxu0 %v2116
        %2210 = vmatprep.subr.mxu0 %v2119
        %2211 = vmatpush1.msra.mxu0 %v2118
        %2212 = vmatprep.subr.mxu0 %v2121
        %2213 = vmatpush1.msra.mxu0 %v2120
        %2214 = vmatprep.subr.mxu0 %v2154
        %2215 = vmatpush1.msra.mxu0 %v2151
        %2216 = vmatprep.subr.mxu0 0.0
        %2217 = vmatpush1.msra.mxu0 0.0
        %2218 = vmatprep.subr.mxu0 0.0
        %2219 = vmatpush1.msra.mxu0 0.0
        %2220 = vmatprep.mubr.f32.mxu0 %v2126
        %2221 = vmatmul.mubr.f32.gmra.mrb[0].mxu0 %v1981
        %v2222 = vpop.f32.mrb[0].mxu0
        %v2223 = vadd.f32 0.0, %v2222
        %v2224 = vpop.f32.mrb[0].mxu0
        %v2225 = vadd.f32 0.0, %v2224
        %2226 = vmatprep.mubr.f32.mxu0 %v2129
        %2227 = vmatmul.mubr.f32.gmra.mrb[0].mxu0 %v1983
        %v2228 = vpop.f32.mrb[0].mxu0
        %v2229 = vadd.f32 0.0, %v2228
        %v2230 = vpop.f32.mrb[0].mxu0
        %v2231 = vadd.f32 0.0, %v2230
        %2232 = vmatprep.mubr.f32.mxu0 %v2132
        %2233 = vmatmul.mubr.f32.gmra.mrb[0].mxu0 %v1985
        %v2234 = vpop.f32.mrb[0].mxu0
        %v2235 = vadd.f32 0.0, %v2234
        %v2236 = vpop.f32.mrb[0].mxu0
        %v2237 = vadd.f32 0.0, %v2236
        %2238 = vmatprep.mubr.f32.mxu0 %v2135
        %2239 = vmatmul.mubr.f32.gmra.mrb[0].mxu0 %v1987
        %v2240 = vpop.f32.mrb[0].mxu0
        %v2241 = vadd.f32 0.0, %v2240
        %v2242 = vpop.f32.mrb[0].mxu0
        %v2243 = vadd.f32 0.0, %v2242
        %2244 = vmatprep.mubr.f32.mxu0 %v2138
        %2245 = vmatmul.mubr.f32.gmra.mrb[0].mxu0 %v1989
        %v2246 = vpop.f32.mrb[0].mxu0
        %v2247 = vadd.f32 0.0, %v2246
        %v2248 = vpop.f32.mrb[0].mxu0
        %v2249 = vadd.f32 0.0, %v2248
        %2250 = vmatprep.mubr.f32.mxu0 %v2141
        %2251 = vmatmul.mubr.f32.gmra.mrb[0].mxu0 %v1991
        %v2252 = vpop.f32.mrb[0].mxu0
        %v2253 = vadd.f32 0.0, %v2252
        %v2254 = vpop.f32.mrb[0].mxu0
        %v2255 = vadd.f32 0.0, %v2254
        %2256 = vmatprep.mubr.f32.mxu0 %v2144
        %2257 = vmatmul.mubr.f32.gmra.mrb[0].mxu0 %v1993
        %v2258 = vpop.f32.mrb[0].mxu0
        %v2259 = vadd.f32 0.0, %v2258
        %v2260 = vpop.f32.mrb[0].mxu0
        %v2261 = vadd.f32 0.0, %v2260
        %2262 = vmatprep.mubr.f32.mxu0 %v2147
        %2263 = vmatmul.mubr.f32.gmra.mrb[0].mxu0 %v1995
        %v2264 = vpop.f32.mrb[0].mxu0
        %v2265 = vadd.f32 0.0, %v2264
        %v2266 = vpop.f32.mrb[0].mxu0
        %v2267 = vadd.f32 0.0, %v2266
        %2268 = vdwg.mxu0
        %v2270 = vsel %vm2124, %v1980, 0
        %v2273 = vsel %vm2149, %v2061, 0
        %v2276 = vsel %vm2149, %v2062, 0
        %2278 = vmatprep.subr.mxu0 %v2004
        %2279 = vmatpush1.msra.mxu0 %v2003
        %2280 = vmatprep.subr.mxu0 %v2006
        %2281 = vmatpush1.msra.mxu0 %v2005
        %2282 = vmatprep.subr.mxu0 %v2008
        %2283 = vmatpush1.msra.mxu0 %v2007
        %2284 = vmatprep.subr.mxu0 %v2010
        %2285 = vmatpush1.msra.mxu0 %v2009
        %2286 = vmatprep.subr.mxu0 %v2012
        %2287 = vmatpush1.msra.mxu0 %v2011
        %2288 = vmatprep.subr.mxu0 %v2014
        %2289 = vmatpush1.msra.mxu0 %v2013
        %2290 = vmatprep.subr.mxu0 %v2016
        %2291 = vmatpush1.msra.mxu0 %v2015
        %2292 = vmatprep.subr.mxu0 %v2018
        %2293 = vmatpush1.msra.mxu0 %v2017
        %2294 = vmatprep.subr.mxu0 %v2020
        %2295 = vmatpush1.msra.mxu0 %v2019
        %2296 = vmatprep.subr.mxu0 %v2022
        %2297 = vmatpush1.msra.mxu0 %v2021
        %2298 = vmatprep.subr.mxu0 %v2024
        %2299 = vmatpush1.msra.mxu0 %v2023
        %2300 = vmatprep.subr.mxu0 %v2026
        %2301 = vmatpush1.msra.mxu0 %v2025
        %2302 = vmatprep.subr.mxu0 %v2028
        %2303 = vmatpush1.msra.mxu0 %v2027
        %2304 = vmatprep.subr.mxu0 %v2030
        %2305 = vmatpush1.msra.mxu0 %v2029
        %2306 = vmatprep.subr.mxu0 %v2032
        %2307 = vmatpush1.msra.mxu0 %v2031
        %2308 = vmatprep.subr.mxu0 %v2034
        %2309 = vmatpush1.msra.mxu0 %v2033
        %2310 = vmatprep.subr.mxu0 %v2036
        %2311 = vmatpush1.msra.mxu0 %v2035
        %2312 = vmatprep.subr.mxu0 %v2038
        %2313 = vmatpush1.msra.mxu0 %v2037
        %2314 = vmatprep.subr.mxu0 %v2040
        %2315 = vmatpush1.msra.mxu0 %v2039
        %2316 = vmatprep.subr.mxu0 %v2042
        %2317 = vmatpush1.msra.mxu0 %v2041
        %2318 = vmatprep.subr.mxu0 %v2044
        %2319 = vmatpush1.msra.mxu0 %v2043
        %2320 = vmatprep.subr.mxu0 %v2046
        %2321 = vmatpush1.msra.mxu0 %v2045
        %2322 = vmatprep.subr.mxu0 %v2048
        %2323 = vmatpush1.msra.mxu0 %v2047
        %2324 = vmatprep.subr.mxu0 %v2050
        %2325 = vmatpush1.msra.mxu0 %v2049
        %2326 = vmatprep.subr.mxu0 %v2052
        %2327 = vmatpush1.msra.mxu0 %v2051
        %2328 = vmatprep.subr.mxu0 %v2054
        %2329 = vmatpush1.msra.mxu0 %v2053
        %2330 = vmatprep.subr.mxu0 %v2056
        %2331 = vmatpush1.msra.mxu0 %v2055
        %2332 = vmatprep.subr.mxu0 %v2058
        %2333 = vmatpush1.msra.mxu0 %v2057
        %2334 = vmatprep.subr.mxu0 %v2060
        %2335 = vmatpush1.msra.mxu0 %v2059
        %2336 = vmatprep.subr.mxu0 %v2276
        %2337 = vmatpush1.msra.mxu0 %v2273
        %2338 = vmatprep.subr.mxu0 0.0
        %2339 = vmatpush1.msra.mxu0 0.0
        %2340 = vmatprep.subr.mxu0 0.0
        %2341 = vmatpush1.msra.mxu0 0.0
        %2342 = vmatprep.mubr.f32.mxu0 %v2270
        %2343 = vmatmul.mubr.f32.gmra.mrb[0].mxu0 %v1979
        %v2344 = vpop.f32.mrb[0].mxu0
        %v2345 = vadd.f32 %v2223, %v2344
        %v2346 = vpop.f32.mrb[0].mxu0
        %v2347 = vadd.f32 %v2225, %v2346
        %2348 = vmatprep.mubr.f32.mxu0 %v2126
        %2349 = vmatmul.mubr.f32.gmra.mrb[0].mxu0 %v1981
        %v2350 = vpop.f32.mrb[0].mxu0
        %v2351 = vadd.f32 %v2229, %v2350
        %v2352 = vpop.f32.mrb[0].mxu0
        %v2353 = vadd.f32 %v2231, %v2352
        %2354 = vmatprep.mubr.f32.mxu0 %v2129
        %2355 = vmatmul.mubr.f32.gmra.mrb[0].mxu0 %v1983
        %v2356 = vpop.f32.mrb[0].mxu0
        %v2357 = vadd.f32 %v2235, %v2356
        %v2358 = vpop.f32.mrb[0].mxu0
        %v2359 = vadd.f32 %v2237, %v2358
        %2360 = vmatprep.mubr.f32.mxu0 %v2132
        %2361 = vmatmul.mubr.f32.gmra.mrb[0].mxu0 %v1985
        %v2362 = vpop.f32.mrb[0].mxu0
        %v2363 = vadd.f32 %v2241, %v2362
        %v2364 = vpop.f32.mrb[0].mxu0
        %v2365 = vadd.f32 %v2243, %v2364
        %2366 = vmatprep.mubr.f32.mxu0 %v2135
        %2367 = vmatmul.mubr.f32.gmra.mrb[0].mxu0 %v1987
        %v2368 = vpop.f32.mrb[0].mxu0
        %v2369 = vadd.f32 %v2247, %v2368
        %v2370 = vpop.f32.mrb[0].mxu0
        %v2371 = vadd.f32 %v2249, %v2370
        %2372 = vmatprep.mubr.f32.mxu0 %v2138
        %2373 = vmatmul.mubr.f32.gmra.mrb[0].mxu0 %v1989
        %v2374 = vpop.f32.mrb[0].mxu0
        %v2375 = vadd.f32 %v2253, %v2374
        %v2376 = vpop.f32.mrb[0].mxu0
        %v2377 = vadd.f32 %v2255, %v2376
        %2378 = vmatprep.mubr.f32.mxu0 %v2141
        %2379 = vmatmul.mubr.f32.gmra.mrb[0].mxu0 %v1991
        %v2380 = vpop.f32.mrb[0].mxu0
        %v2381 = vadd.f32 %v2259, %v2380
        %v2382 = vpop.f32.mrb[0].mxu0
        %v2383 = vadd.f32 %v2261, %v2382
        %2384 = vmatprep.mubr.f32.mxu0 %v2144
        %2385 = vmatmul.mubr.f32.gmra.mrb[0].mxu0 %v1993
        %v2386 = vpop.f32.mrb[0].mxu0
        %v2387 = vadd.f32 %v2265, %v2386
        %v2388 = vpop.f32.mrb[0].mxu0
        %v2389 = vadd.f32 %v2267, %v2388
        %2390 = vdwg.mxu0
        %s2391 = scalar_lea.vmem %s3, 960
        %v2392 = vld [vmem:[%s2391] sm:$0xff]
        %v2393 = vld [vmem:[%s2391 + $0x8] sm:$0xff]
        %v2394 = vld [vmem:[%s2391 + $0x10] sm:$0xff]
        %v2395 = vld [vmem:[%s2391 + $0x18] sm:$0xff]
        %v2396 = vld [vmem:[%s2391 + $0x20] sm:$0xff]
        %v2397 = vld [vmem:[%s2391 + $0x28] sm:$0xff]
        %v2398 = vld [vmem:[%s2391 + $0x30] sm:$0xff]
        %v2399 = vld [vmem:[%s2391 + $0x38] sm:$0xff]
        %v2400 = vld [vmem:[%s2391 + $0x40] sm:$0xff]
        %v2401 = vld [vmem:[%s2391 + $0x48] sm:$0xff]
        %v2402 = vld [vmem:[%s2391 + $0x50] sm:$0xff]
        %v2403 = vld [vmem:[%s2391 + $0x58] sm:$0xff]
        %v2404 = vld [vmem:[%s2391 + $0x60] sm:$0xff]
        %v2405 = vld [vmem:[%s2391 + $0x68] sm:$0xff]
        %v2406 = vld [vmem:[%s2391 + $0x70] sm:$0xff]
        %v2407 = vld [vmem:[%s2391 + $0x78] sm:$0xff]
        %v2408 = vld [vmem:[%s2391 + $0x80] sm:$0xff]
        %v2409 = vld [vmem:[%s2391 + $0x88] sm:$0xff]
        %v2410 = vld [vmem:[%s2391 + $0x90] sm:$0xff]
        %v2411 = vld [vmem:[%s2391 + $0x98] sm:$0xff]
        %v2412 = vld [vmem:[%s2391 + $0xa0] sm:$0xff]
        %v2413 = vld [vmem:[%s2391 + $0xa8] sm:$0xff]
        %v2414 = vld [vmem:[%s2391 + $0xb0] sm:$0xff]
        %v2415 = vld [vmem:[%s2391 + $0xb8] sm:$0xff]
        %v2416 = vld [vmem:[%s2391 + $0xc0] sm:$0xff]
        %v2417 = vld [vmem:[%s2391 + $0xc8] sm:$0xff]
        %v2418 = vld [vmem:[%s2391 + $0xd0] sm:$0xff]
        %v2419 = vld [vmem:[%s2391 + $0xd8] sm:$0xff]
        %v2420 = vld [vmem:[%s2391 + $0xe0] sm:$0xff]
        %v2421 = vld [vmem:[%s2391 + $0xe8] sm:$0xff]
        %v2422 = vld [vmem:[%s2391 + $0xf0] sm:$0xff]
        %v2423 = vld [vmem:[%s2391 + $0xf8] sm:$0xff]
        %v2424 = vld [vmem:[%s2391 + $0x100] sm:$0xff]
        %v2425 = vld [vmem:[%s2391 + $0x108] sm:$0xff]
        %v2426 = vld [vmem:[%s2391 + $0x110] sm:$0xff]
        %v2427 = vld [vmem:[%s2391 + $0x118] sm:$0xff]
        %v2428 = vld [vmem:[%s2391 + $0x120] sm:$0xff]
        %v2429 = vld [vmem:[%s2391 + $0x128] sm:$0xff]
        %v2430 = vld [vmem:[%s2391 + $0x130] sm:$0xff]
        %v2431 = vld [vmem:[%s2391 + $0x138] sm:$0xff]
        %v2432 = vld [vmem:[%s2391 + $0x140] sm:$0xff]
        %v2433 = vld [vmem:[%s2391 + $0x148] sm:$0xff]
        %v2434 = vld [vmem:[%s2391 + $0x150] sm:$0xff]
        %v2435 = vld [vmem:[%s2391 + $0x158] sm:$0xff]
        %v2436 = vld [vmem:[%s2391 + $0x160] sm:$0xff]
        %v2437 = vld [vmem:[%s2391 + $0x168] sm:$0xff]
        %v2438 = vld [vmem:[%s2391 + $0x170] sm:$0xff]
        %v2439 = vld [vmem:[%s2391 + $0x178] sm:$0xff]
        %v2440 = vld [vmem:[%s2391 + $0x180] sm:$0xff]
        %v2441 = vld [vmem:[%s2391 + $0x188] sm:$0xff]
        %v2442 = vld [vmem:[%s2391 + $0x190] sm:$0xff]
        %v2443 = vld [vmem:[%s2391 + $0x198] sm:$0xff]
        %v2444 = vld [vmem:[%s2391 + $0x1a0] sm:$0xff]
        %v2445 = vld [vmem:[%s2391 + $0x1a8] sm:$0xff]
        %v2446 = vld [vmem:[%s2391 + $0x1b0] sm:$0xff]
        %v2447 = vld [vmem:[%s2391 + $0x1b8] sm:$0xff]
        %v2448 = vld [vmem:[%s2391 + $0x1c0] sm:$0xff]
        %v2449 = vld [vmem:[%s2391 + $0x1c8] sm:$0xff]
        %v2450 = vld [vmem:[%s2391 + $0x1d0] sm:$0x7f]
        %v2451 = vld [vmem:[%s2391 + $0x1d8] sm:$0x7f]
        %v2453 = vsel %vm2124, %v1998, 0
        %v2456 = vsel %vm2149, %v2450, 0
        %v2459 = vsel %vm2149, %v2451, 0
        %2461 = vmatprep.subr.mxu0 %v2393
        %2462 = vmatpush1.msra.mxu0 %v2392
        %2463 = vmatprep.subr.mxu0 %v2395
        %2464 = vmatpush1.msra.mxu0 %v2394
        %2465 = vmatprep.subr.mxu0 %v2397
        %2466 = vmatpush1.msra.mxu0 %v2396
        %2467 = vmatprep.subr.mxu0 %v2399
        %2468 = vmatpush1.msra.mxu0 %v2398
        %2469 = vmatprep.subr.mxu0 %v2401
        %2470 = vmatpush1.msra.mxu0 %v2400
        %2471 = vmatprep.subr.mxu0 %v2403
        %2472 = vmatpush1.msra.mxu0 %v2402
        %2473 = vmatprep.subr.mxu0 %v2405
        %2474 = vmatpush1.msra.mxu0 %v2404
        %2475 = vmatprep.subr.mxu0 %v2407
        %2476 = vmatpush1.msra.mxu0 %v2406
        %2477 = vmatprep.subr.mxu0 %v2409
        %2478 = vmatpush1.msra.mxu0 %v2408
        %2479 = vmatprep.subr.mxu0 %v2411
        %2480 = vmatpush1.msra.mxu0 %v2410
        %2481 = vmatprep.subr.mxu0 %v2413
        %2482 = vmatpush1.msra.mxu0 %v2412
        %2483 = vmatprep.subr.mxu0 %v2415
        %2484 = vmatpush1.msra.mxu0 %v2414
        %2485 = vmatprep.subr.mxu0 %v2417
        %2486 = vmatpush1.msra.mxu0 %v2416
        %2487 = vmatprep.subr.mxu0 %v2419
        %2488 = vmatpush1.msra.mxu0 %v2418
        %2489 = vmatprep.subr.mxu0 %v2421
        %2490 = vmatpush1.msra.mxu0 %v2420
        %2491 = vmatprep.subr.mxu0 %v2423
        %2492 = vmatpush1.msra.mxu0 %v2422
        %2493 = vmatprep.subr.mxu0 %v2425
        %2494 = vmatpush1.msra.mxu0 %v2424
        %2495 = vmatprep.subr.mxu0 %v2427
        %2496 = vmatpush1.msra.mxu0 %v2426
        %2497 = vmatprep.subr.mxu0 %v2429
        %2498 = vmatpush1.msra.mxu0 %v2428
        %2499 = vmatprep.subr.mxu0 %v2431
        %2500 = vmatpush1.msra.mxu0 %v2430
        %2501 = vmatprep.subr.mxu0 %v2433
        %2502 = vmatpush1.msra.mxu0 %v2432
        %2503 = vmatprep.subr.mxu0 %v2435
        %2504 = vmatpush1.msra.mxu0 %v2434
        %2505 = vmatprep.subr.mxu0 %v2437
        %2506 = vmatpush1.msra.mxu0 %v2436
        %2507 = vmatprep.subr.mxu0 %v2439
        %2508 = vmatpush1.msra.mxu0 %v2438
        %2509 = vmatprep.subr.mxu0 %v2441
        %2510 = vmatpush1.msra.mxu0 %v2440
        %2511 = vmatprep.subr.mxu0 %v2443
        %2512 = vmatpush1.msra.mxu0 %v2442
        %2513 = vmatprep.subr.mxu0 %v2445
        %2514 = vmatpush1.msra.mxu0 %v2444
        %2515 = vmatprep.subr.mxu0 %v2447
        %2516 = vmatpush1.msra.mxu0 %v2446
        %2517 = vmatprep.subr.mxu0 %v2449
        %2518 = vmatpush1.msra.mxu0 %v2448
        %2519 = vmatprep.subr.mxu0 %v2459
        %2520 = vmatpush1.msra.mxu0 %v2456
        %2521 = vmatprep.subr.mxu0 0.0
        %2522 = vmatpush1.msra.mxu0 0.0
        %2523 = vmatprep.subr.mxu0 0.0
        %2524 = vmatpush1.msra.mxu0 0.0
        %2525 = vmatprep.mubr.f32.mxu0 %v2129
        %2526 = vmatmul.mubr.f32.gmra.mrb[0].mxu0 %v1983
        %v2527 = vpop.f32.mrb[0].mxu0
        %v2528 = vadd.f32 0.0, %v2527
        %v2529 = vpop.f32.mrb[0].mxu0
        %v2530 = vadd.f32 0.0, %v2529
        %2531 = vmatprep.mubr.f32.mxu0 %v2132
        %2532 = vmatmul.mubr.f32.gmra.mrb[0].mxu0 %v1985
        %v2533 = vpop.f32.mrb[0].mxu0
        %v2534 = vadd.f32 0.0, %v2533
        %v2535 = vpop.f32.mrb[0].mxu0
        %v2536 = vadd.f32 0.0, %v2535
        %2537 = vmatprep.mubr.f32.mxu0 %v2135
        %2538 = vmatmul.mubr.f32.gmra.mrb[0].mxu0 %v1987
        %v2539 = vpop.f32.mrb[0].mxu0
        %v2540 = vadd.f32 0.0, %v2539
        %v2541 = vpop.f32.mrb[0].mxu0
        %v2542 = vadd.f32 0.0, %v2541
        %2543 = vmatprep.mubr.f32.mxu0 %v2138
        %2544 = vmatmul.mubr.f32.gmra.mrb[0].mxu0 %v1989
        %v2545 = vpop.f32.mrb[0].mxu0
        %v2546 = vadd.f32 0.0, %v2545
        %v2547 = vpop.f32.mrb[0].mxu0
        %v2548 = vadd.f32 0.0, %v2547
        %2549 = vmatprep.mubr.f32.mxu0 %v2141
        %2550 = vmatmul.mubr.f32.gmra.mrb[0].mxu0 %v1991
        %v2551 = vpop.f32.mrb[0].mxu0
        %v2552 = vadd.f32 0.0, %v2551
        %v2553 = vpop.f32.mrb[0].mxu0
        %v2554 = vadd.f32 0.0, %v2553
        %2555 = vmatprep.mubr.f32.mxu0 %v2144
        %2556 = vmatmul.mubr.f32.gmra.mrb[0].mxu0 %v1993
        %v2557 = vpop.f32.mrb[0].mxu0
        %v2558 = vadd.f32 0.0, %v2557
        %v2559 = vpop.f32.mrb[0].mxu0
        %v2560 = vadd.f32 0.0, %v2559
        %2561 = vmatprep.mubr.f32.mxu0 %v2147
        %2562 = vmatmul.mubr.f32.gmra.mrb[0].mxu0 %v1995
        %v2563 = vpop.f32.mrb[0].mxu0
        %v2564 = vadd.f32 0.0, %v2563
        %v2565 = vpop.f32.mrb[0].mxu0
        %v2566 = vadd.f32 0.0, %v2565
        %2567 = vmatprep.mubr.f32.mxu0 %v2453
        %2568 = vmatmul.mubr.f32.gmra.mrb[0].mxu0 %v1997
        %v2569 = vpop.f32.mrb[0].mxu0
        %v2570 = vadd.f32 0.0, %v2569
        %v2571 = vpop.f32.mrb[0].mxu0
        %v2572 = vadd.f32 0.0, %v2571
        %2573 = vdwg.mxu0
        %v2574 = vadd.f32 %v2345, %v2528
        %v2575 = vadd.f32 %v2347, %v2530
        %v2576 = vadd.f32 %v2351, %v2534
        %v2577 = vadd.f32 %v2353, %v2536
        %v2578 = vadd.f32 %v2357, %v2540
        %v2579 = vadd.f32 %v2359, %v2542
        %v2580 = vadd.f32 %v2363, %v2546
        %v2581 = vadd.f32 %v2365, %v2548
        %v2582 = vadd.f32 %v2369, %v2552
        %v2583 = vadd.f32 %v2371, %v2554
        %v2584 = vadd.f32 %v2375, %v2558
        %v2585 = vadd.f32 %v2377, %v2560
        %v2586 = vadd.f32 %v2381, %v2564
        %v2587 = vadd.f32 %v2383, %v2566
        %v2588 = vadd.f32 %v2387, %v2570
        %v2589 = vadd.f32 %v2389, %v2572
        %s2590 = scalar_lea.vmem %s3, 1440
        %v2591 = vld [vmem:[%s2590] sm:$0xff]
        %v2592 = vld [vmem:[%s2590 + $0x8] sm:$0xff]
        %v2593 = vld [vmem:[%s2590 + $0x10] sm:$0xff]
        %v2594 = vld [vmem:[%s2590 + $0x18] sm:$0xff]
        %v2595 = vld [vmem:[%s2590 + $0x20] sm:$0xff]
        %v2596 = vld [vmem:[%s2590 + $0x28] sm:$0xff]
        %v2597 = vld [vmem:[%s2590 + $0x30] sm:$0xff]
        %v2598 = vld [vmem:[%s2590 + $0x38] sm:$0xff]
        %v2599 = vld [vmem:[%s2590 + $0x40] sm:$0xff]
        %v2600 = vld [vmem:[%s2590 + $0x48] sm:$0xff]
        %v2601 = vld [vmem:[%s2590 + $0x50] sm:$0xff]
        %v2602 = vld [vmem:[%s2590 + $0x58] sm:$0xff]
        %v2603 = vld [vmem:[%s2590 + $0x60] sm:$0xff]
        %v2604 = vld [vmem:[%s2590 + $0x68] sm:$0xff]
        %v2605 = vld [vmem:[%s2590 + $0x70] sm:$0xff]
        %v2606 = vld [vmem:[%s2590 + $0x78] sm:$0xff]
        %v2607 = vld [vmem:[%s2590 + $0x80] sm:$0xff]
        %v2608 = vld [vmem:[%s2590 + $0x88] sm:$0xff]
        %v2609 = vld [vmem:[%s2590 + $0x90] sm:$0xff]
        %v2610 = vld [vmem:[%s2590 + $0x98] sm:$0xff]
        %v2611 = vld [vmem:[%s2590 + $0xa0] sm:$0xff]
        %v2612 = vld [vmem:[%s2590 + $0xa8] sm:$0xff]
        %v2613 = vld [vmem:[%s2590 + $0xb0] sm:$0xff]
        %v2614 = vld [vmem:[%s2590 + $0xb8] sm:$0xff]
        %v2615 = vld [vmem:[%s2590 + $0xc0] sm:$0xff]
        %v2616 = vld [vmem:[%s2590 + $0xc8] sm:$0xff]
        %v2617 = vld [vmem:[%s2590 + $0xd0] sm:$0xff]
        %v2618 = vld [vmem:[%s2590 + $0xd8] sm:$0xff]
        %v2619 = vld [vmem:[%s2590 + $0xe0] sm:$0xff]
        %v2620 = vld [vmem:[%s2590 + $0xe8] sm:$0xff]
        %v2621 = vld [vmem:[%s2590 + $0xf0] sm:$0xff]
        %v2622 = vld [vmem:[%s2590 + $0xf8] sm:$0xff]
        %v2623 = vld [vmem:[%s2590 + $0x100] sm:$0xff]
        %v2624 = vld [vmem:[%s2590 + $0x108] sm:$0xff]
        %v2625 = vld [vmem:[%s2590 + $0x110] sm:$0xff]
        %v2626 = vld [vmem:[%s2590 + $0x118] sm:$0xff]
        %v2627 = vld [vmem:[%s2590 + $0x120] sm:$0xff]
        %v2628 = vld [vmem:[%s2590 + $0x128] sm:$0xff]
        %v2629 = vld [vmem:[%s2590 + $0x130] sm:$0xff]
        %v2630 = vld [vmem:[%s2590 + $0x138] sm:$0xff]
        %v2631 = vld [vmem:[%s2590 + $0x140] sm:$0xff]
        %v2632 = vld [vmem:[%s2590 + $0x148] sm:$0xff]
        %v2633 = vld [vmem:[%s2590 + $0x150] sm:$0xff]
        %v2634 = vld [vmem:[%s2590 + $0x158] sm:$0xff]
        %v2635 = vld [vmem:[%s2590 + $0x160] sm:$0xff]
        %v2636 = vld [vmem:[%s2590 + $0x168] sm:$0xff]
        %v2637 = vld [vmem:[%s2590 + $0x170] sm:$0xff]
        %v2638 = vld [vmem:[%s2590 + $0x178] sm:$0xff]
        %v2639 = vld [vmem:[%s2590 + $0x180] sm:$0xff]
        %v2640 = vld [vmem:[%s2590 + $0x188] sm:$0xff]
        %v2641 = vld [vmem:[%s2590 + $0x190] sm:$0xff]
        %v2642 = vld [vmem:[%s2590 + $0x198] sm:$0xff]
        %v2643 = vld [vmem:[%s2590 + $0x1a0] sm:$0xff]
        %v2644 = vld [vmem:[%s2590 + $0x1a8] sm:$0xff]
        %v2645 = vld [vmem:[%s2590 + $0x1b0] sm:$0xff]
        %v2646 = vld [vmem:[%s2590 + $0x1b8] sm:$0xff]
        %v2647 = vld [vmem:[%s2590 + $0x1c0] sm:$0xff]
        %v2648 = vld [vmem:[%s2590 + $0x1c8] sm:$0xff]
        %v2649 = vld [vmem:[%s2590 + $0x1d0] sm:$0x7f]
        %v2650 = vld [vmem:[%s2590 + $0x1d8] sm:$0x7f]
        %v2652 = vsel %vm2124, %v2000, 0
        %v2655 = vsel %vm2149, %v2649, 0
        %v2658 = vsel %vm2149, %v2650, 0
        %2660 = vmatprep.subr.mxu0 %v2592
        %2661 = vmatpush1.msra.mxu0 %v2591
        %2662 = vmatprep.subr.mxu0 %v2594
        %2663 = vmatpush1.msra.mxu0 %v2593
        %2664 = vmatprep.subr.mxu0 %v2596
        %2665 = vmatpush1.msra.mxu0 %v2595
        %2666 = vmatprep.subr.mxu0 %v2598
        %2667 = vmatpush1.msra.mxu0 %v2597
        %2668 = vmatprep.subr.mxu0 %v2600
        %2669 = vmatpush1.msra.mxu0 %v2599
        %2670 = vmatprep.subr.mxu0 %v2602
        %2671 = vmatpush1.msra.mxu0 %v2601
        %2672 = vmatprep.subr.mxu0 %v2604
        %2673 = vmatpush1.msra.mxu0 %v2603
        %2674 = vmatprep.subr.mxu0 %v2606
        %2675 = vmatpush1.msra.mxu0 %v2605
        %2676 = vmatprep.subr.mxu0 %v2608
        %2677 = vmatpush1.msra.mxu0 %v2607
        %2678 = vmatprep.subr.mxu0 %v2610
        %2679 = vmatpush1.msra.mxu0 %v2609
        %2680 = vmatprep.subr.mxu0 %v2612
        %2681 = vmatpush1.msra.mxu0 %v2611
        %2682 = vmatprep.subr.mxu0 %v2614
        %2683 = vmatpush1.msra.mxu0 %v2613
        %2684 = vmatprep.subr.mxu0 %v2616
        %2685 = vmatpush1.msra.mxu0 %v2615
        %2686 = vmatprep.subr.mxu0 %v2618
        %2687 = vmatpush1.msra.mxu0 %v2617
        %2688 = vmatprep.subr.mxu0 %v2620
        %2689 = vmatpush1.msra.mxu0 %v2619
        %2690 = vmatprep.subr.mxu0 %v2622
        %2691 = vmatpush1.msra.mxu0 %v2621
        %2692 = vmatprep.subr.mxu0 %v2624
        %2693 = vmatpush1.msra.mxu0 %v2623
        %2694 = vmatprep.subr.mxu0 %v2626
        %2695 = vmatpush1.msra.mxu0 %v2625
        %2696 = vmatprep.subr.mxu0 %v2628
        %2697 = vmatpush1.msra.mxu0 %v2627
        %2698 = vmatprep.subr.mxu0 %v2630
        %2699 = vmatpush1.msra.mxu0 %v2629
        %2700 = vmatprep.subr.mxu0 %v2632
        %2701 = vmatpush1.msra.mxu0 %v2631
        %2702 = vmatprep.subr.mxu0 %v2634
        %2703 = vmatpush1.msra.mxu0 %v2633
        %2704 = vmatprep.subr.mxu0 %v2636
        %2705 = vmatpush1.msra.mxu0 %v2635
        %2706 = vmatprep.subr.mxu0 %v2638
        %2707 = vmatpush1.msra.mxu0 %v2637
        %2708 = vmatprep.subr.mxu0 %v2640
        %2709 = vmatpush1.msra.mxu0 %v2639
        %2710 = vmatprep.subr.mxu0 %v2642
        %2711 = vmatpush1.msra.mxu0 %v2641
        %2712 = vmatprep.subr.mxu0 %v2644
        %2713 = vmatpush1.msra.mxu0 %v2643
        %2714 = vmatprep.subr.mxu0 %v2646
        %2715 = vmatpush1.msra.mxu0 %v2645
        %2716 = vmatprep.subr.mxu0 %v2648
        %2717 = vmatpush1.msra.mxu0 %v2647
        %2718 = vmatprep.subr.mxu0 %v2658
        %2719 = vmatpush1.msra.mxu0 %v2655
        %2720 = vmatprep.subr.mxu0 0.0
        %2721 = vmatpush1.msra.mxu0 0.0
        %2722 = vmatprep.subr.mxu0 0.0
        %2723 = vmatpush1.msra.mxu0 0.0
        %2724 = vmatprep.mubr.f32.mxu0 %v2132
        %2725 = vmatmul.mubr.f32.gmra.mrb[0].mxu0 %v1985
        %v2726 = vpop.f32.mrb[0].mxu0
        %v2727 = vadd.f32 0.0, %v2726
        %v2728 = vpop.f32.mrb[0].mxu0
        %v2729 = vadd.f32 0.0, %v2728
        %2730 = vmatprep.mubr.f32.mxu0 %v2135
        %2731 = vmatmul.mubr.f32.gmra.mrb[0].mxu0 %v1987
        %v2732 = vpop.f32.mrb[0].mxu0
        %v2733 = vadd.f32 0.0, %v2732
        %v2734 = vpop.f32.mrb[0].mxu0
        %v2735 = vadd.f32 0.0, %v2734
        %2736 = vmatprep.mubr.f32.mxu0 %v2138
        %2737 = vmatmul.mubr.f32.gmra.mrb[0].mxu0 %v1989
        %v2738 = vpop.f32.mrb[0].mxu0
        %v2739 = vadd.f32 0.0, %v2738
        %v2740 = vpop.f32.mrb[0].mxu0
        %v2741 = vadd.f32 0.0, %v2740
        %2742 = vmatprep.mubr.f32.mxu0 %v2141
        %2743 = vmatmul.mubr.f32.gmra.mrb[0].mxu0 %v1991
        %v2744 = vpop.f32.mrb[0].mxu0
        %v2745 = vadd.f32 0.0, %v2744
        %v2746 = vpop.f32.mrb[0].mxu0
        %v2747 = vadd.f32 0.0, %v2746
        %2748 = vmatprep.mubr.f32.mxu0 %v2144
        %2749 = vmatmul.mubr.f32.gmra.mrb[0].mxu0 %v1993
        %v2750 = vpop.f32.mrb[0].mxu0
        %v2751 = vadd.f32 0.0, %v2750
        %v2752 = vpop.f32.mrb[0].mxu0
        %v2753 = vadd.f32 0.0, %v2752
        %2754 = vmatprep.mubr.f32.mxu0 %v2147
        %2755 = vmatmul.mubr.f32.gmra.mrb[0].mxu0 %v1995
        %v2756 = vpop.f32.mrb[0].mxu0
        %v2757 = vadd.f32 0.0, %v2756
        %v2758 = vpop.f32.mrb[0].mxu0
        %v2759 = vadd.f32 0.0, %v2758
        %2760 = vmatprep.mubr.f32.mxu0 %v2453
        %2761 = vmatmul.mubr.f32.gmra.mrb[0].mxu0 %v1997
        %v2762 = vpop.f32.mrb[0].mxu0
        %v2763 = vadd.f32 0.0, %v2762
        %v2764 = vpop.f32.mrb[0].mxu0
        %v2765 = vadd.f32 0.0, %v2764
        %2766 = vmatprep.mubr.f32.mxu0 %v2652
        %2767 = vmatmul.mubr.f32.gmra.mrb[0].mxu0 %v1999
        %v2768 = vpop.f32.mrb[0].mxu0
        %v2769 = vadd.f32 0.0, %v2768
        %v2770 = vpop.f32.mrb[0].mxu0
        %v2771 = vadd.f32 0.0, %v2770
        %2772 = vdwg.mxu0
        %v2773 = vadd.f32 %v2574, %v2727
        %v2774 = vadd.f32 %v2575, %v2729
        %v2775 = vadd.f32 %v2576, %v2733
        %v2776 = vadd.f32 %v2577, %v2735
        %v2777 = vadd.f32 %v2578, %v2739
        %v2778 = vadd.f32 %v2579, %v2741
        %v2779 = vadd.f32 %v2580, %v2745
        %v2780 = vadd.f32 %v2581, %v2747
        %v2781 = vadd.f32 %v2582, %v2751
        %v2782 = vadd.f32 %v2583, %v2753
        %v2783 = vadd.f32 %v2584, %v2757
        %v2784 = vadd.f32 %v2585, %v2759
        %v2785 = vadd.f32 %v2586, %v2763
        %v2786 = vadd.f32 %v2587, %v2765
        %v2787 = vadd.f32 %v2588, %v2769
        %v2788 = vadd.f32 %v2589, %v2771
        %s2789 = scalar_lea.vmem %s3, 1920
        %v2790 = vld [vmem:[%s2789] sm:$0xff]
        %v2791 = vld [vmem:[%s2789 + $0x8] sm:$0xff]
        %v2792 = vld [vmem:[%s2789 + $0x10] sm:$0xff]
        %v2793 = vld [vmem:[%s2789 + $0x18] sm:$0xff]
        %v2794 = vld [vmem:[%s2789 + $0x20] sm:$0xff]
        %v2795 = vld [vmem:[%s2789 + $0x28] sm:$0xff]
        %v2796 = vld [vmem:[%s2789 + $0x30] sm:$0xff]
        %v2797 = vld [vmem:[%s2789 + $0x38] sm:$0xff]
        %v2798 = vld [vmem:[%s2789 + $0x40] sm:$0xff]
        %v2799 = vld [vmem:[%s2789 + $0x48] sm:$0xff]
        %v2800 = vld [vmem:[%s2789 + $0x50] sm:$0xff]
        %v2801 = vld [vmem:[%s2789 + $0x58] sm:$0xff]
        %v2802 = vld [vmem:[%s2789 + $0x60] sm:$0xff]
        %v2803 = vld [vmem:[%s2789 + $0x68] sm:$0xff]
        %v2804 = vld [vmem:[%s2789 + $0x70] sm:$0xff]
        %v2805 = vld [vmem:[%s2789 + $0x78] sm:$0xff]
        %v2806 = vld [vmem:[%s2789 + $0x80] sm:$0xff]
        %v2807 = vld [vmem:[%s2789 + $0x88] sm:$0xff]
        %v2808 = vld [vmem:[%s2789 + $0x90] sm:$0xff]
        %v2809 = vld [vmem:[%s2789 + $0x98] sm:$0xff]
        %v2810 = vld [vmem:[%s2789 + $0xa0] sm:$0xff]
        %v2811 = vld [vmem:[%s2789 + $0xa8] sm:$0xff]
        %v2812 = vld [vmem:[%s2789 + $0xb0] sm:$0xff]
        %v2813 = vld [vmem:[%s2789 + $0xb8] sm:$0xff]
        %v2814 = vld [vmem:[%s2789 + $0xc0] sm:$0xff]
        %v2815 = vld [vmem:[%s2789 + $0xc8] sm:$0xff]
        %v2816 = vld [vmem:[%s2789 + $0xd0] sm:$0xff]
        %v2817 = vld [vmem:[%s2789 + $0xd8] sm:$0xff]
        %v2818 = vld [vmem:[%s2789 + $0xe0] sm:$0xff]
        %v2819 = vld [vmem:[%s2789 + $0xe8] sm:$0xff]
        %v2820 = vld [vmem:[%s2789 + $0xf0] sm:$0xff]
        %v2821 = vld [vmem:[%s2789 + $0xf8] sm:$0xff]
        %v2822 = vld [vmem:[%s2789 + $0x100] sm:$0xff]
        %v2823 = vld [vmem:[%s2789 + $0x108] sm:$0xff]
        %v2824 = vld [vmem:[%s2789 + $0x110] sm:$0xff]
        %v2825 = vld [vmem:[%s2789 + $0x118] sm:$0xff]
        %v2826 = vld [vmem:[%s2789 + $0x120] sm:$0xff]
        %v2827 = vld [vmem:[%s2789 + $0x128] sm:$0xff]
        %v2828 = vld [vmem:[%s2789 + $0x130] sm:$0xff]
        %v2829 = vld [vmem:[%s2789 + $0x138] sm:$0xff]
        %v2830 = vld [vmem:[%s2789 + $0x140] sm:$0xff]
        %v2831 = vld [vmem:[%s2789 + $0x148] sm:$0xff]
        %v2832 = vld [vmem:[%s2789 + $0x150] sm:$0xff]
        %v2833 = vld [vmem:[%s2789 + $0x158] sm:$0xff]
        %v2834 = vld [vmem:[%s2789 + $0x160] sm:$0xff]
        %v2835 = vld [vmem:[%s2789 + $0x168] sm:$0xff]
        %v2836 = vld [vmem:[%s2789 + $0x170] sm:$0xff]
        %v2837 = vld [vmem:[%s2789 + $0x178] sm:$0xff]
        %v2838 = vld [vmem:[%s2789 + $0x180] sm:$0xff]
        %v2839 = vld [vmem:[%s2789 + $0x188] sm:$0xff]
        %v2840 = vld [vmem:[%s2789 + $0x190] sm:$0xff]
        %v2841 = vld [vmem:[%s2789 + $0x198] sm:$0xff]
        %v2842 = vld [vmem:[%s2789 + $0x1a0] sm:$0xff]
        %v2843 = vld [vmem:[%s2789 + $0x1a8] sm:$0xff]
        %v2844 = vld [vmem:[%s2789 + $0x1b0] sm:$0xff]
        %v2845 = vld [vmem:[%s2789 + $0x1b8] sm:$0xff]
        %v2846 = vld [vmem:[%s2789 + $0x1c0] sm:$0xff]
        %v2847 = vld [vmem:[%s2789 + $0x1c8] sm:$0xff]
        %v2848 = vld [vmem:[%s2789 + $0x1d0] sm:$0x7f]
        %v2849 = vld [vmem:[%s2789 + $0x1d8] sm:$0x7f]
        %v2851 = vsel %vm2124, %v2002, 0
        %v2854 = vsel %vm2149, %v2848, 0
        %v2857 = vsel %vm2149, %v2849, 0
        %2859 = vmatprep.subr.mxu0 %v2791
        %2860 = vmatpush1.msra.mxu0 %v2790
        %2861 = vmatprep.subr.mxu0 %v2793
        %2862 = vmatpush1.msra.mxu0 %v2792
        %2863 = vmatprep.subr.mxu0 %v2795
        %2864 = vmatpush1.msra.mxu0 %v2794
        %2865 = vmatprep.subr.mxu0 %v2797
        %2866 = vmatpush1.msra.mxu0 %v2796
        %2867 = vmatprep.subr.mxu0 %v2799
        %2868 = vmatpush1.msra.mxu0 %v2798
        %2869 = vmatprep.subr.mxu0 %v2801
        %2870 = vmatpush1.msra.mxu0 %v2800
        %2871 = vmatprep.subr.mxu0 %v2803
        %2872 = vmatpush1.msra.mxu0 %v2802
        %2873 = vmatprep.subr.mxu0 %v2805
        %2874 = vmatpush1.msra.mxu0 %v2804
        %2875 = vmatprep.subr.mxu0 %v2807
        %2876 = vmatpush1.msra.mxu0 %v2806
        %2877 = vmatprep.subr.mxu0 %v2809
        %2878 = vmatpush1.msra.mxu0 %v2808
        %2879 = vmatprep.subr.mxu0 %v2811
        %2880 = vmatpush1.msra.mxu0 %v2810
        %2881 = vmatprep.subr.mxu0 %v2813
        %2882 = vmatpush1.msra.mxu0 %v2812
        %2883 = vmatprep.subr.mxu0 %v2815
        %2884 = vmatpush1.msra.mxu0 %v2814
        %2885 = vmatprep.subr.mxu0 %v2817
        %2886 = vmatpush1.msra.mxu0 %v2816
        %2887 = vmatprep.subr.mxu0 %v2819
        %2888 = vmatpush1.msra.mxu0 %v2818
        %2889 = vmatprep.subr.mxu0 %v2821
        %2890 = vmatpush1.msra.mxu0 %v2820
        %2891 = vmatprep.subr.mxu0 %v2823
        %2892 = vmatpush1.msra.mxu0 %v2822
        %2893 = vmatprep.subr.mxu0 %v2825
        %2894 = vmatpush1.msra.mxu0 %v2824
        %2895 = vmatprep.subr.mxu0 %v2827
        %2896 = vmatpush1.msra.mxu0 %v2826
        %2897 = vmatprep.subr.mxu0 %v2829
        %2898 = vmatpush1.msra.mxu0 %v2828
        %2899 = vmatprep.subr.mxu0 %v2831
        %2900 = vmatpush1.msra.mxu0 %v2830
        %2901 = vmatprep.subr.mxu0 %v2833
        %2902 = vmatpush1.msra.mxu0 %v2832
        %2903 = vmatprep.subr.mxu0 %v2835
        %2904 = vmatpush1.msra.mxu0 %v2834
        %2905 = vmatprep.subr.mxu0 %v2837
        %2906 = vmatpush1.msra.mxu0 %v2836
        %2907 = vmatprep.subr.mxu0 %v2839
        %2908 = vmatpush1.msra.mxu0 %v2838
        %2909 = vmatprep.subr.mxu0 %v2841
        %2910 = vmatpush1.msra.mxu0 %v2840
        %2911 = vmatprep.subr.mxu0 %v2843
        %2912 = vmatpush1.msra.mxu0 %v2842
        %2913 = vmatprep.subr.mxu0 %v2845
        %2914 = vmatpush1.msra.mxu0 %v2844
        %2915 = vmatprep.subr.mxu0 %v2847
        %2916 = vmatpush1.msra.mxu0 %v2846
        %2917 = vmatprep.subr.mxu0 %v2857
        %2918 = vmatpush1.msra.mxu0 %v2854
        %2919 = vmatprep.subr.mxu0 0.0
        %2920 = vmatpush1.msra.mxu0 0.0
        %2921 = vmatprep.subr.mxu0 0.0
        %2922 = vmatpush1.msra.mxu0 0.0
        %2923 = vmatprep.mubr.f32.mxu0 %v2135
        %2924 = vmatmul.mubr.f32.gmra.mrb[0].mxu0 %v1987
        %v2925 = vpop.f32.mrb[0].mxu0
        %v2926 = vadd.f32 0.0, %v2925
        %v2927 = vpop.f32.mrb[0].mxu0
        %v2928 = vadd.f32 0.0, %v2927
        %2929 = vmatprep.mubr.f32.mxu0 %v2138
        %2930 = vmatmul.mubr.f32.gmra.mrb[0].mxu0 %v1989
        %v2931 = vpop.f32.mrb[0].mxu0
        %v2932 = vadd.f32 0.0, %v2931
        %v2933 = vpop.f32.mrb[0].mxu0
        %v2934 = vadd.f32 0.0, %v2933
        %2935 = vmatprep.mubr.f32.mxu0 %v2141
        %2936 = vmatmul.mubr.f32.gmra.mrb[0].mxu0 %v1991
        %v2937 = vpop.f32.mrb[0].mxu0
        %v2938 = vadd.f32 0.0, %v2937
        %v2939 = vpop.f32.mrb[0].mxu0
        %v2940 = vadd.f32 0.0, %v2939
        %2941 = vmatprep.mubr.f32.mxu0 %v2144
        %2942 = vmatmul.mubr.f32.gmra.mrb[0].mxu0 %v1993
        %v2943 = vpop.f32.mrb[0].mxu0
        %v2944 = vadd.f32 0.0, %v2943
        %v2945 = vpop.f32.mrb[0].mxu0
        %v2946 = vadd.f32 0.0, %v2945
        %2947 = vmatprep.mubr.f32.mxu0 %v2147
        %2948 = vmatmul.mubr.f32.gmra.mrb[0].mxu0 %v1995
        %v2949 = vpop.f32.mrb[0].mxu0
        %v2950 = vadd.f32 0.0, %v2949
        %v2951 = vpop.f32.mrb[0].mxu0
        %v2952 = vadd.f32 0.0, %v2951
        %2953 = vmatprep.mubr.f32.mxu0 %v2453
        %2954 = vmatmul.mubr.f32.gmra.mrb[0].mxu0 %v1997
        %v2955 = vpop.f32.mrb[0].mxu0
        %v2956 = vadd.f32 0.0, %v2955
        %v2957 = vpop.f32.mrb[0].mxu0
        %v2958 = vadd.f32 0.0, %v2957
        %2959 = vmatprep.mubr.f32.mxu0 %v2652
        %2960 = vmatmul.mubr.f32.gmra.mrb[0].mxu0 %v1999
        %v2961 = vpop.f32.mrb[0].mxu0
        %v2962 = vadd.f32 0.0, %v2961
        %v2963 = vpop.f32.mrb[0].mxu0
        %v2964 = vadd.f32 0.0, %v2963
        %2965 = vmatprep.mubr.f32.mxu0 %v2851
        %2966 = vmatmul.mubr.f32.gmra.mrb[0].mxu0 %v2001
        %v2967 = vpop.f32.mrb[0].mxu0
        %v2968 = vadd.f32 0.0, %v2967
        %v2969 = vpop.f32.mrb[0].mxu0
        %v2970 = vadd.f32 0.0, %v2969
        %2971 = vdwg.mxu0
        %v2972 = vadd.f32 %v2773, %v2926
        %v2973 = vadd.f32 %v2774, %v2928
        %v2974 = vadd.f32 %v2775, %v2932
        %v2975 = vadd.f32 %v2776, %v2934
        %v2976 = vadd.f32 %v2777, %v2938
        %v2977 = vadd.f32 %v2778, %v2940
        %v2978 = vadd.f32 %v2779, %v2944
        %v2979 = vadd.f32 %v2780, %v2946
        %v2980 = vadd.f32 %v2781, %v2950
        %v2981 = vadd.f32 %v2782, %v2952
        %v2982 = vadd.f32 %v2783, %v2956
        %v2983 = vadd.f32 %v2784, %v2958
        %v2984 = vadd.f32 %v2785, %v2962
        %v2985 = vadd.f32 %v2786, %v2964
        %v2986 = vadd.f32 %v2787, %v2968
        %v2987 = vadd.f32 %v2788, %v2970
        %v2988 = vld [vmem:[%s4] sm:$0x3]
        %v2990 = vlaneseq
        %v2991 = vshrl.u32 %v2990, 7
        %v2992 = vsub.s32 0, %v2991
        %v2993 = vrot.slane %v2988, %v2992
        %v2994 = vlaneseq
        %v2995 = vshrl.u32 %v2994, 7
        %v2996 = vsub.s32 1, %v2995
        %v2997 = vrot.slane %v2988, %v2996
        %v3000 = vadd.f32 %v2972, %v2993
        %v3001 = vadd.f32 %v2973, %v2997
        %v3002 = vadd.f32 %v2974, %v2993
        %v3003 = vadd.f32 %v2975, %v2997
        %v3004 = vadd.f32 %v2976, %v2993
        %v3005 = vadd.f32 %v2977, %v2997
        %v3006 = vadd.f32 %v2978, %v2993
        %v3007 = vadd.f32 %v2979, %v2997
        %v3008 = vadd.f32 %v2980, %v2993
        %v3009 = vadd.f32 %v2981, %v2997
        %v3010 = vadd.f32 %v2982, %v2993
        %v3011 = vadd.f32 %v2983, %v2997
        %v3012 = vadd.f32 %v2984, %v2993
        %v3013 = vadd.f32 %v2985, %v2997
        %v3014 = vadd.f32 %v2986, %v2993
        %v3015 = vadd.f32 %v2987, %v2997
        %v3016 = vmax.f32 %v3000, %v3002
        %v3017 = vmax.f32 %v3001, %v3003
        %v3018 = vmax.f32 %v3004, %v3006
        %v3019 = vmax.f32 %v3005, %v3007
        %v3020 = vmax.f32 %v3008, %v3010
        %v3021 = vmax.f32 %v3009, %v3011
        %v3022 = vmax.f32 %v3012, %v3014
        %v3023 = vmax.f32 %v3013, %v3015
        %3032 = vrot.lane.b32.xlu0 %v3016, 127
        %v3033 = vpop.permute.xlu0 %3032
        %3034 = vrot.lane.b32.xlu0 %v3017, 127
        %v3035 = vpop.permute.xlu0 %3034
        %3036 = vrot.lane.b32.xlu0 %v3018, 127
        %v3037 = vpop.permute.xlu0 %3036
        %3038 = vrot.lane.b32.xlu0 %v3019, 127
        %v3039 = vpop.permute.xlu0 %3038
        %3040 = vrot.lane.b32.xlu0 %v3020, 127
        %v3041 = vpop.permute.xlu0 %3040
        %3042 = vrot.lane.b32.xlu0 %v3021, 127
        %v3043 = vpop.permute.xlu0 %3042
        %3044 = vrot.lane.b32.xlu0 %v3022, 127
        %v3045 = vpop.permute.xlu0 %3044
        %3046 = vrot.lane.b32.xlu0 %v3023, 127
        %v3047 = vpop.permute.xlu0 %3046
        %v3048 = vsel %vm1918, %v3033, %v3035
        %v3049 = vsel %vm1918, %v3037, %v3039
        %v3050 = vsel %vm1918, %v3041, %v3043
        %v3051 = vsel %vm1918, %v3045, %v3047
        %v3060 = vmax.f32 %v3016, %v3048
        %v3061 = vmax.f32 %v3017, %v3035
        %v3062 = vmax.f32 %v3018, %v3049
        %v3063 = vmax.f32 %v3019, %v3039
        %v3064 = vmax.f32 %v3020, %v3050
        %v3065 = vmax.f32 %v3021, %v3043
        %v3066 = vmax.f32 %v3022, %v3051
        %v3067 = vmax.f32 %v3023, %v3047
        %v3068 = vmax.f32 %v3060, 0.0
        %v3069 = vmax.f32 %v3061, 0.0
        %v3070 = vmax.f32 %v3062, 0.0
        %v3071 = vmax.f32 %v3063, 0.0
        %v3072 = vmax.f32 %v3064, 0.0
        %v3073 = vmax.f32 %v3065, 0.0
        %v3074 = vmax.f32 %v3066, 0.0
        %v3075 = vmax.f32 %v3067, 0.0
        %v3076 = vld [vmem:[%s5] sm:$0xff]
        %v3077 = vld [vmem:[%s5 + $0x8] sm:$0xff]
        %v3078 = vld [vmem:[%s5 + $0x10] sm:$0xff]
        %v3079 = vld [vmem:[%s5 + $0x18] sm:$0xff]
        %v3080 = vld [vmem:[%s5 + $0x20] sm:$0xff]
        %v3081 = vld [vmem:[%s5 + $0x28] sm:$0xff]
        %v3082 = vld [vmem:[%s5 + $0x30] sm:$0xff]
        %v3083 = vld [vmem:[%s5 + $0x38] sm:$0xff]
        %v3084 = vld [vmem:[%s5 + $0x40] sm:$0xff]
        %v3085 = vld [vmem:[%s5 + $0x48] sm:$0xff]
        %v3086 = vld [vmem:[%s5 + $0x50] sm:$0xff]
        %v3087 = vld [vmem:[%s5 + $0x58] sm:$0xff]
        %v3088 = vld [vmem:[%s5 + $0x60] sm:$0xff]
        %v3089 = vld [vmem:[%s5 + $0x68] sm:$0xff]
        %v3090 = vld [vmem:[%s5 + $0x70] sm:$0xff]
        %v3091 = vld [vmem:[%s5 + $0x78] sm:$0xff]
        %v3092 = vld [vmem:[%s5 + $0x80] sm:$0xff]
        %v3093 = vld [vmem:[%s5 + $0x88] sm:$0xff]
        %v3094 = vld [vmem:[%s5 + $0x90] sm:$0xff]
        %v3095 = vld [vmem:[%s5 + $0x98] sm:$0x7f]
        %s3096 = scalar_lea.vmem %s5, 160
        %v3097 = vld [vmem:[%s3096] sm:$0xff]
        %v3098 = vld [vmem:[%s3096 + $0x8] sm:$0xff]
        %v3099 = vld [vmem:[%s3096 + $0x10] sm:$0xff]
        %v3100 = vld [vmem:[%s3096 + $0x18] sm:$0xff]
        %v3101 = vld [vmem:[%s3096 + $0x20] sm:$0xff]
        %v3102 = vld [vmem:[%s3096 + $0x28] sm:$0xff]
        %v3103 = vld [vmem:[%s3096 + $0x30] sm:$0xff]
        %v3104 = vld [vmem:[%s3096 + $0x38] sm:$0xff]
        %v3105 = vld [vmem:[%s3096 + $0x40] sm:$0xff]
        %v3106 = vld [vmem:[%s3096 + $0x48] sm:$0xff]
        %v3107 = vld [vmem:[%s3096 + $0x50] sm:$0xff]
        %v3108 = vld [vmem:[%s3096 + $0x58] sm:$0xff]
        %v3109 = vld [vmem:[%s3096 + $0x60] sm:$0xff]
        %v3110 = vld [vmem:[%s3096 + $0x68] sm:$0xff]
        %v3111 = vld [vmem:[%s3096 + $0x70] sm:$0xff]
        %v3112 = vld [vmem:[%s3096 + $0x78] sm:$0xff]
        %v3113 = vld [vmem:[%s3096 + $0x80] sm:$0xff]
        %v3114 = vld [vmem:[%s3096 + $0x88] sm:$0xff]
        %v3115 = vld [vmem:[%s3096 + $0x90] sm:$0xff]
        %v3116 = vld [vmem:[%s3096 + $0x98] sm:$0x7f]
        %vm3117 = vcmask 252928
        %v3119 = vsel %vm3117, %v3071, 0
        %v3122 = vsel %vm2149, %v3116, 0
        %3124 = vmatprep.subr.mxu0 0.0
        %3125 = vmatpush1.msra.mxu0 %v3097
        %3126 = vmatprep.subr.mxu0 0.0
        %3127 = vmatpush1.msra.mxu0 %v3098
        %3128 = vmatprep.subr.mxu0 0.0
        %3129 = vmatpush1.msra.mxu0 %v3099
        %3130 = vmatprep.subr.mxu0 0.0
        %3131 = vmatpush1.msra.mxu0 %v3100
        %3132 = vmatprep.subr.mxu0 0.0
        %3133 = vmatpush1.msra.mxu0 %v3101
        %3134 = vmatprep.subr.mxu0 0.0
        %3135 = vmatpush1.msra.mxu0 %v3102
        %3136 = vmatprep.subr.mxu0 0.0
        %3137 = vmatpush1.msra.mxu0 %v3103
        %3138 = vmatprep.subr.mxu0 0.0
        %3139 = vmatpush1.msra.mxu0 %v3104
        %3140 = vmatprep.subr.mxu0 0.0
        %3141 = vmatpush1.msra.mxu0 %v3105
        %3142 = vmatprep.subr.mxu0 0.0
        %3143 = vmatpush1.msra.mxu0 %v3106
        %3144 = vmatprep.subr.mxu0 0.0
        %3145 = vmatpush1.msra.mxu0 %v3107
        %3146 = vmatprep.subr.mxu0 0.0
        %3147 = vmatpush1.msra.mxu0 %v3108
        %3148 = vmatprep.subr.mxu0 0.0
        %3149 = vmatpush1.msra.mxu0 %v3109
        %3150 = vmatprep.subr.mxu0 0.0
        %3151 = vmatpush1.msra.mxu0 %v3110
        %3152 = vmatprep.subr.mxu0 0.0
        %3153 = vmatpush1.msra.mxu0 %v3111
        %3154 = vmatprep.subr.mxu0 0.0
        %3155 = vmatpush1.msra.mxu0 %v3112
        %3156 = vmatprep.subr.mxu0 0.0
        %3157 = vmatpush1.msra.mxu0 %v3113
        %3158 = vmatprep.subr.mxu0 0.0
        %3159 = vmatpush1.msra.mxu0 %v3114
        %3160 = vmatprep.subr.mxu0 0.0
        %3161 = vmatpush1.msra.mxu0 %v3115
        %3162 = vmatprep.subr.mxu0 0.0
        %3163 = vmatpush1.msra.mxu0 %v3122
        %3164 = vmatprep.subr.mxu0 0.0
        %3165 = vmatpush1.msra.mxu0 0.0
        %3166 = vmatprep.subr.mxu0 0.0
        %3167 = vmatpush1.msra.mxu0 0.0
        %3168 = vmatprep.subr.mxu0 0.0
        %3169 = vmatpush1.msra.mxu0 0.0
        %3170 = vmatprep.subr.mxu0 0.0
        %3171 = vmatpush1.msra.mxu0 0.0
        %3172 = vmatprep.subr.mxu0 0.0
        %3173 = vmatpush1.msra.mxu0 0.0
        %3174 = vmatprep.subr.mxu0 0.0
        %3175 = vmatpush1.msra.mxu0 0.0
        %3176 = vmatprep.subr.mxu0 0.0
        %3177 = vmatpush1.msra.mxu0 0.0
        %3178 = vmatprep.subr.mxu0 0.0
        %3179 = vmatpush1.msra.mxu0 0.0
        %3180 = vmatprep.subr.mxu0 0.0
        %3181 = vmatpush1.msra.mxu0 0.0
        %3182 = vmatprep.subr.mxu0 0.0
        %3183 = vmatpush1.msra.mxu0 0.0
        %3184 = vmatprep.subr.mxu0 0.0
        %3185 = vmatpush1.msra.mxu0 0.0
        %3186 = vmatprep.subr.mxu0 0.0
        %3187 = vmatpush1.msra.mxu0 0.0
        %3188 = vmatprep.mubr.f32.mxu0 %v3119
        %3189 = vmatmul.mubr.f32.gmra.mrb[0].mxu0 %v3070
        %v3190 = vpop.f32.mrb[0].mxu0
        %v3191 = vadd.f32 0.0, %v3190
        %v3192 = vpop.f32.mrb[0].mxu0
        %3193 = vdwg.mxu0
        %v3195 = vsel %vm3117, %v3069, 0
        %v3198 = vsel %vm2149, %v3095, 0
        %3200 = vmatprep.subr.mxu0 0.0
        %3201 = vmatpush1.msra.mxu0 %v3076
        %3202 = vmatprep.subr.mxu0 0.0
        %3203 = vmatpush1.msra.mxu0 %v3077
        %3204 = vmatprep.subr.mxu0 0.0
        %3205 = vmatpush1.msra.mxu0 %v3078
        %3206 = vmatprep.subr.mxu0 0.0
        %3207 = vmatpush1.msra.mxu0 %v3079
        %3208 = vmatprep.subr.mxu0 0.0
        %3209 = vmatpush1.msra.mxu0 %v3080
        %3210 = vmatprep.subr.mxu0 0.0
        %3211 = vmatpush1.msra.mxu0 %v3081
        %3212 = vmatprep.subr.mxu0 0.0
        %3213 = vmatpush1.msra.mxu0 %v3082
        %3214 = vmatprep.subr.mxu0 0.0
        %3215 = vmatpush1.msra.mxu0 %v3083
        %3216 = vmatprep.subr.mxu0 0.0
        %3217 = vmatpush1.msra.mxu0 %v3084
        %3218 = vmatprep.subr.mxu0 0.0
        %3219 = vmatpush1.msra.mxu0 %v3085
        %3220 = vmatprep.subr.mxu0 0.0
        %3221 = vmatpush1.msra.mxu0 %v3086
        %3222 = vmatprep.subr.mxu0 0.0
        %3223 = vmatpush1.msra.mxu0 %v3087
        %3224 = vmatprep.subr.mxu0 0.0
        %3225 = vmatpush1.msra.mxu0 %v3088
        %3226 = vmatprep.subr.mxu0 0.0
        %3227 = vmatpush1.msra.mxu0 %v3089
        %3228 = vmatprep.subr.mxu0 0.0
        %3229 = vmatpush1.msra.mxu0 %v3090
        %3230 = vmatprep.subr.mxu0 0.0
        %3231 = vmatpush1.msra.mxu0 %v3091
        %3232 = vmatprep.subr.mxu0 0.0
        %3233 = vmatpush1.msra.mxu0 %v3092
        %3234 = vmatprep.subr.mxu0 0.0
        %3235 = vmatpush1.msra.mxu0 %v3093
        %3236 = vmatprep.subr.mxu0 0.0
        %3237 = vmatpush1.msra.mxu0 %v3094
        %3238 = vmatprep.subr.mxu0 0.0
        %3239 = vmatpush1.msra.mxu0 %v3198
        %3240 = vmatprep.subr.mxu0 0.0
        %3241 = vmatpush1.msra.mxu0 0.0
        %3242 = vmatprep.subr.mxu0 0.0
        %3243 = vmatpush1.msra.mxu0 0.0
        %3244 = vmatprep.subr.mxu0 0.0
        %3245 = vmatpush1.msra.mxu0 0.0
        %3246 = vmatprep.subr.mxu0 0.0
        %3247 = vmatpush1.msra.mxu0 0.0
        %3248 = vmatprep.subr.mxu0 0.0
        %3249 = vmatpush1.msra.mxu0 0.0
        %3250 = vmatprep.subr.mxu0 0.0
        %3251 = vmatpush1.msra.mxu0 0.0
        %3252 = vmatprep.subr.mxu0 0.0
        %3253 = vmatpush1.msra.mxu0 0.0
        %3254 = vmatprep.subr.mxu0 0.0
        %3255 = vmatpush1.msra.mxu0 0.0
        %3256 = vmatprep.subr.mxu0 0.0
        %3257 = vmatpush1.msra.mxu0 0.0
        %3258 = vmatprep.subr.mxu0 0.0
        %3259 = vmatpush1.msra.mxu0 0.0
        %3260 = vmatprep.subr.mxu0 0.0
        %3261 = vmatpush1.msra.mxu0 0.0
        %3262 = vmatprep.subr.mxu0 0.0
        %3263 = vmatpush1.msra.mxu0 0.0
        %3264 = vmatprep.mubr.f32.mxu0 %v3195
        %3265 = vmatmul.mubr.f32.gmra.mrb[0].mxu0 %v3068
        %v3266 = vpop.f32.mrb[0].mxu0
        %v3267 = vadd.f32 %v3191, %v3266
        %v3268 = vpop.f32.mrb[0].mxu0
        %3269 = vdwg.mxu0
        %s3270 = scalar_lea.vmem %s5, 320
        %v3271 = vld [vmem:[%s3270] sm:$0xff]
        %v3272 = vld [vmem:[%s3270 + $0x8] sm:$0xff]
        %v3273 = vld [vmem:[%s3270 + $0x10] sm:$0xff]
        %v3274 = vld [vmem:[%s3270 + $0x18] sm:$0xff]
        %v3275 = vld [vmem:[%s3270 + $0x20] sm:$0xff]
        %v3276 = vld [vmem:[%s3270 + $0x28] sm:$0xff]
        %v3277 = vld [vmem:[%s3270 + $0x30] sm:$0xff]
        %v3278 = vld [vmem:[%s3270 + $0x38] sm:$0xff]
        %v3279 = vld [vmem:[%s3270 + $0x40] sm:$0xff]
        %v3280 = vld [vmem:[%s3270 + $0x48] sm:$0xff]
        %v3281 = vld [vmem:[%s3270 + $0x50] sm:$0xff]
        %v3282 = vld [vmem:[%s3270 + $0x58] sm:$0xff]
        %v3283 = vld [vmem:[%s3270 + $0x60] sm:$0xff]
        %v3284 = vld [vmem:[%s3270 + $0x68] sm:$0xff]
        %v3285 = vld [vmem:[%s3270 + $0x70] sm:$0xff]
        %v3286 = vld [vmem:[%s3270 + $0x78] sm:$0xff]
        %v3287 = vld [vmem:[%s3270 + $0x80] sm:$0xff]
        %v3288 = vld [vmem:[%s3270 + $0x88] sm:$0xff]
        %v3289 = vld [vmem:[%s3270 + $0x90] sm:$0xff]
        %v3290 = vld [vmem:[%s3270 + $0x98] sm:$0x7f]
        %v3292 = vsel %vm3117, %v3073, 0
        %v3295 = vsel %vm2149, %v3290, 0
        %3297 = vmatprep.subr.mxu0 0.0
        %3298 = vmatpush1.msra.mxu0 %v3271
        %3299 = vmatprep.subr.mxu0 0.0
        %3300 = vmatpush1.msra.mxu0 %v3272
        %3301 = vmatprep.subr.mxu0 0.0
        %3302 = vmatpush1.msra.mxu0 %v3273
        %3303 = vmatprep.subr.mxu0 0.0
        %3304 = vmatpush1.msra.mxu0 %v3274
        %3305 = vmatprep.subr.mxu0 0.0
        %3306 = vmatpush1.msra.mxu0 %v3275
        %3307 = vmatprep.subr.mxu0 0.0
        %3308 = vmatpush1.msra.mxu0 %v3276
        %3309 = vmatprep.subr.mxu0 0.0
        %3310 = vmatpush1.msra.mxu0 %v3277
        %3311 = vmatprep.subr.mxu0 0.0
        %3312 = vmatpush1.msra.mxu0 %v3278
        %3313 = vmatprep.subr.mxu0 0.0
        %3314 = vmatpush1.msra.mxu0 %v3279
        %3315 = vmatprep.subr.mxu0 0.0
        %3316 = vmatpush1.msra.mxu0 %v3280
        %3317 = vmatprep.subr.mxu0 0.0
        %3318 = vmatpush1.msra.mxu0 %v3281
        %3319 = vmatprep.subr.mxu0 0.0
        %3320 = vmatpush1.msra.mxu0 %v3282
        %3321 = vmatprep.subr.mxu0 0.0
        %3322 = vmatpush1.msra.mxu0 %v3283
        %3323 = vmatprep.subr.mxu0 0.0
        %3324 = vmatpush1.msra.mxu0 %v3284
        %3325 = vmatprep.subr.mxu0 0.0
        %3326 = vmatpush1.msra.mxu0 %v3285
        %3327 = vmatprep.subr.mxu0 0.0
        %3328 = vmatpush1.msra.mxu0 %v3286
        %3329 = vmatprep.subr.mxu0 0.0
        %3330 = vmatpush1.msra.mxu0 %v3287
        %3331 = vmatprep.subr.mxu0 0.0
        %3332 = vmatpush1.msra.mxu0 %v3288
        %3333 = vmatprep.subr.mxu0 0.0
        %3334 = vmatpush1.msra.mxu0 %v3289
        %3335 = vmatprep.subr.mxu0 0.0
        %3336 = vmatpush1.msra.mxu0 %v3295
        %3337 = vmatprep.subr.mxu0 0.0
        %3338 = vmatpush1.msra.mxu0 0.0
        %3339 = vmatprep.subr.mxu0 0.0
        %3340 = vmatpush1.msra.mxu0 0.0
        %3341 = vmatprep.subr.mxu0 0.0
        %3342 = vmatpush1.msra.mxu0 0.0
        %3343 = vmatprep.subr.mxu0 0.0
        %3344 = vmatpush1.msra.mxu0 0.0
        %3345 = vmatprep.subr.mxu0 0.0
        %3346 = vmatpush1.msra.mxu0 0.0
        %3347 = vmatprep.subr.mxu0 0.0
        %3348 = vmatpush1.msra.mxu0 0.0
        %3349 = vmatprep.subr.mxu0 0.0
        %3350 = vmatpush1.msra.mxu0 0.0
        %3351 = vmatprep.subr.mxu0 0.0
        %3352 = vmatpush1.msra.mxu0 0.0
        %3353 = vmatprep.subr.mxu0 0.0
        %3354 = vmatpush1.msra.mxu0 0.0
        %3355 = vmatprep.subr.mxu0 0.0
        %3356 = vmatpush1.msra.mxu0 0.0
        %3357 = vmatprep.subr.mxu0 0.0
        %3358 = vmatpush1.msra.mxu0 0.0
        %3359 = vmatprep.subr.mxu0 0.0
        %3360 = vmatpush1.msra.mxu0 0.0
        %3361 = vmatprep.mubr.f32.mxu0 %v3292
        %3362 = vmatmul.mubr.f32.gmra.mrb[0].mxu0 %v3072
        %v3363 = vpop.f32.mrb[0].mxu0
        %v3364 = vadd.f32 0.0, %v3363
        %v3365 = vpop.f32.mrb[0].mxu0
        %3366 = vdwg.mxu0
        %v3367 = vadd.f32 %v3267, %v3364
        %s3368 = scalar_lea.vmem %s5, 480
        %v3369 = vld [vmem:[%s3368] sm:$0xff]
        %v3370 = vld [vmem:[%s3368 + $0x8] sm:$0xff]
        %v3371 = vld [vmem:[%s3368 + $0x10] sm:$0xff]
        %v3372 = vld [vmem:[%s3368 + $0x18] sm:$0xff]
        %v3373 = vld [vmem:[%s3368 + $0x20] sm:$0xff]
        %v3374 = vld [vmem:[%s3368 + $0x28] sm:$0xff]
        %v3375 = vld [vmem:[%s3368 + $0x30] sm:$0xff]
        %v3376 = vld [vmem:[%s3368 + $0x38] sm:$0xff]
        %v3377 = vld [vmem:[%s3368 + $0x40] sm:$0xff]
        %v3378 = vld [vmem:[%s3368 + $0x48] sm:$0xff]
        %v3379 = vld [vmem:[%s3368 + $0x50] sm:$0xff]
        %v3380 = vld [vmem:[%s3368 + $0x58] sm:$0xff]
        %v3381 = vld [vmem:[%s3368 + $0x60] sm:$0xff]
        %v3382 = vld [vmem:[%s3368 + $0x68] sm:$0xff]
        %v3383 = vld [vmem:[%s3368 + $0x70] sm:$0xff]
        %v3384 = vld [vmem:[%s3368 + $0x78] sm:$0xff]
        %v3385 = vld [vmem:[%s3368 + $0x80] sm:$0xff]
        %v3386 = vld [vmem:[%s3368 + $0x88] sm:$0xff]
        %v3387 = vld [vmem:[%s3368 + $0x90] sm:$0xff]
        %v3388 = vld [vmem:[%s3368 + $0x98] sm:$0x7f]
        %v3390 = vsel %vm3117, %v3075, 0
        %v3393 = vsel %vm2149, %v3388, 0
        %3395 = vmatprep.subr.mxu0 0.0
        %3396 = vmatpush1.msra.mxu0 %v3369
        %3397 = vmatprep.subr.mxu0 0.0
        %3398 = vmatpush1.msra.mxu0 %v3370
        %3399 = vmatprep.subr.mxu0 0.0
        %3400 = vmatpush1.msra.mxu0 %v3371
        %3401 = vmatprep.subr.mxu0 0.0
        %3402 = vmatpush1.msra.mxu0 %v3372
        %3403 = vmatprep.subr.mxu0 0.0
        %3404 = vmatpush1.msra.mxu0 %v3373
        %3405 = vmatprep.subr.mxu0 0.0
        %3406 = vmatpush1.msra.mxu0 %v3374
        %3407 = vmatprep.subr.mxu0 0.0
        %3408 = vmatpush1.msra.mxu0 %v3375
        %3409 = vmatprep.subr.mxu0 0.0
        %3410 = vmatpush1.msra.mxu0 %v3376
        %3411 = vmatprep.subr.mxu0 0.0
        %3412 = vmatpush1.msra.mxu0 %v3377
        %3413 = vmatprep.subr.mxu0 0.0
        %3414 = vmatpush1.msra.mxu0 %v3378
        %3415 = vmatprep.subr.mxu0 0.0
        %3416 = vmatpush1.msra.mxu0 %v3379
        %3417 = vmatprep.subr.mxu0 0.0
        %3418 = vmatpush1.msra.mxu0 %v3380
        %3419 = vmatprep.subr.mxu0 0.0
        %3420 = vmatpush1.msra.mxu0 %v3381
        %3421 = vmatprep.subr.mxu0 0.0
        %3422 = vmatpush1.msra.mxu0 %v3382
        %3423 = vmatprep.subr.mxu0 0.0
        %3424 = vmatpush1.msra.mxu0 %v3383
        %3425 = vmatprep.subr.mxu0 0.0
        %3426 = vmatpush1.msra.mxu0 %v3384
        %3427 = vmatprep.subr.mxu0 0.0
        %3428 = vmatpush1.msra.mxu0 %v3385
        %3429 = vmatprep.subr.mxu0 0.0
        %3430 = vmatpush1.msra.mxu0 %v3386
        %3431 = vmatprep.subr.mxu0 0.0
        %3432 = vmatpush1.msra.mxu0 %v3387
        %3433 = vmatprep.subr.mxu0 0.0
        %3434 = vmatpush1.msra.mxu0 %v3393
        %3435 = vmatprep.subr.mxu0 0.0
        %3436 = vmatpush1.msra.mxu0 0.0
        %3437 = vmatprep.subr.mxu0 0.0
        %3438 = vmatpush1.msra.mxu0 0.0
        %3439 = vmatprep.subr.mxu0 0.0
        %3440 = vmatpush1.msra.mxu0 0.0
        %3441 = vmatprep.subr.mxu0 0.0
        %3442 = vmatpush1.msra.mxu0 0.0
        %3443 = vmatprep.subr.mxu0 0.0
        %3444 = vmatpush1.msra.mxu0 0.0
        %3445 = vmatprep.subr.mxu0 0.0
        %3446 = vmatpush1.msra.mxu0 0.0
        %3447 = vmatprep.subr.mxu0 0.0
        %3448 = vmatpush1.msra.mxu0 0.0
        %3449 = vmatprep.subr.mxu0 0.0
        %3450 = vmatpush1.msra.mxu0 0.0
        %3451 = vmatprep.subr.mxu0 0.0
        %3452 = vmatpush1.msra.mxu0 0.0
        %3453 = vmatprep.subr.mxu0 0.0
        %3454 = vmatpush1.msra.mxu0 0.0
        %3455 = vmatprep.subr.mxu0 0.0
        %3456 = vmatpush1.msra.mxu0 0.0
        %3457 = vmatprep.subr.mxu0 0.0
        %3458 = vmatpush1.msra.mxu0 0.0
        %3459 = vmatprep.mubr.f32.mxu0 %v3390
        %3460 = vmatmul.mubr.f32.gmra.mrb[0].mxu0 %v3074
        %v3461 = vpop.f32.mrb[0].mxu0
        %v3462 = vadd.f32 0.0, %v3461
        %v3463 = vpop.f32.mrb[0].mxu0
        %3464 = vdwg.mxu0
        %v3465 = vadd.f32 %v3367, %v3462
        %v3466 = vld [vmem:[%s6] sm:$0x1]
        %v3468 = vlaneseq
        %v3469 = vshrl.u32 %v3468, 7
        %v3470 = vsub.s32 0, %v3469
        %v3471 = vrot.slane %v3466, %v3470
        %v3473 = vadd.f32 %v3465, %v3471
        %v3474 = vmax.f32 %v3473, 0.0
        %v3475 = vld [vmem:[%s7] sm:$0xff]
        %v3476 = vld [vmem:[%s7 + $0x8] sm:$0xff]
        %v3477 = vld [vmem:[%s7 + $0x10] sm:$0xff]
        %v3478 = vld [vmem:[%s7 + $0x18] sm:$0xff]
        %v3479 = vld [vmem:[%s7 + $0x20] sm:$0xff]
        %v3480 = vld [vmem:[%s7 + $0x28] sm:$0xff]
        %v3481 = vld [vmem:[%s7 + $0x30] sm:$0xff]
        %v3482 = vld [vmem:[%s7 + $0x38] sm:$0xff]
        %v3483 = vld [vmem:[%s7 + $0x40] sm:$0xff]
        %v3484 = vld [vmem:[%s7 + $0x48] sm:$0xff]
        %v3485 = vld [vmem:[%s7 + $0x50] sm:$0xff]
        %v3486 = vld [vmem:[%s7 + $0x58] sm:$0xff]
        %v3487 = vld [vmem:[%s7 + $0x60] sm:$0xff]
        %v3488 = vld [vmem:[%s7 + $0x68] sm:$0xff]
        %v3489 = vld [vmem:[%s7 + $0x70] sm:$0xff]
        %v3490 = vld [vmem:[%s8] sm:$0x1]
        %v3492 = vlaneseq
        %v3493 = vshrl.u32 %v3492, 7
        %v3494 = vsub.s32 0, %v3493
        %v3495 = vrot.slane %v3490, %v3494
        %vm3497 = vcmask 982016
        %v3499 = vsel %vm3497, %v3474, 0
        %3501 = vmatprep.subr.mxu0 0.0
        %3502 = vmatpush1.msra.mxu0 %v3475
        %3503 = vmatprep.subr.mxu0 0.0
        %3504 = vmatpush1.msra.mxu0 %v3476
        %3505 = vmatprep.subr.mxu0 0.0
        %3506 = vmatpush1.msra.mxu0 %v3477
        %3507 = vmatprep.subr.mxu0 0.0
        %3508 = vmatpush1.msra.mxu0 %v3478
        %3509 = vmatprep.subr.mxu0 0.0
        %3510 = vmatpush1.msra.mxu0 %v3479
        %3511 = vmatprep.subr.mxu0 0.0
        %3512 = vmatpush1.msra.mxu0 %v3480
        %3513 = vmatprep.subr.mxu0 0.0
        %3514 = vmatpush1.msra.mxu0 %v3481
        %3515 = vmatprep.subr.mxu0 0.0
        %3516 = vmatpush1.msra.mxu0 %v3482
        %3517 = vmatprep.subr.mxu0 0.0
        %3518 = vmatpush1.msra.mxu0 %v3483
        %3519 = vmatprep.subr.mxu0 0.0
        %3520 = vmatpush1.msra.mxu0 %v3484
        %3521 = vmatprep.subr.mxu0 0.0
        %3522 = vmatpush1.msra.mxu0 %v3485
        %3523 = vmatprep.subr.mxu0 0.0
        %3524 = vmatpush1.msra.mxu0 %v3486
        %3525 = vmatprep.subr.mxu0 0.0
        %3526 = vmatpush1.msra.mxu0 %v3487
        %3527 = vmatprep.subr.mxu0 0.0
        %3528 = vmatpush1.msra.mxu0 %v3488
        %3529 = vmatprep.subr.mxu0 0.0
        %3530 = vmatpush1.msra.mxu0 %v3489
        %3531 = vmatprep.subr.mxu0 0.0
        %3532 = vmatpush1.msra.mxu0 0.0
        %3533 = vmatprep.subr.mxu0 0.0
        %3534 = vmatpush1.msra.mxu0 0.0
        %3535 = vmatprep.subr.mxu0 0.0
        %3536 = vmatpush1.msra.mxu0 0.0
        %3537 = vmatprep.subr.mxu0 0.0
        %3538 = vmatpush1.msra.mxu0 0.0
        %3539 = vmatprep.subr.mxu0 0.0
        %3540 = vmatpush1.msra.mxu0 0.0
        %3541 = vmatprep.subr.mxu0 0.0
        %3542 = vmatpush1.msra.mxu0 0.0
        %3543 = vmatprep.subr.mxu0 0.0
        %3544 = vmatpush1.msra.mxu0 0.0
        %3545 = vmatprep.subr.mxu0 0.0
        %3546 = vmatpush1.msra.mxu0 0.0
        %3547 = vmatprep.subr.mxu0 0.0
        %3548 = vmatpush1.msra.mxu0 0.0
        %3549 = vmatprep.subr.mxu0 0.0
        %3550 = vmatpush1.msra.mxu0 0.0
        %3551 = vmatprep.subr.mxu0 0.0
        %3552 = vmatpush1.msra.mxu0 0.0
        %3553 = vmatprep.subr.mxu0 0.0
        %3554 = vmatpush1.msra.mxu0 0.0
        %3555 = vmatprep.subr.mxu0 0.0
        %3556 = vmatpush1.msra.mxu0 0.0
        %3557 = vmatprep.subr.mxu0 0.0
        %3558 = vmatpush1.msra.mxu0 0.0
        %3559 = vmatprep.subr.mxu0 0.0
        %3560 = vmatpush1.msra.mxu0 0.0
        %3561 = vmatprep.subr.mxu0 0.0
        %3562 = vmatpush1.msra.mxu0 0.0
        %3563 = vmatprep.subr.mxu0 0.0
        %3564 = vmatpush1.msra.mxu0 0.0
        %3565 = vmatprep.mubr.f32.mxu0 0.0
        %3566 = vmatmul.mubr.f32.gmra.mrb[0].mxu0 %v3499
        %v3567 = vpop.f32.mrb[0].mxu0
        %v3568 = vadd.f32 %v3495, %v3567
        %v3569 = vpop.f32.mrb[0].mxu0
        %3570 = vdwg.mxu0
        %v3571 = vmax.f32 %v3568, 0.0
        %v3572 = vld [vmem:[%s9] sm:$0xff]
        %v3573 = vld [vmem:[%s9 + $0x8] sm:$0xff]
        %v3574 = vld [vmem:[%s9 + $0x10] sm:$0xff]
        %v3575 = vld [vmem:[%s9 + $0x18] sm:$0xff]
        %v3576 = vld [vmem:[%s9 + $0x20] sm:$0xff]
        %v3577 = vld [vmem:[%s9 + $0x28] sm:$0xff]
        %v3578 = vld [vmem:[%s9 + $0x30] sm:$0x3]
        %v3579 = vld [vmem:[%s10] sm:$0x1]
        %v3581 = vlaneseq
        %v3582 = vshrl.u32 %v3581, 7
        %v3583 = vsub.s32 0, %v3582
        %v3584 = vrot.slane %v3579, %v3583
        %vm3586 = vcmask 408576
        %v3588 = vsel %vm3586, %v3571, 0
        %vm3590 = vcmask 1041408
        %v3592 = vsel %vm3590, %v3578, 0
        %3594 = vmatprep.subr.mxu0 0.0
        %3595 = vmatpush1.msra.mxu0 %v3572
        %3596 = vmatprep.subr.mxu0 0.0
        %3597 = vmatpush1.msra.mxu0 %v3573
        %3598 = vmatprep.subr.mxu0 0.0
        %3599 = vmatpush1.msra.mxu0 %v3574
        %3600 = vmatprep.subr.mxu0 0.0
        %3601 = vmatpush1.msra.mxu0 %v3575
        %3602 = vmatprep.subr.mxu0 0.0
        %3603 = vmatpush1.msra.mxu0 %v3576
        %3604 = vmatprep.subr.mxu0 0.0
        %3605 = vmatpush1.msra.mxu0 %v3577
        %3606 = vmatprep.subr.mxu0 0.0
        %3607 = vmatpush1.msra.mxu0 %v3592
        %3608 = vmatprep.subr.mxu0 0.0
        %3609 = vmatpush1.msra.mxu0 0.0
        %3610 = vmatprep.subr.mxu0 0.0
        %3611 = vmatpush1.msra.mxu0 0.0
        %3612 = vmatprep.subr.mxu0 0.0
        %3613 = vmatpush1.msra.mxu0 0.0
        %3614 = vmatprep.subr.mxu0 0.0
        %3615 = vmatpush1.msra.mxu0 0.0
        %3616 = vmatprep.subr.mxu0 0.0
        %3617 = vmatpush1.msra.mxu0 0.0
        %3618 = vmatprep.subr.mxu0 0.0
        %3619 = vmatpush1.msra.mxu0 0.0
        %3620 = vmatprep.subr.mxu0 0.0
        %3621 = vmatpush1.msra.mxu0 0.0
        %3622 = vmatprep.subr.mxu0 0.0
        %3623 = vmatpush1.msra.mxu0 0.0
        %3624 = vmatprep.subr.mxu0 0.0
        %3625 = vmatpush1.msra.mxu0 0.0
        %3626 = vmatprep.subr.mxu0 0.0
        %3627 = vmatpush1.msra.mxu0 0.0
        %3628 = vmatprep.subr.mxu0 0.0
        %3629 = vmatpush1.msra.mxu0 0.0
        %3630 = vmatprep.subr.mxu0 0.0
        %3631 = vmatpush1.msra.mxu0 0.0
        %3632 = vmatprep.subr.mxu0 0.0
        %3633 = vmatpush1.msra.mxu0 0.0
        %3634 = vmatprep.subr.mxu0 0.0
        %3635 = vmatpush1.msra.mxu0 0.0
        %3636 = vmatprep.subr.mxu0 0.0
        %3637 = vmatpush1.msra.mxu0 0.0
        %3638 = vmatprep.subr.mxu0 0.0
        %3639 = vmatpush1.msra.mxu0 0.0
        %3640 = vmatprep.subr.mxu0 0.0
        %3641 = vmatpush1.msra.mxu0 0.0
        %3642 = vmatprep.subr.mxu0 0.0
        %3643 = vmatpush1.msra.mxu0 0.0
        %3644 = vmatprep.subr.mxu0 0.0
        %3645 = vmatpush1.msra.mxu0 0.0
        %3646 = vmatprep.subr.mxu0 0.0
        %3647 = vmatpush1.msra.mxu0 0.0
        %3648 = vmatprep.subr.mxu0 0.0
        %3649 = vmatpush1.msra.mxu0 0.0
        %3650 = vmatprep.subr.mxu0 0.0
        %3651 = vmatpush1.msra.mxu0 0.0
        %3652 = vmatprep.subr.mxu0 0.0
        %3653 = vmatpush1.msra.mxu0 0.0
        %3654 = vmatprep.subr.mxu0 0.0
        %3655 = vmatpush1.msra.mxu0 0.0
        %3656 = vmatprep.subr.mxu0 0.0
        %3657 = vmatpush1.msra.mxu0 0.0
        %3658 = vmatprep.mubr.f32.mxu0 0.0
        %3659 = vmatmul.mubr.f32.gmra.mrb[0].mxu0 %v3588
        %v3660 = vpop.f32.mrb[0].mxu0
        %v3661 = vadd.f32 %v3584, %v3660
        %v3662 = vpop.f32.mrb[0].mxu0
        %3663 = vdwg.mxu0
        %3664 = vmax.xlane.f32.xlu0 %v3661
        %v3665 = vpop.xlane.xlu0 %3664
        %v3666 = vsub.f32 %v3661, %v3665
        %v3667 = vmul.f32 %v3666, 1.442695
        %v3668 = vpow.pop %v3667
        %3669 = vadd.xlane.f32.xlu0 %v3668
        %v3670 = vpop.xlane.xlu0 %3669
        %v3671 = vlog2.pop %v3670
        %v3672 = vmul.f32 %v3671, 0.6931472
        %v3673 = vsub.f32 %v3666, %v3672
        %3674 = vst [vmem:[%s379] sm:$0xff] %v3673
        %s3675 = sand.u32 %s269, 1
        %s3676 = scalar_lea.sflag [#allocation3], %s3675
        %s3677 = sand.u32 %s269, 1
        %s3678 = smul.addr %s3677, 8
        %s3679 = scalar_lea.vmem [#allocation2], %s3678
        // Predicated region
        $region65: #{surrogate_forward.1} parent=63 // pred_check
          %p3680 = pneg %p279
        $region66: #{surrogate_forward.1} parent=63 // pred_check_branch
          %3682 = sbr.rel (%p3680) target = $region68
        $region67: #{surrogate_forward.1} parent=63 // pred_region
          %s3684 = ssub.s32 128, 128
          %3685 = vsyncadd %s3676, %s3684
          %s3686 = smul.addr %s25, 128
          %s3687 = scalar_lea.hbm %s11, %s3686
          %s3689 = sshll.u32 %s3679, 4
          %s3690 = int_to_ptr.vmem [resolvable:$true] %s3689
          %3692 = dma.vmem_to_hbm [thread:$0]  %s3690, 128, %s3687, %s3676
        $region68: #{surrogate_forward.1} parent=63 // pred_fallthru
          _
      $region64: #{surrogate_forward.1} parent=5 // pred_fallthru
        _
      %p3693 = scmp.le.s32.totalorder 2, %s20
      // Predicated region
      $region69: #{surrogate_forward.1} parent=5 // pred_check
        %p3694 = pneg %p3693
      $region70: #{surrogate_forward.1} parent=5 // pred_check_branch
        %3696 = sbr.rel (%p3694) target = $region72
      $region71: #{surrogate_forward.1} parent=5 // pred_region
        %s3697 = ssub.s32 %s20, 2
        // Predicated region
        $region73: #{surrogate_forward.1} parent=71 // pred_check
          %p3698 = pneg %p285
        $region74: #{surrogate_forward.1} parent=71 // pred_check_branch
          %3700 = sbr.rel (%p3698) target = $region76
        $region75: #{surrogate_forward.1} parent=71 // pred_region
          %s3701 = sand.u32 %s270, 1
          %s3702 = scalar_lea.sflag [#allocation3], %s3701
          %s3703 = sand.u32 %s270, 1
          %s3704 = smul.addr %s3703, 8
          %s3705 = scalar_lea.vmem [#allocation2], %s3704
          %3706 = dma.done %s3702, 128
        $region76: #{surrogate_forward.1} parent=71 // pred_fallthru
          _
      $region72: #{surrogate_forward.1} parent=5 // pred_fallthru
        _
    $region6: #{surrogate_forward.1} parent=1 // loop_footer
      %s24 = sadd.s32 1, %s20
    $region7: #{surrogate_forward.1} parent=1 // loop_footer_branch
      %19 = sbr.rel target = $region3
    $region8: #{surrogate_forward.1} parent=1 // loop_exit
      _
    %3707 = vsyncpa [#allocation3], 1
    %s3708 = scalar_lea.sflag [#allocation3], 1
    %3709 = vsyncpa %s3708, 1

</llo_original>
